<compile_context>
chip_gen: v5e
topology: v5e:2x2
jax: 0.10.0
libtpu: 0.0.40
codegen_flags: <defaults>
</compile_context>

<pallas_src>
import functools

import numpy as np
import jax
import jax.numpy as jnp
from jax.experimental import pallas as pl
from jax.experimental.pallas import tpu as pltpu

_HALF_PI = float(np.pi / 2.0)


# ----------------------------- Pallas kernel ------------------------------ #
def _field2point_kernel(k1d_ref, spec_ref, x_ref, y_ref, o_ref, *, K, tl, inv_k2):
    # k1d : (K, 1)  fftshift-ed integer frequencies (same array for kx and ky)
    # spec: (2K, K) bf16; rows [0:K) = Re(psi_hat).T, rows [K:2K) = Im(psi_hat).T
    # x, y: (1, tl) tracer positions for this tile (lane axis = positions)
    k1 = k1d_ref[...]                       # (K, 1) f32
    x = x_ref[...]                          # (1, tl) f32
    y = y_ref[...]                          # (1, tl) f32

    # y-axis basis, fused [cos | sin] = cos([t | t - pi/2]) -> (K, 2*tl); bf16 MXU operand.
    ty = k1 * y                             # (K, tl) VPU broadcast multiply
    basis_y = jnp.cos(jnp.concatenate([ty, ty - _HALF_PI], axis=1))   # EUP
    basis_y = basis_y.astype(jnp.bfloat16)  # (K, 2*tl)

    # x-axis basis stays f32 for the elementwise combine (no bf16 VPU on v5e).
    tx = k1 * x                             # (K, tl)
    cx = jnp.cos(tx)
    sx = jnp.sin(tx)

    # One MXU matmul gives all four products (f32 accumulation):
    #   res[:K, :tl] = Re^T @ cos_y   res[:K, tl:] = Re^T @ sin_y
    #   res[K:, :tl] = Im^T @ cos_y   res[K:, tl:] = Im^T @ sin_y
    res = jnp.dot(spec_ref[...], basis_y, preferred_element_type=jnp.float32)
    ar = res[:K, :tl] - res[K:, tl:]        # Re( sum_i psi_hat[i,j] e^{i y ky_i} )
    ai = res[:K, tl:] + res[K:, :tl]        # Im( " )

    # psi_x[l] = Re( sum_j A[j,l] e^{i x kx_j} ) / K^2
    val = jnp.sum(ar * cx - ai * sx, axis=0, keepdims=True) * inv_k2   # (1, tl)
    o_ref[...] = val.astype(o_ref.dtype)


# ------------------------------- wrapper ----------------------------------- #
def field2point_forward(x0, y0, psi, *, tl=512):
    """x0, y0: (B, L) positions in [-pi, pi]; psi: (B, K, K) real field.
    Returns psi interpolated at the positions, shape (B, L) float32."""
    B, L = x0.shape
    K = psi.shape[-1]
    x0 = x0.astype(jnp.float32)
    y0 = y0.astype(jnp.float32)

    # fftshift-ed integer frequencies (matches the torch KX/KY buffers), (K, 1).
    k1d = jnp.fft.fftshift(jnp.fft.fftfreq(K, d=1.0 / K)).astype(jnp.float32)
    k1d = k1d.reshape(K, 1)

    # Spectrum (XLA): psi_hat = fftshift(fft2(psi)); stacked & transposed so the
    # kernel contraction is a single (2K,K)@(K,2TL) matmul. bf16 MXU operand.
    psi_hat = jnp.fft.fftshift(jnp.fft.fft2(psi.astype(jnp.float32)), axes=(-2, -1))
    prT = jnp.swapaxes(jnp.real(psi_hat), -1, -2)       # prT[b,j,i] = Re psi_hat[b,i,j]
    piT = jnp.swapaxes(jnp.imag(psi_hat), -1, -2)
    spec = jnp.concatenate([prT, piT], axis=-2).astype(jnp.bfloat16)   # (B, 2K, K)

    # Position-tile size: lane axis, multiple of 128; avoid over-padding small L
    # and keep >= 2 grid steps when B == 1 (v7x megacore load balance).
    tl = int(min(tl, max(128, pl.cdiv(L, 128) * 128)))
    if B == 1:
        while tl > 128 and pl.cdiv(L, tl) < 2:
            tl //= 2
    nl = pl.cdiv(L, tl)
    Lp = nl * tl
    if Lp != L:
        x0 = jnp.pad(x0, ((0, 0), (0, Lp - L)))
        y0 = jnp.pad(y0, ((0, 0), (0, Lp - L)))
    x0 = x0.reshape(B, 1, Lp)
    y0 = y0.reshape(B, 1, Lp)

    kernel = functools.partial(_field2point_kernel, K=K, tl=tl,
                               inv_k2=1.0 / float(K * K))
    pos_spec = pl.BlockSpec((None, 1, tl), lambda b, l: (b, 0, l))

    out = pl.pallas_call(
        kernel,
        out_shape=jax.ShapeDtypeStruct((B, 1, Lp), jnp.float32),
        grid=(B, nl),
        in_specs=[pl.BlockSpec((K, 1), lambda b, l: (0, 0)),              # k1d (resident)
                  pl.BlockSpec((None, 2 * K, K), lambda b, l: (b, 0, 0)),  # spectrum (per-batch resident)
                  pos_spec, pos_spec],                                     # x, y tiles
        out_specs=pl.BlockSpec((None, 1, tl), lambda b, l: (b, 0, l)),
        compiler_params=pltpu.CompilerParams(
            dimension_semantics=("parallel", "parallel"),
            vmem_limit_bytes=32 * 1024 * 1024),
    )(k1d, spec, x0, y0)

    return out[:, 0, :L]


# --------------------------- numpy reference -------------------------------- #
def ref_field2point_np(x0, y0, psi):
    """Float64 mirror of the PyTorch forward (un-chunked)."""
    x0 = np.asarray(x0, np.float64)
    y0 = np.asarray(y0, np.float64)
    psi = np.asarray(psi, np.float64)
    B, L = x0.shape
    K = psi.shape[-1]
    k1d = np.fft.fftshift(np.fft.fftfreq(K, d=1.0 / K))
    KX, KY = np.meshgrid(k1d, k1d, indexing="xy")   # KX[i,j]=kx[j], KY[i,j]=ky[i]
    KXf, KYf = KX.flatten(), KY.flatten()
    psi_hat_flat = np.fft.fftshift(np.fft.fft2(psi), axes=(-2, -1)).reshape(B, -1)
    exp_term = np.exp(1j * (x0[..., None] * KXf + y0[..., None] * KYf))
    return np.real(np.einsum("blk,bk->bl", exp_term, psi_hat_flat)) / K ** 2


# ---------------------------------- main ------------------------------------ #
if __name__ == "__main__":
    key = jax.random.PRNGKey(0)
    B, L, K = 2, 200, 32          # small shapes; L=200 exercises the ragged tail
    kx_, ky_, kp_ = jax.random.split(key, 3)
    x0 = jax.random.uniform(kx_, (B, L), jnp.float32, -np.pi, np.pi)
    y0 = jax.random.uniform(ky_, (B, L), jnp.float32, -np.pi, np.pi)
    psi = jax.random.normal(kp_, (B, K, K), jnp.float32)

    out = jax.jit(field2point_forward)(x0, y0, psi)
    out = jax.block_until_ready(out)
    assert out.shape == (B, L), out.shape

    ref = ref_field2point_np(np.asarray(x0), np.asarray(y0), np.asarray(psi))
    np.testing.assert_allclose(np.asarray(out), ref, rtol=2e-2, atol=2e-2)
    print("KERNEL_OK")
</pallas_src>

<mosaic_0001>
module attributes {stable_mosaic.version = 11 : i64} {
  func.func @_field2point_kernel(%arg0: i32, %arg1: i32, %arg2: memref<32x1xf32, #tpu.memory_space<vmem>>, %arg3: memref<1x64x32xbf16, #tpu.memory_space<vmem>>, %arg4: memref<1x1x256xf32, #tpu.memory_space<vmem>>, %arg5: memref<1x1x256xf32, #tpu.memory_space<vmem>>, %arg6: memref<1x1x256xf32, #tpu.memory_space<vmem>>) attributes {dimension_semantics = [#tpu.dimension_semantics<parallel>, #tpu.dimension_semantics<parallel>], iteration_bounds = array<i64: 2, 1>, scalar_prefetch = 0 : i64, scratch_operands = 0 : i64, tpu.core_type = #tpu.core_type<tc>, window_params = [{pipeline_mode = #tpu.pipeline_mode<synchronous>, transform_indices = @transform_0, window_bounds = array<i64: 32, 1>}, {transform_indices = @transform_1, window_bounds = array<i64: 1, 64, 32>}, {transform_indices = @transform_2, window_bounds = array<i64: 1, 1, 256>}, {transform_indices = @transform_3, window_bounds = array<i64: 1, 1, 256>}, {transform_indices = @transform_4, window_bounds = array<i64: 1, 1, 256>}]} {
    %c0 = arith.constant 0 : index
    %c0_0 = arith.constant 0 : index
    %0 = vector.load %arg2[%c0, %c0_0] : memref<32x1xf32, #tpu.memory_space<vmem>>, vector<32x1xf32>
    %c0_1 = arith.constant 0 : index
    %c0_2 = arith.constant 0 : index
    %c0_3 = arith.constant 0 : index
    %1 = vector.load %arg4[%c0_1, %c0_2, %c0_3] : memref<1x1x256xf32, #tpu.memory_space<vmem>>, vector<1x1x256xf32>
    %2 = vector.shape_cast %1 : vector<1x1x256xf32> to vector<1x256xf32>
    %c0_4 = arith.constant 0 : index
    %c0_5 = arith.constant 0 : index
    %c0_6 = arith.constant 0 : index
    %3 = vector.load %arg5[%c0_4, %c0_5, %c0_6] : memref<1x1x256xf32, #tpu.memory_space<vmem>>, vector<1x1x256xf32>
    %4 = vector.shape_cast %3 : vector<1x1x256xf32> to vector<1x256xf32>
    %5 = vector.broadcast %0 : vector<32x1xf32> to vector<32x256xf32>
    %6 = vector.broadcast %4 : vector<1x256xf32> to vector<32x256xf32>
    %7 = arith.mulf %5, %6 : vector<32x256xf32>
    %cst = arith.constant 1.57079637 : f32
    %8 = vector.broadcast %cst : f32 to vector<32x256xf32>
    %9 = arith.subf %7, %8 : vector<32x256xf32>
    %10 = tpu.concatenate %7, %9 in 1 : vector<32x256xf32>, vector<32x256xf32> -> vector<32x512xf32>
    %11 = math.cos %10 : vector<32x512xf32>
    %12 = arith.truncf %11 : vector<32x512xf32> to vector<32x512xbf16>
    %13 = vector.broadcast %0 : vector<32x1xf32> to vector<32x256xf32>
    %14 = vector.broadcast %2 : vector<1x256xf32> to vector<32x256xf32>
    %15 = arith.mulf %13, %14 : vector<32x256xf32>
    %16 = math.cos %15 : vector<32x256xf32>
    %17 = math.sin %15 : vector<32x256xf32>
    %c0_7 = arith.constant 0 : index
    %c0_8 = arith.constant 0 : index
    %c0_9 = arith.constant 0 : index
    %18 = vector.load %arg3[%c0_7, %c0_8, %c0_9] : memref<1x64x32xbf16, #tpu.memory_space<vmem>>, vector<1x64x32xbf16>
    %19 = vector.shape_cast %18 : vector<1x64x32xbf16> to vector<64x32xbf16>
    %cst_10 = arith.constant dense<0.000000e+00> : vector<64x512xf32>
    %20 = tpu.matmul %19, %12, %cst_10 {dimension_numbers = #tpu.dot_dimension_numbers<[1], [0], [0], [1], [0, 0, 1, 1], [], []>} : vector<64x32xbf16>, vector<32x512xbf16>, vector<64x512xf32> -> vector<64x512xf32>
    %21 = vector.extract_strided_slice %20 {offsets = [0, 0], sizes = [32, 256], strides = [1, 1]} : vector<64x512xf32> to vector<32x256xf32>
    %22 = vector.extract_strided_slice %20 {offsets = [32, 256], sizes = [32, 256], strides = [1, 1]} : vector<64x512xf32> to vector<32x256xf32>
    %23 = arith.subf %21, %22 : vector<32x256xf32>
    %24 = vector.extract_strided_slice %20 {offsets = [0, 256], sizes = [32, 256], strides = [1, 1]} : vector<64x512xf32> to vector<32x256xf32>
    %25 = vector.extract_strided_slice %20 {offsets = [32, 0], sizes = [32, 256], strides = [1, 1]} : vector<64x512xf32> to vector<32x256xf32>
    %26 = arith.addf %24, %25 : vector<32x256xf32>
    %27 = arith.mulf %23, %16 : vector<32x256xf32>
    %28 = arith.mulf %26, %17 : vector<32x256xf32>
    %29 = arith.subf %27, %28 : vector<32x256xf32>
    %cst_11 = arith.constant dense<0.000000e+00> : vector<256xf32>
    %30 = vector.multi_reduction <add>, %29, %cst_11 [0] : vector<32x256xf32> to vector<256xf32>
    %31 = vector.shape_cast %30 : vector<256xf32> to vector<1x256xf32>
    %cst_12 = arith.constant 9.765625E-4 : f32
    %32 = vector.broadcast %cst_12 : f32 to vector<1x256xf32>
    %33 = arith.mulf %31, %32 : vector<1x256xf32>
    %c0_13 = arith.constant 0 : index
    %c0_14 = arith.constant 0 : index
    %c0_15 = arith.constant 0 : index
    %34 = vector.load %arg6[%c0_13, %c0_14, %c0_15] : memref<1x1x256xf32, #tpu.memory_space<vmem>>, vector<1x1x256xf32>
    %35 = vector.shape_cast %34 : vector<1x1x256xf32> to vector<1x256xf32>
    %36 = vector.shape_cast %33 : vector<1x256xf32> to vector<1x1x256xf32>
    tpu.vector_store %arg6[%c0_13, %c0_14, %c0_15], %36 {strides = array<i32>} : memref<1x1x256xf32, #tpu.memory_space<vmem>>, vector<1x1x256xf32>,
    return
  }
  func.func @transform_0(%arg0: i32, %arg1: i32) -> (i32, i32) {
    %c0_i32 = arith.constant 0 : i32
    %c0_i32_0 = arith.constant 0 : i32
    %c0_i32_1 = arith.constant 0 : i32
    return %c0_i32, %c0_i32_0 : i32, i32
  }
  func.func @transform_1(%arg0: i32, %arg1: i32) -> (i32, i32, i32) {
    %c0_i32 = arith.constant 0 : i32
    %c0_i32_0 = arith.constant 0 : i32
    %c0_i32_1 = arith.constant 0 : i32
    return %arg0, %c0_i32, %c0_i32_0 : i32, i32, i32
  }
  func.func @transform_2(%arg0: i32, %arg1: i32) -> (i32, i32, i32) {
    %c0_i32 = arith.constant 0 : i32
    %c0_i32_0 = arith.constant 0 : i32
    return %arg0, %c0_i32, %arg1 : i32, i32, i32
  }
  func.func @transform_3(%arg0: i32, %arg1: i32) -> (i32, i32, i32) {
    %c0_i32 = arith.constant 0 : i32
    %c0_i32_0 = arith.constant 0 : i32
    return %arg0, %c0_i32, %arg1 : i32, i32, i32
  }
  func.func @transform_4(%arg0: i32, %arg1: i32) -> (i32, i32, i32) {
    %c0_i32 = arith.constant 0 : i32
    %c0_i32_0 = arith.constant 0 : i32
    return %arg0, %c0_i32, %arg1 : i32, i32, i32
  }
}

</mosaic_0001>

<llo_original>
// kernel: field2point_forward.1
$region0: #{field2point_forward.1}
  #allocation0 [shape = 'u32[]', space=smem, size = 0x4, offset = 0x4, fixed_abs, tag = 'smem constant byte address 0x4 - core index']
  #allocation1 [shape = 'u32[72,128]{1,0:T(1,128)}', space=vmem, size = 0x9000, scoped, tag = 'internal scratch']
  %s0 = inlined_call_operand.vmem [shape: f32[32,1], index: 0, kind: input, shape index: {}]
  %s1 = inlined_call_operand.vmem [shape: bf16[2,64,32], index: 1, kind: input, shape index: {}]
  %s2 = inlined_call_operand.vmem [shape: f32[2,1,256], index: 2, kind: input, shape index: {}]
  %s3 = inlined_call_operand.vmem [shape: f32[2,1,256], index: 3, kind: input, shape index: {}]
  %s4 = inlined_call_operand.vmem [shape: f32[2,1,256], index: 4, kind: output, shape index: {}]
  %s5 = sld [smem:[#allocation0]]
  $region49: #{field2point_forward.1} parent=0
    _
  %s7 = ssub.s32 1, %s5
  %s8 = scalar_select 0, %s7, %s5
  loop: start=0, step=1, limit=4
  $region2: #{field2point_forward.1} parent=0 // loop_pre_header
    _
  $region3: #{field2point_forward.1} parent=0 // loop_header
    %s10 = sphi 0, %s14
    %p11 = scmp.ge.s32.totalorder %s10, 4
    %s17 = sphi 0, %s29
    %s18 = sphi 0, %s25
    %s19 = sphi 0, %s17
    %s20 = sphi 0, %s18
    %s21 = sphi 0, %s19
    %s22 = sphi 0, %s20
    %s30 = sphi 0, %s30
    %s32 = sphi 0, %s30
    %s33 = sphi 0, %s32
    %s47 = sphi 0, %s33
    %s53 = sphi 0, %s55
    %s56 = sphi 0, %s53
    %s57 = sphi 0, %s56
    %s73 = sphi 0, %s57
    %s81 = sphi 0, %s83
    %s84 = sphi 0, %s81
    %s85 = sphi 0, %s84
    %s101 = sphi 0, %s85
    %s109 = sphi 0, %s111
    %s112 = sphi 0, %s109
    %s113 = sphi 0, %s112
    %s129 = sphi 0, %s113
    %s137 = sphi 0, %s139
    %s140 = sphi 0, %s137
    %s141 = sphi 0, %s140
    %s157 = sphi 0, %s141
  $region4: #{field2point_forward.1} parent=0 // loop_header_branch
    %13 = sbr.rel (%p11) target = $region8
  $region5: #{field2point_forward.1} parent=0 // loop_body
    %s15 = ssub.s32 %s10, 1
    %s16 = ssub.s32 %s10, 2
    %s23 = sadd.s32 1, %s18
    %p24 = scmp.ge.s32.totalorder %s23, 1
    %s25 = scalar_select %p24, 0, %s23
    %s26 = sadd.s32 1, %s17
    %s27 = scalar_select %p24, %s26, %s17
    %p28 = scmp.ge.s32.totalorder %s27, 2
    %s29 = scalar_select %p28, 0, %s27
    %s31 = sadd.s32 %s30, 1
    %p34 = scmp.eq.s32.totalorder %s10, 1
    %p35 = scmp.ne.s32.totalorder %s30, %s32
    %p36 = scmp.eq.s32.totalorder %s10, 0
    %p37 = por %p35, %p36
    %p38 = scmp.ne.s32.totalorder %s30, %s32
    %p39 = scmp.eq.s32.totalorder %s15, 1
    %p40 = por %p38, %p39
    %p41 = scmp.ne.s32.totalorder %s32, %s33
    %p42 = scmp.eq.s32.totalorder %s15, 0
    %p43 = por %p41, %p42
    %p44 = scmp.ne.s32.totalorder %s32, %s33
    %p45 = scmp.eq.s32.totalorder %s16, 1
    %p46 = por %p44, %p45
    %p48 = scmp.ne.s32.totalorder %s33, %s47
    %p49 = scmp.eq.s32.totalorder %s16, 0
    %p50 = por %p48, %p49
    %s51 = ssub.s32 %s17, %s29
    %p52 = scmp.eq.s32.totalorder %s51, 0
    %s54 = sadd.s32 %s53, 1
    %s55 = scalar_select %p52, %s53, %s54
    %p58 = pneg %p52
    %p59 = scmp.eq.s32.totalorder %s10, 1
    %p60 = por %p58, %p59
    %p61 = scmp.ne.s32.totalorder %s53, %s56
    %p62 = scmp.eq.s32.totalorder %s10, 0
    %p63 = por %p61, %p62
    %p64 = scmp.ne.s32.totalorder %s53, %s56
    %p65 = scmp.eq.s32.totalorder %s15, 1
    %p66 = por %p64, %p65
    %p67 = scmp.ne.s32.totalorder %s56, %s57
    %p68 = scmp.eq.s32.totalorder %s15, 0
    %p69 = por %p67, %p68
    %p70 = scmp.ne.s32.totalorder %s56, %s57
    %p71 = scmp.eq.s32.totalorder %s16, 1
    %p72 = por %p70, %p71
    %p74 = scmp.ne.s32.totalorder %s57, %s73
    %p75 = scmp.eq.s32.totalorder %s16, 0
    %p76 = por %p74, %p75
    %s77 = ssub.s32 %s17, %s29
    %s78 = ssub.s32 %s18, %s25
    %s79 = sor.u32 %s77, %s78
    %p80 = scmp.eq.s32.totalorder %s79, 0
    %s82 = sadd.s32 %s81, 1
    %s83 = scalar_select %p80, %s81, %s82
    %p86 = pneg %p80
    %p87 = scmp.eq.s32.totalorder %s10, 1
    %p88 = por %p86, %p87
    %p89 = scmp.ne.s32.totalorder %s81, %s84
    %p90 = scmp.eq.s32.totalorder %s10, 0
    %p91 = por %p89, %p90
    %p92 = scmp.ne.s32.totalorder %s81, %s84
    %p93 = scmp.eq.s32.totalorder %s15, 1
    %p94 = por %p92, %p93
    %p95 = scmp.ne.s32.totalorder %s84, %s85
    %p96 = scmp.eq.s32.totalorder %s15, 0
    %p97 = por %p95, %p96
    %p98 = scmp.ne.s32.totalorder %s84, %s85
    %p99 = scmp.eq.s32.totalorder %s16, 1
    %p100 = por %p98, %p99
    %p102 = scmp.ne.s32.totalorder %s85, %s101
    %p103 = scmp.eq.s32.totalorder %s16, 0
    %p104 = por %p102, %p103
    %s105 = ssub.s32 %s17, %s29
    %s106 = ssub.s32 %s18, %s25
    %s107 = sor.u32 %s105, %s106
    %p108 = scmp.eq.s32.totalorder %s107, 0
    %s110 = sadd.s32 %s109, 1
    %s111 = scalar_select %p108, %s109, %s110
    %p114 = pneg %p108
    %p115 = scmp.eq.s32.totalorder %s10, 1
    %p116 = por %p114, %p115
    %p117 = scmp.ne.s32.totalorder %s109, %s112
    %p118 = scmp.eq.s32.totalorder %s10, 0
    %p119 = por %p117, %p118
    %p120 = scmp.ne.s32.totalorder %s109, %s112
    %p121 = scmp.eq.s32.totalorder %s15, 1
    %p122 = por %p120, %p121
    %p123 = scmp.ne.s32.totalorder %s112, %s113
    %p124 = scmp.eq.s32.totalorder %s15, 0
    %p125 = por %p123, %p124
    %p126 = scmp.ne.s32.totalorder %s112, %s113
    %p127 = scmp.eq.s32.totalorder %s16, 1
    %p128 = por %p126, %p127
    %p130 = scmp.ne.s32.totalorder %s113, %s129
    %p131 = scmp.eq.s32.totalorder %s16, 0
    %p132 = por %p130, %p131
    %s133 = ssub.s32 %s17, %s29
    %s134 = ssub.s32 %s18, %s25
    %s135 = sor.u32 %s133, %s134
    %p136 = scmp.eq.s32.totalorder %s135, 0
    %s138 = sadd.s32 %s137, 1
    %s139 = scalar_select %p136, %s137, %s138
    %p142 = pneg %p136
    %p143 = scmp.eq.s32.totalorder %s10, 1
    %p144 = por %p142, %p143
    %p145 = scmp.ne.s32.totalorder %s137, %s140
    %p146 = scmp.eq.s32.totalorder %s10, 0
    %p147 = por %p145, %p146
    %p148 = scmp.ne.s32.totalorder %s137, %s140
    %p149 = scmp.eq.s32.totalorder %s15, 1
    %p150 = por %p148, %p149
    %p151 = scmp.ne.s32.totalorder %s140, %s141
    %p152 = scmp.eq.s32.totalorder %s15, 0
    %p153 = por %p151, %p152
    %p154 = scmp.ne.s32.totalorder %s140, %s141
    %p155 = scmp.eq.s32.totalorder %s16, 1
    %p156 = por %p154, %p155
    %p158 = scmp.ne.s32.totalorder %s141, %s157
    %p159 = scmp.eq.s32.totalorder %s16, 0
    %p160 = por %p158, %p159
    %p161 = scmp.le.s32.totalorder 1, %s10
    %p162 = scmp.lt.s32.totalorder %s10, 3
    %p163 = pnand %p161, %p162
    %p164 = pneg %p163
    // Predicated region
    $region9: #{field2point_forward.1} parent=5 // pred_check
      _
    $region10: #{field2point_forward.1} parent=5 // pred_check_branch
      %166 = sbr.rel (%p163) target = $region12
    $region11: #{field2point_forward.1} parent=5 // pred_region
      %s167 = ssub.s32 %s10, 1
      // Predicated region
      $region13: #{field2point_forward.1} parent=11 // pred_check
        %p168 = pneg %p43
      $region14: #{field2point_forward.1} parent=11 // pred_check_branch
        %170 = sbr.rel (%p168) target = $region16
      $region15: #{field2point_forward.1} parent=11 // pred_region
        _
      $region16: #{field2point_forward.1} parent=11 // pred_fallthru
        _
    $region12: #{field2point_forward.1} parent=5 // pred_fallthru
      _
    %p171 = scmp.lt.s32.totalorder %s10, 2
    // Predicated region
    $region17: #{field2point_forward.1} parent=5 // pred_check
      %p172 = pneg %p171
    $region18: #{field2point_forward.1} parent=5 // pred_check_branch
      %174 = sbr.rel (%p172) target = $region20
    $region19: #{field2point_forward.1} parent=5 // pred_region
      // Predicated region
      $region21: #{field2point_forward.1} parent=19 // pred_check
        %p175 = pneg %p63
      $region22: #{field2point_forward.1} parent=19 // pred_check_branch
        %177 = sbr.rel (%p175) target = $region24
      $region23: #{field2point_forward.1} parent=19 // pred_region
        %p178 = scmp.lt.s32.totalorder %s17, 1
        %s179 = scalar_select %p178, %s17, 1
        %s180 = smul.addr %s179, 8
        %s181 = smul.addr %s180, 4
        %s182 = scalar_lea.vmem %s1, %s181
      $region24: #{field2point_forward.1} parent=19 // pred_fallthru
        _
      // Predicated region
      $region25: #{field2point_forward.1} parent=19 // pred_check
        %p183 = pneg %p91
      $region26: #{field2point_forward.1} parent=19 // pred_check_branch
        %185 = sbr.rel (%p183) target = $region28
      $region27: #{field2point_forward.1} parent=19 // pred_region
        %s186 = smul.u32 2, %s18
        %p187 = scmp.lt.s32.totalorder %s17, 1
        %s188 = scalar_select %p187, %s17, 1
        %p189 = scmp.lt.s32.totalorder %s186, 1
        %s190 = scalar_select %p189, %s186, 1
        %s191 = smul.addr %s188, 2
        %s192 = sadd.s32 %s190, %s191
        %s193 = scalar_lea.vmem %s2, %s192
        %s194 = smul.u32 2, %s18
      $region28: #{field2point_forward.1} parent=19 // pred_fallthru
        _
      // Predicated region
      $region29: #{field2point_forward.1} parent=19 // pred_check
        %p195 = pneg %p119
      $region30: #{field2point_forward.1} parent=19 // pred_check_branch
        %197 = sbr.rel (%p195) target = $region32
      $region31: #{field2point_forward.1} parent=19 // pred_region
        %s198 = smul.u32 2, %s18
        %p199 = scmp.lt.s32.totalorder %s17, 1
        %s200 = scalar_select %p199, %s17, 1
        %p201 = scmp.lt.s32.totalorder %s198, 1
        %s202 = scalar_select %p201, %s198, 1
        %s203 = smul.addr %s200, 2
        %s204 = sadd.s32 %s202, %s203
        %s205 = scalar_lea.vmem %s3, %s204
        %s206 = smul.u32 2, %s18
      $region32: #{field2point_forward.1} parent=19 // pred_fallthru
        _
    $region20: #{field2point_forward.1} parent=5 // pred_fallthru
      _
    %p207 = scmp.le.s32.totalorder 1, %s10
    %p208 = scmp.lt.s32.totalorder %s10, 3
    %p209 = pnand %p207, %p208
    %p210 = pneg %p209
    // Predicated region
    $region33: #{field2point_forward.1} parent=5 // pred_check
      _
    $region34: #{field2point_forward.1} parent=5 // pred_check_branch
      %212 = sbr.rel (%p209) target = $region36
    $region35: #{field2point_forward.1} parent=5 // pred_region
      %s213 = ssub.s32 %s10, 1
      %p214 = pneg %p43
      %p215 = pneg %p40
      %p216 = scmp.lt.s32.totalorder %s19, 1
      %s217 = scalar_select %p216, %s19, 1
      %s218 = smul.addr %s217, 8
      %s219 = smul.addr %s218, 4
      %s220 = scalar_lea.vmem %s1, %s219
      %p221 = pneg %p69
      %p222 = pneg %p66
      %s223 = smul.u32 2, %s20
      %p224 = scmp.lt.s32.totalorder %s19, 1
      %s225 = scalar_select %p224, %s19, 1
      %p226 = scmp.lt.s32.totalorder %s223, 1
      %s227 = scalar_select %p226, %s223, 1
      %s228 = smul.addr %s225, 2
      %s229 = sadd.s32 %s227, %s228
      %s230 = scalar_lea.vmem %s2, %s229
      %p231 = pneg %p97
      %p232 = pneg %p94
      %s233 = smul.u32 2, %s20
      %p234 = scmp.lt.s32.totalorder %s19, 1
      %s235 = scalar_select %p234, %s19, 1
      %p236 = scmp.lt.s32.totalorder %s233, 1
      %s237 = scalar_select %p236, %s233, 1
      %s238 = smul.addr %s235, 2
      %s239 = sadd.s32 %s237, %s238
      %s240 = scalar_lea.vmem %s3, %s239
      %p241 = pneg %p125
      %p242 = pneg %p122
      %p243 = pneg %p153
      %p244 = pneg %p150
      %s245 = smul.u32 2, %s20
      %p246 = scmp.lt.s32.totalorder %s19, 1
      %s247 = scalar_select %p246, %s19, 1
      %p248 = scmp.lt.s32.totalorder %s245, 1
      %s249 = scalar_select %p248, %s245, 1
      %s250 = smul.addr %s247, 2
      %s251 = sadd.s32 %s249, %s250
      %s252 = scalar_lea.vmem %s4, %s251
      %p253 = scmp.lt.s32.totalorder %s19, 1
      %s254 = scalar_select %p253, %s19, 1
      %s255 = smul.addr %s254, 8
      %s256 = smul.addr %s255, 4
      %s257 = scalar_lea.vmem %s1, %s256
      %s258 = smul.u32 2, %s20
      %p259 = scmp.lt.s32.totalorder %s19, 1
      %s260 = scalar_select %p259, %s19, 1
      %p261 = scmp.lt.s32.totalorder %s258, 1
      %s262 = scalar_select %p261, %s258, 1
      %s263 = smul.addr %s260, 2
      %s264 = sadd.s32 %s262, %s263
      %s265 = scalar_lea.vmem %s2, %s264
      %s266 = smul.u32 2, %s20
      %s267 = smul.u32 2, %s20
      %p268 = scmp.lt.s32.totalorder %s19, 1
      %s269 = scalar_select %p268, %s19, 1
      %p270 = scmp.lt.s32.totalorder %s267, 1
      %s271 = scalar_select %p270, %s267, 1
      %s272 = smul.addr %s269, 2
      %s273 = sadd.s32 %s271, %s272
      %s274 = scalar_lea.vmem %s3, %s273
      %s275 = smul.u32 2, %s20
      %s276 = smul.u32 2, %s20
      %p277 = scmp.lt.s32.totalorder %s19, 1
      %s278 = scalar_select %p277, %s19, 1
      %p279 = scmp.lt.s32.totalorder %s276, 1
      %s280 = scalar_select %p279, %s276, 1
      %s281 = smul.addr %s278, 2
      %s282 = sadd.s32 %s280, %s281
      %s283 = scalar_lea.vmem %s4, %s282
      %s284 = smul.u32 2, %s20
      %v286 = vld [vmem:[%s0] sm:$0xff]
      %v287 = vld [vmem:[%s0 + $0x8] sm:$0xff]
      %v288 = vld [vmem:[%s0 + $0x10] sm:$0xff]
      %v289 = vld [vmem:[%s0 + $0x18] sm:$0xff]
      %v290 = vld [vmem:[%s265] sm:$0x3]
      %v291 = vld [vmem:[%s274] sm:$0x3]
      %293 = vset.pattern.permute.xlu0 0
      %294 = vperm.xlu0 %293, %v286
      %v295 = vpop.permute.xlu0 %294
      %298 = vset.pattern.permute.xlu0 0
      %299 = vperm.xlu0 %298, %v287
      %v300 = vpop.permute.xlu0 %299
      %303 = vset.pattern.permute.xlu0 0
      %304 = vperm.xlu0 %303, %v288
      %v305 = vpop.permute.xlu0 %304
      %308 = vset.pattern.permute.xlu0 0
      %309 = vperm.xlu0 %308, %v289
      %v310 = vpop.permute.xlu0 %309
      %v313 = vperm.slane %v291, 0
      %v314 = vperm.slane %v291, 1
      %v317 = vmul.f32 %v295, %v313
      %v318 = vmul.f32 %v295, %v314
      %v319 = vmul.f32 %v300, %v313
      %v320 = vmul.f32 %v300, %v314
      %v321 = vmul.f32 %v305, %v313
      %v322 = vmul.f32 %v305, %v314
      %v323 = vmul.f32 %v310, %v313
      %v324 = vmul.f32 %v310, %v314
      %v325 = vsub.f32 %v317, 1.5707964
      %v326 = vsub.f32 %v318, 1.5707964
      %v327 = vsub.f32 %v319, 1.5707964
      %v328 = vsub.f32 %v320, 1.5707964
      %v329 = vsub.f32 %v321, 1.5707964
      %v330 = vsub.f32 %v322, 1.5707964
      %v331 = vsub.f32 %v323, 1.5707964
      %v332 = vsub.f32 %v324, 1.5707964
      %v333 = vand.u32 2147483647, %v317
      %vm334 = vcmp.le.f32.partialorder %v333, 0.7853982
      %vm335 = vcmp.lt.s32.totalorder %v317, 0
      %v336 = vand.u32 %v317, 2139095040
      %v337 = vshrl.u32 %v336, 23
      %v338 = vsub.s32 %v337, 127
      %v339 = vand.u32 2147483647, %v317
      %v340 = vand.u32 %v339, 8388607
      %v341 = vor.u32 %v340, 8388608
      %v342 = vsub.s32 0, %v341
      %v343 = vadd.s32 %v338, 1
      %vm344 = vcmp.gt.s32.totalorder %v343, 0
      %v345 = vsel %vm344, %v343, 0
      %v346 = vshrl.u32 %v345, 5
      %v347 = vand.u32 %v345, 31
      %v348 = vsub.s32 32, %v347
      %v349 = vshrl.u32 683565275, %v348
      %v350 = vshll.u32 683565275, %v347
      %v351 = vshrl.u32 2475754826, %v348
      %v352 = vor.u32 %v350, %v351
      %v353 = vshll.u32 2475754826, %v347
      %v354 = vshrl.u32 2131351028, %v348
      %v355 = vor.u32 %v353, %v354
      %v356 = vshll.u32 2131351028, %v347
      %v357 = vshrl.u32 2102212464, %v348
      %v358 = vor.u32 %v356, %v357
      %v359 = vshll.u32 2102212464, %v347
      %v360 = vshrl.u32 920167782, %v348
      %v361 = vor.u32 %v359, %v360
      %v362 = vshll.u32 920167782, %v347
      %v363 = vshrl.u32 1326507024, %v348
      %v364 = vor.u32 %v362, %v363
      %vm365 = vcmp.lt.s32.totalorder %v346, 1
      %vm366 = vcmp.lt.s32.totalorder %v346, 2
      %vm367 = vcmp.lt.s32.totalorder %v346, 3
      %vm368 = vcmp.lt.s32.totalorder %v346, 4
      %v369 = vsel %vm365, %v349, %v352
      %v370 = vsel %vm368, %v358, 2102212464
      %v371 = vsel %vm367, %v355, %v370
      %v372 = vsel %vm366, %v369, %v371
      %v373 = vsel %vm365, %v352, %v355
      %v374 = vsel %vm368, %v361, 920167782
      %v375 = vsel %vm367, %v358, %v374
      %v376 = vsel %vm366, %v373, %v375
      %v377 = vsel %vm365, %v355, %v358
      %v378 = vsel %vm368, %v364, 1326507024
      %v379 = vsel %vm367, %v361, %v378
      %v380 = vsel %vm366, %v377, %v379
      %v381 = vshll.u32 %v341, 8
      %v382 = vand.u32 %v381, 65535
      %v383 = vshrl.u32 %v381, 16
      %v384 = vand.u32 %v380, 65535
      %v385 = vshrl.u32 %v380, 16
      %v386 = vmul.u32 %v382, %v384
      %v387 = vmul.u32 %v382, %v385
      %v388 = vmul.u32 %v383, %v384
      %v389 = vmul.u32 %v383, %v385
      %v390 = vshll.u32 %v387, 16
      %v391 = vshrl.u32 %v387, 16
      %v392 = vshll.u32 %v388, 16
      %v393 = vshrl.u32 %v388, 16
      %vm394 = vc.u32 %v386, %v390
      %v395 = vsel %vm394, 1, 0
      %v396 = vadd.s32 %v386, %v390
      %v397 = vadd.s32 %v389, %v395
      %vm398 = vc.u32 %v396, %v392
      %v399 = vsel %vm398, 1, 0
      %v400 = vadd.s32 %v396, %v392
      %v401 = vadd.s32 %v397, %v399
      %v402 = vadd.s32 %v401, %v391
      %v403 = vadd.s32 %v402, %v393
      %v404 = vand.u32 %v381, 65535
      %v405 = vshrl.u32 %v381, 16
      %v406 = vand.u32 %v376, 65535
      %v407 = vshrl.u32 %v376, 16
      %v408 = vmul.u32 %v404, %v406
      %v409 = vmul.u32 %v404, %v407
      %v410 = vmul.u32 %v405, %v406
      %v411 = vmul.u32 %v405, %v407
      %v412 = vshll.u32 %v409, 16
      %v413 = vshrl.u32 %v409, 16
      %v414 = vshll.u32 %v410, 16
      %v415 = vshrl.u32 %v410, 16
      %vm416 = vc.u32 %v408, %v412
      %v417 = vsel %vm416, 1, 0
      %v418 = vadd.s32 %v408, %v412
      %v419 = vadd.s32 %v411, %v417
      %vm420 = vc.u32 %v418, %v414
      %v421 = vsel %vm420, 1, 0
      %v422 = vadd.s32 %v418, %v414
      %v423 = vadd.s32 %v419, %v421
      %v424 = vadd.s32 %v423, %v413
      %v425 = vadd.s32 %v424, %v415
      %v426 = vmul.u32 %v381, %v372
      %v427 = vadd.s32 %v403, %v422
      %vm428 = vc.u32 %v403, %v422
      %v429 = vadd.s32 %v425, 1
      %v430 = vsel %vm428, %v429, %v425
      %v431 = vadd.s32 %v426, %v430
      %v432 = vadd.s32 %v431, 536870912
      %v433 = vshrl.u32 %v432, 30
      %v434 = vshll.u32 %v433, 30
      %v435 = vsub.s32 %v431, %v434
      %vm436 = vcmp.lt.s32.totalorder %v435, 0
      %v437 = vsub.s32 0, %v435
      %v438 = vsel %vm436, %v437, %v435
      %v439 = vclz %v438
      %v440 = vsub.s32 %v439, 2
      %vm441 = vcmp.gt.s32.totalorder 0, %v440
      %v442 = vsel %vm441, 0, %v440
      %v443 = vsub.s32 32, %v442
      %v444 = vshll.u32 %v435, %v442
      %v445 = vshrl.u32 %v427, %v443
      %v446 = vor.u32 %v444, %v445
      %v447 = vsub.s32 4294967266, %v442
      %v448 = vadd.s32 %v447, 127
      %v449 = vshll.u32 %v448, 23
      %v450 = vor.u32 4788187, %v449
      %v451 = vand.u32 2147483647, %v450
      %v453 = vcvt.s32.f32 %v446
      %v454 = vmul.f32 %v453, %v451
      %v455 = vxor.u32 %v454, 2147483648
      %v456 = vsel %vm335, %v455, %v454
      %v457 = vsub.s32 4, %v433
      %v458 = vsel %vm335, %v457, %v433
      %v459 = vsel %vm334, %v317, %v456
      %v460 = vsel %vm334, 0, %v458
      %v461 = vmul.f32 %v459, %v459
      %v462 = vmul.f32 %v461, -0.001358992
      %v463 = vadd.f32 %v462, 0.041655596
      %v464 = vmul.f32 %v461, %v463
      %v465 = vadd.f32 %v464, -0.4999988
      %v466 = vmul.f32 %v461, %v465
      %v467 = vadd.f32 1.0, %v466
      %v468 = vmul.f32 %v459, %v459
      %v469 = vmul.f32 %v468, -0.00019511016
      %v470 = vadd.f32 %v469, 0.008332121
      %v471 = vmul.f32 %v468, %v470
      %v472 = vadd.f32 %v471, -0.16666654
      %v473 = vmul.f32 %v468, %v472
      %v474 = vadd.f32 %v473, 1.0
      %v475 = vmul.f32 %v474, %v459
      %vm476 = vweird.f32 %v317
      %v477 = vand.u32 %v460, 3
      %vm478 = vcmp.lt.s32.totalorder %v477, 2
      %vm479 = vcmp.eq.s32.totalorder %v477, 0
      %v480 = vxor.u32 %v475, 2147483648
      %v481 = vsel %vm479, %v467, %v480
      %vm482 = vcmp.eq.s32.totalorder %v477, 2
      %v483 = vxor.u32 %v467, 2147483648
      %v484 = vsel %vm482, %v483, %v475
      %v485 = vsel %vm478, %v481, %v484
      %v486 = vsel %vm476, nan, %v485
      %v487 = vand.u32 2147483647, %v318
      %vm488 = vcmp.le.f32.partialorder %v487, 0.7853982
      %vm489 = vcmp.lt.s32.totalorder %v318, 0
      %v490 = vand.u32 %v318, 2139095040
      %v491 = vshrl.u32 %v490, 23
      %v492 = vsub.s32 %v491, 127
      %v493 = vand.u32 2147483647, %v318
      %v494 = vand.u32 %v493, 8388607
      %v495 = vor.u32 %v494, 8388608
      %v496 = vsub.s32 0, %v495
      %v497 = vadd.s32 %v492, 1
      %vm498 = vcmp.gt.s32.totalorder %v497, 0
      %v499 = vsel %vm498, %v497, 0
      %v500 = vshrl.u32 %v499, 5
      %v501 = vand.u32 %v499, 31
      %v502 = vsub.s32 32, %v501
      %v503 = vshrl.u32 683565275, %v502
      %v504 = vshll.u32 683565275, %v501
      %v505 = vshrl.u32 2475754826, %v502
      %v506 = vor.u32 %v504, %v505
      %v507 = vshll.u32 2475754826, %v501
      %v508 = vshrl.u32 2131351028, %v502
      %v509 = vor.u32 %v507, %v508
      %v510 = vshll.u32 2131351028, %v501
      %v511 = vshrl.u32 2102212464, %v502
      %v512 = vor.u32 %v510, %v511
      %v513 = vshll.u32 2102212464, %v501
      %v514 = vshrl.u32 920167782, %v502
      %v515 = vor.u32 %v513, %v514
      %v516 = vshll.u32 920167782, %v501
      %v517 = vshrl.u32 1326507024, %v502
      %v518 = vor.u32 %v516, %v517
      %vm519 = vcmp.lt.s32.totalorder %v500, 1
      %vm520 = vcmp.lt.s32.totalorder %v500, 2
      %vm521 = vcmp.lt.s32.totalorder %v500, 3
      %vm522 = vcmp.lt.s32.totalorder %v500, 4
      %v523 = vsel %vm519, %v503, %v506
      %v524 = vsel %vm522, %v512, 2102212464
      %v525 = vsel %vm521, %v509, %v524
      %v526 = vsel %vm520, %v523, %v525
      %v527 = vsel %vm519, %v506, %v509
      %v528 = vsel %vm522, %v515, 920167782
      %v529 = vsel %vm521, %v512, %v528
      %v530 = vsel %vm520, %v527, %v529
      %v531 = vsel %vm519, %v509, %v512
      %v532 = vsel %vm522, %v518, 1326507024
      %v533 = vsel %vm521, %v515, %v532
      %v534 = vsel %vm520, %v531, %v533
      %v535 = vshll.u32 %v495, 8
      %v536 = vand.u32 %v535, 65535
      %v537 = vshrl.u32 %v535, 16
      %v538 = vand.u32 %v534, 65535
      %v539 = vshrl.u32 %v534, 16
      %v540 = vmul.u32 %v536, %v538
      %v541 = vmul.u32 %v536, %v539
      %v542 = vmul.u32 %v537, %v538
      %v543 = vmul.u32 %v537, %v539
      %v544 = vshll.u32 %v541, 16
      %v545 = vshrl.u32 %v541, 16
      %v546 = vshll.u32 %v542, 16
      %v547 = vshrl.u32 %v542, 16
      %vm548 = vc.u32 %v540, %v544
      %v549 = vsel %vm548, 1, 0
      %v550 = vadd.s32 %v540, %v544
      %v551 = vadd.s32 %v543, %v549
      %vm552 = vc.u32 %v550, %v546
      %v553 = vsel %vm552, 1, 0
      %v554 = vadd.s32 %v550, %v546
      %v555 = vadd.s32 %v551, %v553
      %v556 = vadd.s32 %v555, %v545
      %v557 = vadd.s32 %v556, %v547
      %v558 = vand.u32 %v535, 65535
      %v559 = vshrl.u32 %v535, 16
      %v560 = vand.u32 %v530, 65535
      %v561 = vshrl.u32 %v530, 16
      %v562 = vmul.u32 %v558, %v560
      %v563 = vmul.u32 %v558, %v561
      %v564 = vmul.u32 %v559, %v560
      %v565 = vmul.u32 %v559, %v561
      %v566 = vshll.u32 %v563, 16
      %v567 = vshrl.u32 %v563, 16
      %v568 = vshll.u32 %v564, 16
      %v569 = vshrl.u32 %v564, 16
      %vm570 = vc.u32 %v562, %v566
      %v571 = vsel %vm570, 1, 0
      %v572 = vadd.s32 %v562, %v566
      %v573 = vadd.s32 %v565, %v571
      %vm574 = vc.u32 %v572, %v568
      %v575 = vsel %vm574, 1, 0
      %v576 = vadd.s32 %v572, %v568
      %v577 = vadd.s32 %v573, %v575
      %v578 = vadd.s32 %v577, %v567
      %v579 = vadd.s32 %v578, %v569
      %v580 = vmul.u32 %v535, %v526
      %v581 = vadd.s32 %v557, %v576
      %vm582 = vc.u32 %v557, %v576
      %v583 = vadd.s32 %v579, 1
      %v584 = vsel %vm582, %v583, %v579
      %v585 = vadd.s32 %v580, %v584
      %v586 = vadd.s32 %v585, 536870912
      %v587 = vshrl.u32 %v586, 30
      %v588 = vshll.u32 %v587, 30
      %v589 = vsub.s32 %v585, %v588
      %vm590 = vcmp.lt.s32.totalorder %v589, 0
      %v591 = vsub.s32 0, %v589
      %v592 = vsel %vm590, %v591, %v589
      %v593 = vclz %v592
      %v594 = vsub.s32 %v593, 2
      %vm595 = vcmp.gt.s32.totalorder 0, %v594
      %v596 = vsel %vm595, 0, %v594
      %v597 = vsub.s32 32, %v596
      %v598 = vshll.u32 %v589, %v596
      %v599 = vshrl.u32 %v581, %v597
      %v600 = vor.u32 %v598, %v599
      %v601 = vsub.s32 4294967266, %v596
      %v602 = vadd.s32 %v601, 127
      %v603 = vshll.u32 %v602, 23
      %v604 = vor.u32 4788187, %v603
      %v605 = vand.u32 2147483647, %v604
      %v607 = vcvt.s32.f32 %v600
      %v608 = vmul.f32 %v607, %v605
      %v609 = vxor.u32 %v608, 2147483648
      %v610 = vsel %vm489, %v609, %v608
      %v611 = vsub.s32 4, %v587
      %v612 = vsel %vm489, %v611, %v587
      %v613 = vsel %vm488, %v318, %v610
      %v614 = vsel %vm488, 0, %v612
      %v615 = vmul.f32 %v613, %v613
      %v616 = vmul.f32 %v615, -0.001358992
      %v617 = vadd.f32 %v616, 0.041655596
      %v618 = vmul.f32 %v615, %v617
      %v619 = vadd.f32 %v618, -0.4999988
      %v620 = vmul.f32 %v615, %v619
      %v621 = vadd.f32 1.0, %v620
      %v622 = vmul.f32 %v613, %v613
      %v623 = vmul.f32 %v622, -0.00019511016
      %v624 = vadd.f32 %v623, 0.008332121
      %v625 = vmul.f32 %v622, %v624
      %v626 = vadd.f32 %v625, -0.16666654
      %v627 = vmul.f32 %v622, %v626
      %v628 = vadd.f32 %v627, 1.0
      %v629 = vmul.f32 %v628, %v613
      %vm630 = vweird.f32 %v318
      %v631 = vand.u32 %v614, 3
      %vm632 = vcmp.lt.s32.totalorder %v631, 2
      %vm633 = vcmp.eq.s32.totalorder %v631, 0
      %v634 = vxor.u32 %v629, 2147483648
      %v635 = vsel %vm633, %v621, %v634
      %vm636 = vcmp.eq.s32.totalorder %v631, 2
      %v637 = vxor.u32 %v621, 2147483648
      %v638 = vsel %vm636, %v637, %v629
      %v639 = vsel %vm632, %v635, %v638
      %v640 = vsel %vm630, nan, %v639
      %v641 = vand.u32 2147483647, %v325
      %vm642 = vcmp.le.f32.partialorder %v641, 0.7853982
      %vm643 = vcmp.lt.s32.totalorder %v325, 0
      %v644 = vand.u32 %v325, 2139095040
      %v645 = vshrl.u32 %v644, 23
      %v646 = vsub.s32 %v645, 127
      %v647 = vand.u32 2147483647, %v325
      %v648 = vand.u32 %v647, 8388607
      %v649 = vor.u32 %v648, 8388608
      %v650 = vsub.s32 0, %v649
      %v651 = vadd.s32 %v646, 1
      %vm652 = vcmp.gt.s32.totalorder %v651, 0
      %v653 = vsel %vm652, %v651, 0
      %v654 = vshrl.u32 %v653, 5
      %v655 = vand.u32 %v653, 31
      %v656 = vsub.s32 32, %v655
      %v657 = vshrl.u32 683565275, %v656
      %v658 = vshll.u32 683565275, %v655
      %v659 = vshrl.u32 2475754826, %v656
      %v660 = vor.u32 %v658, %v659
      %v661 = vshll.u32 2475754826, %v655
      %v662 = vshrl.u32 2131351028, %v656
      %v663 = vor.u32 %v661, %v662
      %v664 = vshll.u32 2131351028, %v655
      %v665 = vshrl.u32 2102212464, %v656
      %v666 = vor.u32 %v664, %v665
      %v667 = vshll.u32 2102212464, %v655
      %v668 = vshrl.u32 920167782, %v656
      %v669 = vor.u32 %v667, %v668
      %v670 = vshll.u32 920167782, %v655
      %v671 = vshrl.u32 1326507024, %v656
      %v672 = vor.u32 %v670, %v671
      %vm673 = vcmp.lt.s32.totalorder %v654, 1
      %vm674 = vcmp.lt.s32.totalorder %v654, 2
      %vm675 = vcmp.lt.s32.totalorder %v654, 3
      %vm676 = vcmp.lt.s32.totalorder %v654, 4
      %v677 = vsel %vm673, %v657, %v660
      %v678 = vsel %vm676, %v666, 2102212464
      %v679 = vsel %vm675, %v663, %v678
      %v680 = vsel %vm674, %v677, %v679
      %v681 = vsel %vm673, %v660, %v663
      %v682 = vsel %vm676, %v669, 920167782
      %v683 = vsel %vm675, %v666, %v682
      %v684 = vsel %vm674, %v681, %v683
      %v685 = vsel %vm673, %v663, %v666
      %v686 = vsel %vm676, %v672, 1326507024
      %v687 = vsel %vm675, %v669, %v686
      %v688 = vsel %vm674, %v685, %v687
      %v689 = vshll.u32 %v649, 8
      %v690 = vand.u32 %v689, 65535
      %v691 = vshrl.u32 %v689, 16
      %v692 = vand.u32 %v688, 65535
      %v693 = vshrl.u32 %v688, 16
      %v694 = vmul.u32 %v690, %v692
      %v695 = vmul.u32 %v690, %v693
      %v696 = vmul.u32 %v691, %v692
      %v697 = vmul.u32 %v691, %v693
      %v698 = vshll.u32 %v695, 16
      %v699 = vshrl.u32 %v695, 16
      %v700 = vshll.u32 %v696, 16
      %v701 = vshrl.u32 %v696, 16
      %vm702 = vc.u32 %v694, %v698
      %v703 = vsel %vm702, 1, 0
      %v704 = vadd.s32 %v694, %v698
      %v705 = vadd.s32 %v697, %v703
      %vm706 = vc.u32 %v704, %v700
      %v707 = vsel %vm706, 1, 0
      %v708 = vadd.s32 %v704, %v700
      %v709 = vadd.s32 %v705, %v707
      %v710 = vadd.s32 %v709, %v699
      %v711 = vadd.s32 %v710, %v701
      %v712 = vand.u32 %v689, 65535
      %v713 = vshrl.u32 %v689, 16
      %v714 = vand.u32 %v684, 65535
      %v715 = vshrl.u32 %v684, 16
      %v716 = vmul.u32 %v712, %v714
      %v717 = vmul.u32 %v712, %v715
      %v718 = vmul.u32 %v713, %v714
      %v719 = vmul.u32 %v713, %v715
      %v720 = vshll.u32 %v717, 16
      %v721 = vshrl.u32 %v717, 16
      %v722 = vshll.u32 %v718, 16
      %v723 = vshrl.u32 %v718, 16
      %vm724 = vc.u32 %v716, %v720
      %v725 = vsel %vm724, 1, 0
      %v726 = vadd.s32 %v716, %v720
      %v727 = vadd.s32 %v719, %v725
      %vm728 = vc.u32 %v726, %v722
      %v729 = vsel %vm728, 1, 0
      %v730 = vadd.s32 %v726, %v722
      %v731 = vadd.s32 %v727, %v729
      %v732 = vadd.s32 %v731, %v721
      %v733 = vadd.s32 %v732, %v723
      %v734 = vmul.u32 %v689, %v680
      %v735 = vadd.s32 %v711, %v730
      %vm736 = vc.u32 %v711, %v730
      %v737 = vadd.s32 %v733, 1
      %v738 = vsel %vm736, %v737, %v733
      %v739 = vadd.s32 %v734, %v738
      %v740 = vadd.s32 %v739, 536870912
      %v741 = vshrl.u32 %v740, 30
      %v742 = vshll.u32 %v741, 30
      %v743 = vsub.s32 %v739, %v742
      %vm744 = vcmp.lt.s32.totalorder %v743, 0
      %v745 = vsub.s32 0, %v743
      %v746 = vsel %vm744, %v745, %v743
      %v747 = vclz %v746
      %v748 = vsub.s32 %v747, 2
      %vm749 = vcmp.gt.s32.totalorder 0, %v748
      %v750 = vsel %vm749, 0, %v748
      %v751 = vsub.s32 32, %v750
      %v752 = vshll.u32 %v743, %v750
      %v753 = vshrl.u32 %v735, %v751
      %v754 = vor.u32 %v752, %v753
      %v755 = vsub.s32 4294967266, %v750
      %v756 = vadd.s32 %v755, 127
      %v757 = vshll.u32 %v756, 23
      %v758 = vor.u32 4788187, %v757
      %v759 = vand.u32 2147483647, %v758
      %v761 = vcvt.s32.f32 %v754
      %v762 = vmul.f32 %v761, %v759
      %v763 = vxor.u32 %v762, 2147483648
      %v764 = vsel %vm643, %v763, %v762
      %v765 = vsub.s32 4, %v741
      %v766 = vsel %vm643, %v765, %v741
      %v767 = vsel %vm642, %v325, %v764
      %v768 = vsel %vm642, 0, %v766
      %v769 = vmul.f32 %v767, %v767
      %v770 = vmul.f32 %v769, -0.001358992
      %v771 = vadd.f32 %v770, 0.041655596
      %v772 = vmul.f32 %v769, %v771
      %v773 = vadd.f32 %v772, -0.4999988
      %v774 = vmul.f32 %v769, %v773
      %v775 = vadd.f32 1.0, %v774
      %v776 = vmul.f32 %v767, %v767
      %v777 = vmul.f32 %v776, -0.00019511016
      %v778 = vadd.f32 %v777, 0.008332121
      %v779 = vmul.f32 %v776, %v778
      %v780 = vadd.f32 %v779, -0.16666654
      %v781 = vmul.f32 %v776, %v780
      %v782 = vadd.f32 %v781, 1.0
      %v783 = vmul.f32 %v782, %v767
      %vm784 = vweird.f32 %v325
      %v785 = vand.u32 %v768, 3
      %vm786 = vcmp.lt.s32.totalorder %v785, 2
      %vm787 = vcmp.eq.s32.totalorder %v785, 0
      %v788 = vxor.u32 %v783, 2147483648
      %v789 = vsel %vm787, %v775, %v788
      %vm790 = vcmp.eq.s32.totalorder %v785, 2
      %v791 = vxor.u32 %v775, 2147483648
      %v792 = vsel %vm790, %v791, %v783
      %v793 = vsel %vm786, %v789, %v792
      %v794 = vsel %vm784, nan, %v793
      %v795 = vand.u32 2147483647, %v326
      %vm796 = vcmp.le.f32.partialorder %v795, 0.7853982
      %vm797 = vcmp.lt.s32.totalorder %v326, 0
      %v798 = vand.u32 %v326, 2139095040
      %v799 = vshrl.u32 %v798, 23
      %v800 = vsub.s32 %v799, 127
      %v801 = vand.u32 2147483647, %v326
      %v802 = vand.u32 %v801, 8388607
      %v803 = vor.u32 %v802, 8388608
      %v804 = vsub.s32 0, %v803
      %v805 = vadd.s32 %v800, 1
      %vm806 = vcmp.gt.s32.totalorder %v805, 0
      %v807 = vsel %vm806, %v805, 0
      %v808 = vshrl.u32 %v807, 5
      %v809 = vand.u32 %v807, 31
      %v810 = vsub.s32 32, %v809
      %v811 = vshrl.u32 683565275, %v810
      %v812 = vshll.u32 683565275, %v809
      %v813 = vshrl.u32 2475754826, %v810
      %v814 = vor.u32 %v812, %v813
      %v815 = vshll.u32 2475754826, %v809
      %v816 = vshrl.u32 2131351028, %v810
      %v817 = vor.u32 %v815, %v816
      %v818 = vshll.u32 2131351028, %v809
      %v819 = vshrl.u32 2102212464, %v810
      %v820 = vor.u32 %v818, %v819
      %v821 = vshll.u32 2102212464, %v809
      %v822 = vshrl.u32 920167782, %v810
      %v823 = vor.u32 %v821, %v822
      %v824 = vshll.u32 920167782, %v809
      %v825 = vshrl.u32 1326507024, %v810
      %v826 = vor.u32 %v824, %v825
      %vm827 = vcmp.lt.s32.totalorder %v808, 1
      %vm828 = vcmp.lt.s32.totalorder %v808, 2
      %vm829 = vcmp.lt.s32.totalorder %v808, 3
      %vm830 = vcmp.lt.s32.totalorder %v808, 4
      %v831 = vsel %vm827, %v811, %v814
      %v832 = vsel %vm830, %v820, 2102212464
      %v833 = vsel %vm829, %v817, %v832
      %v834 = vsel %vm828, %v831, %v833
      %v835 = vsel %vm827, %v814, %v817
      %v836 = vsel %vm830, %v823, 920167782
      %v837 = vsel %vm829, %v820, %v836
      %v838 = vsel %vm828, %v835, %v837
      %v839 = vsel %vm827, %v817, %v820
      %v840 = vsel %vm830, %v826, 1326507024
      %v841 = vsel %vm829, %v823, %v840
      %v842 = vsel %vm828, %v839, %v841
      %v843 = vshll.u32 %v803, 8
      %v844 = vand.u32 %v843, 65535
      %v845 = vshrl.u32 %v843, 16
      %v846 = vand.u32 %v842, 65535
      %v847 = vshrl.u32 %v842, 16
      %v848 = vmul.u32 %v844, %v846
      %v849 = vmul.u32 %v844, %v847
      %v850 = vmul.u32 %v845, %v846
      %v851 = vmul.u32 %v845, %v847
      %v852 = vshll.u32 %v849, 16
      %v853 = vshrl.u32 %v849, 16
      %v854 = vshll.u32 %v850, 16
      %v855 = vshrl.u32 %v850, 16
      %vm856 = vc.u32 %v848, %v852
      %v857 = vsel %vm856, 1, 0
      %v858 = vadd.s32 %v848, %v852
      %v859 = vadd.s32 %v851, %v857
      %vm860 = vc.u32 %v858, %v854
      %v861 = vsel %vm860, 1, 0
      %v862 = vadd.s32 %v858, %v854
      %v863 = vadd.s32 %v859, %v861
      %v864 = vadd.s32 %v863, %v853
      %v865 = vadd.s32 %v864, %v855
      %v866 = vand.u32 %v843, 65535
      %v867 = vshrl.u32 %v843, 16
      %v868 = vand.u32 %v838, 65535
      %v869 = vshrl.u32 %v838, 16
      %v870 = vmul.u32 %v866, %v868
      %v871 = vmul.u32 %v866, %v869
      %v872 = vmul.u32 %v867, %v868
      %v873 = vmul.u32 %v867, %v869
      %v874 = vshll.u32 %v871, 16
      %v875 = vshrl.u32 %v871, 16
      %v876 = vshll.u32 %v872, 16
      %v877 = vshrl.u32 %v872, 16
      %vm878 = vc.u32 %v870, %v874
      %v879 = vsel %vm878, 1, 0
      %v880 = vadd.s32 %v870, %v874
      %v881 = vadd.s32 %v873, %v879
      %vm882 = vc.u32 %v880, %v876
      %v883 = vsel %vm882, 1, 0
      %v884 = vadd.s32 %v880, %v876
      %v885 = vadd.s32 %v881, %v883
      %v886 = vadd.s32 %v885, %v875
      %v887 = vadd.s32 %v886, %v877
      %v888 = vmul.u32 %v843, %v834
      %v889 = vadd.s32 %v865, %v884
      %vm890 = vc.u32 %v865, %v884
      %v891 = vadd.s32 %v887, 1
      %v892 = vsel %vm890, %v891, %v887
      %v893 = vadd.s32 %v888, %v892
      %v894 = vadd.s32 %v893, 536870912
      %v895 = vshrl.u32 %v894, 30
      %v896 = vshll.u32 %v895, 30
      %v897 = vsub.s32 %v893, %v896
      %vm898 = vcmp.lt.s32.totalorder %v897, 0
      %v899 = vsub.s32 0, %v897
      %v900 = vsel %vm898, %v899, %v897
      %v901 = vclz %v900
      %v902 = vsub.s32 %v901, 2
      %vm903 = vcmp.gt.s32.totalorder 0, %v902
      %v904 = vsel %vm903, 0, %v902
      %v905 = vsub.s32 32, %v904
      %v906 = vshll.u32 %v897, %v904
      %v907 = vshrl.u32 %v889, %v905
      %v908 = vor.u32 %v906, %v907
      %v909 = vsub.s32 4294967266, %v904
      %v910 = vadd.s32 %v909, 127
      %v911 = vshll.u32 %v910, 23
      %v912 = vor.u32 4788187, %v911
      %v913 = vand.u32 2147483647, %v912
      %v915 = vcvt.s32.f32 %v908
      %v916 = vmul.f32 %v915, %v913
      %v917 = vxor.u32 %v916, 2147483648
      %v918 = vsel %vm797, %v917, %v916
      %v919 = vsub.s32 4, %v895
      %v920 = vsel %vm797, %v919, %v895
      %v921 = vsel %vm796, %v326, %v918
      %v922 = vsel %vm796, 0, %v920
      %v923 = vmul.f32 %v921, %v921
      %v924 = vmul.f32 %v923, -0.001358992
      %v925 = vadd.f32 %v924, 0.041655596
      %v926 = vmul.f32 %v923, %v925
      %v927 = vadd.f32 %v926, -0.4999988
      %v928 = vmul.f32 %v923, %v927
      %v929 = vadd.f32 1.0, %v928
      %v930 = vmul.f32 %v921, %v921
      %v931 = vmul.f32 %v930, -0.00019511016
      %v932 = vadd.f32 %v931, 0.008332121
      %v933 = vmul.f32 %v930, %v932
      %v934 = vadd.f32 %v933, -0.16666654
      %v935 = vmul.f32 %v930, %v934
      %v936 = vadd.f32 %v935, 1.0
      %v937 = vmul.f32 %v936, %v921
      %vm938 = vweird.f32 %v326
      %v939 = vand.u32 %v922, 3
      %vm940 = vcmp.lt.s32.totalorder %v939, 2
      %vm941 = vcmp.eq.s32.totalorder %v939, 0
      %v942 = vxor.u32 %v937, 2147483648
      %v943 = vsel %vm941, %v929, %v942
      %vm944 = vcmp.eq.s32.totalorder %v939, 2
      %v945 = vxor.u32 %v929, 2147483648
      %v946 = vsel %vm944, %v945, %v937
      %v947 = vsel %vm940, %v943, %v946
      %v948 = vsel %vm938, nan, %v947
      %v949 = vand.u32 2147483647, %v319
      %vm950 = vcmp.le.f32.partialorder %v949, 0.7853982
      %vm951 = vcmp.lt.s32.totalorder %v319, 0
      %v952 = vand.u32 %v319, 2139095040
      %v953 = vshrl.u32 %v952, 23
      %v954 = vsub.s32 %v953, 127
      %v955 = vand.u32 2147483647, %v319
      %v956 = vand.u32 %v955, 8388607
      %v957 = vor.u32 %v956, 8388608
      %v958 = vsub.s32 0, %v957
      %v959 = vadd.s32 %v954, 1
      %vm960 = vcmp.gt.s32.totalorder %v959, 0
      %v961 = vsel %vm960, %v959, 0
      %v962 = vshrl.u32 %v961, 5
      %v963 = vand.u32 %v961, 31
      %v964 = vsub.s32 32, %v963
      %v965 = vshrl.u32 683565275, %v964
      %v966 = vshll.u32 683565275, %v963
      %v967 = vshrl.u32 2475754826, %v964
      %v968 = vor.u32 %v966, %v967
      %v969 = vshll.u32 2475754826, %v963
      %v970 = vshrl.u32 2131351028, %v964
      %v971 = vor.u32 %v969, %v970
      %v972 = vshll.u32 2131351028, %v963
      %v973 = vshrl.u32 2102212464, %v964
      %v974 = vor.u32 %v972, %v973
      %v975 = vshll.u32 2102212464, %v963
      %v976 = vshrl.u32 920167782, %v964
      %v977 = vor.u32 %v975, %v976
      %v978 = vshll.u32 920167782, %v963
      %v979 = vshrl.u32 1326507024, %v964
      %v980 = vor.u32 %v978, %v979
      %vm981 = vcmp.lt.s32.totalorder %v962, 1
      %vm982 = vcmp.lt.s32.totalorder %v962, 2
      %vm983 = vcmp.lt.s32.totalorder %v962, 3
      %vm984 = vcmp.lt.s32.totalorder %v962, 4
      %v985 = vsel %vm981, %v965, %v968
      %v986 = vsel %vm984, %v974, 2102212464
      %v987 = vsel %vm983, %v971, %v986
      %v988 = vsel %vm982, %v985, %v987
      %v989 = vsel %vm981, %v968, %v971
      %v990 = vsel %vm984, %v977, 920167782
      %v991 = vsel %vm983, %v974, %v990
      %v992 = vsel %vm982, %v989, %v991
      %v993 = vsel %vm981, %v971, %v974
      %v994 = vsel %vm984, %v980, 1326507024
      %v995 = vsel %vm983, %v977, %v994
      %v996 = vsel %vm982, %v993, %v995
      %v997 = vshll.u32 %v957, 8
      %v998 = vand.u32 %v997, 65535
      %v999 = vshrl.u32 %v997, 16
      %v1000 = vand.u32 %v996, 65535
      %v1001 = vshrl.u32 %v996, 16
      %v1002 = vmul.u32 %v998, %v1000
      %v1003 = vmul.u32 %v998, %v1001
      %v1004 = vmul.u32 %v999, %v1000
      %v1005 = vmul.u32 %v999, %v1001
      %v1006 = vshll.u32 %v1003, 16
      %v1007 = vshrl.u32 %v1003, 16
      %v1008 = vshll.u32 %v1004, 16
      %v1009 = vshrl.u32 %v1004, 16
      %vm1010 = vc.u32 %v1002, %v1006
      %v1011 = vsel %vm1010, 1, 0
      %v1012 = vadd.s32 %v1002, %v1006
      %v1013 = vadd.s32 %v1005, %v1011
      %vm1014 = vc.u32 %v1012, %v1008
      %v1015 = vsel %vm1014, 1, 0
      %v1016 = vadd.s32 %v1012, %v1008
      %v1017 = vadd.s32 %v1013, %v1015
      %v1018 = vadd.s32 %v1017, %v1007
      %v1019 = vadd.s32 %v1018, %v1009
      %v1020 = vand.u32 %v997, 65535
      %v1021 = vshrl.u32 %v997, 16
      %v1022 = vand.u32 %v992, 65535
      %v1023 = vshrl.u32 %v992, 16
      %v1024 = vmul.u32 %v1020, %v1022
      %v1025 = vmul.u32 %v1020, %v1023
      %v1026 = vmul.u32 %v1021, %v1022
      %v1027 = vmul.u32 %v1021, %v1023
      %v1028 = vshll.u32 %v1025, 16
      %v1029 = vshrl.u32 %v1025, 16
      %v1030 = vshll.u32 %v1026, 16
      %v1031 = vshrl.u32 %v1026, 16
      %vm1032 = vc.u32 %v1024, %v1028
      %v1033 = vsel %vm1032, 1, 0
      %v1034 = vadd.s32 %v1024, %v1028
      %v1035 = vadd.s32 %v1027, %v1033
      %vm1036 = vc.u32 %v1034, %v1030
      %v1037 = vsel %vm1036, 1, 0
      %v1038 = vadd.s32 %v1034, %v1030
      %v1039 = vadd.s32 %v1035, %v1037
      %v1040 = vadd.s32 %v1039, %v1029
      %v1041 = vadd.s32 %v1040, %v1031
      %v1042 = vmul.u32 %v997, %v988
      %v1043 = vadd.s32 %v1019, %v1038
      %vm1044 = vc.u32 %v1019, %v1038
      %v1045 = vadd.s32 %v1041, 1
      %v1046 = vsel %vm1044, %v1045, %v1041
      %v1047 = vadd.s32 %v1042, %v1046
      %v1048 = vadd.s32 %v1047, 536870912
      %v1049 = vshrl.u32 %v1048, 30
      %v1050 = vshll.u32 %v1049, 30
      %v1051 = vsub.s32 %v1047, %v1050
      %vm1052 = vcmp.lt.s32.totalorder %v1051, 0
      %v1053 = vsub.s32 0, %v1051
      %v1054 = vsel %vm1052, %v1053, %v1051
      %v1055 = vclz %v1054
      %v1056 = vsub.s32 %v1055, 2
      %vm1057 = vcmp.gt.s32.totalorder 0, %v1056
      %v1058 = vsel %vm1057, 0, %v1056
      %v1059 = vsub.s32 32, %v1058
      %v1060 = vshll.u32 %v1051, %v1058
      %v1061 = vshrl.u32 %v1043, %v1059
      %v1062 = vor.u32 %v1060, %v1061
      %v1063 = vsub.s32 4294967266, %v1058
      %v1064 = vadd.s32 %v1063, 127
      %v1065 = vshll.u32 %v1064, 23
      %v1066 = vor.u32 4788187, %v1065
      %v1067 = vand.u32 2147483647, %v1066
      %v1069 = vcvt.s32.f32 %v1062
      %v1070 = vmul.f32 %v1069, %v1067
      %v1071 = vxor.u32 %v1070, 2147483648
      %v1072 = vsel %vm951, %v1071, %v1070
      %v1073 = vsub.s32 4, %v1049
      %v1074 = vsel %vm951, %v1073, %v1049
      %v1075 = vsel %vm950, %v319, %v1072
      %v1076 = vsel %vm950, 0, %v1074
      %v1077 = vmul.f32 %v1075, %v1075
      %v1078 = vmul.f32 %v1077, -0.001358992
      %v1079 = vadd.f32 %v1078, 0.041655596
      %v1080 = vmul.f32 %v1077, %v1079
      %v1081 = vadd.f32 %v1080, -0.4999988
      %v1082 = vmul.f32 %v1077, %v1081
      %v1083 = vadd.f32 1.0, %v1082
      %v1084 = vmul.f32 %v1075, %v1075
      %v1085 = vmul.f32 %v1084, -0.00019511016
      %v1086 = vadd.f32 %v1085, 0.008332121
      %v1087 = vmul.f32 %v1084, %v1086
      %v1088 = vadd.f32 %v1087, -0.16666654
      %v1089 = vmul.f32 %v1084, %v1088
      %v1090 = vadd.f32 %v1089, 1.0
      %v1091 = vmul.f32 %v1090, %v1075
      %vm1092 = vweird.f32 %v319
      %v1093 = vand.u32 %v1076, 3
      %vm1094 = vcmp.lt.s32.totalorder %v1093, 2
      %vm1095 = vcmp.eq.s32.totalorder %v1093, 0
      %v1096 = vxor.u32 %v1091, 2147483648
      %v1097 = vsel %vm1095, %v1083, %v1096
      %vm1098 = vcmp.eq.s32.totalorder %v1093, 2
      %v1099 = vxor.u32 %v1083, 2147483648
      %v1100 = vsel %vm1098, %v1099, %v1091
      %v1101 = vsel %vm1094, %v1097, %v1100
      %v1102 = vsel %vm1092, nan, %v1101
      %v1103 = vand.u32 2147483647, %v320
      %vm1104 = vcmp.le.f32.partialorder %v1103, 0.7853982
      %vm1105 = vcmp.lt.s32.totalorder %v320, 0
      %v1106 = vand.u32 %v320, 2139095040
      %v1107 = vshrl.u32 %v1106, 23
      %v1108 = vsub.s32 %v1107, 127
      %v1109 = vand.u32 2147483647, %v320
      %v1110 = vand.u32 %v1109, 8388607
      %v1111 = vor.u32 %v1110, 8388608
      %v1112 = vsub.s32 0, %v1111
      %v1113 = vadd.s32 %v1108, 1
      %vm1114 = vcmp.gt.s32.totalorder %v1113, 0
      %v1115 = vsel %vm1114, %v1113, 0
      %v1116 = vshrl.u32 %v1115, 5
      %v1117 = vand.u32 %v1115, 31
      %v1118 = vsub.s32 32, %v1117
      %v1119 = vshrl.u32 683565275, %v1118
      %v1120 = vshll.u32 683565275, %v1117
      %v1121 = vshrl.u32 2475754826, %v1118
      %v1122 = vor.u32 %v1120, %v1121
      %v1123 = vshll.u32 2475754826, %v1117
      %v1124 = vshrl.u32 2131351028, %v1118
      %v1125 = vor.u32 %v1123, %v1124
      %v1126 = vshll.u32 2131351028, %v1117
      %v1127 = vshrl.u32 2102212464, %v1118
      %v1128 = vor.u32 %v1126, %v1127
      %v1129 = vshll.u32 2102212464, %v1117
      %v1130 = vshrl.u32 920167782, %v1118
      %v1131 = vor.u32 %v1129, %v1130
      %v1132 = vshll.u32 920167782, %v1117
      %v1133 = vshrl.u32 1326507024, %v1118
      %v1134 = vor.u32 %v1132, %v1133
      %vm1135 = vcmp.lt.s32.totalorder %v1116, 1
      %vm1136 = vcmp.lt.s32.totalorder %v1116, 2
      %vm1137 = vcmp.lt.s32.totalorder %v1116, 3
      %vm1138 = vcmp.lt.s32.totalorder %v1116, 4
      %v1139 = vsel %vm1135, %v1119, %v1122
      %v1140 = vsel %vm1138, %v1128, 2102212464
      %v1141 = vsel %vm1137, %v1125, %v1140
      %v1142 = vsel %vm1136, %v1139, %v1141
      %v1143 = vsel %vm1135, %v1122, %v1125
      %v1144 = vsel %vm1138, %v1131, 920167782
      %v1145 = vsel %vm1137, %v1128, %v1144
      %v1146 = vsel %vm1136, %v1143, %v1145
      %v1147 = vsel %vm1135, %v1125, %v1128
      %v1148 = vsel %vm1138, %v1134, 1326507024
      %v1149 = vsel %vm1137, %v1131, %v1148
      %v1150 = vsel %vm1136, %v1147, %v1149
      %v1151 = vshll.u32 %v1111, 8
      %v1152 = vand.u32 %v1151, 65535
      %v1153 = vshrl.u32 %v1151, 16
      %v1154 = vand.u32 %v1150, 65535
      %v1155 = vshrl.u32 %v1150, 16
      %v1156 = vmul.u32 %v1152, %v1154
      %v1157 = vmul.u32 %v1152, %v1155
      %v1158 = vmul.u32 %v1153, %v1154
      %v1159 = vmul.u32 %v1153, %v1155
      %v1160 = vshll.u32 %v1157, 16
      %v1161 = vshrl.u32 %v1157, 16
      %v1162 = vshll.u32 %v1158, 16
      %v1163 = vshrl.u32 %v1158, 16
      %vm1164 = vc.u32 %v1156, %v1160
      %v1165 = vsel %vm1164, 1, 0
      %v1166 = vadd.s32 %v1156, %v1160
      %v1167 = vadd.s32 %v1159, %v1165
      %vm1168 = vc.u32 %v1166, %v1162
      %v1169 = vsel %vm1168, 1, 0
      %v1170 = vadd.s32 %v1166, %v1162
      %v1171 = vadd.s32 %v1167, %v1169
      %v1172 = vadd.s32 %v1171, %v1161
      %v1173 = vadd.s32 %v1172, %v1163
      %v1174 = vand.u32 %v1151, 65535
      %v1175 = vshrl.u32 %v1151, 16
      %v1176 = vand.u32 %v1146, 65535
      %v1177 = vshrl.u32 %v1146, 16
      %v1178 = vmul.u32 %v1174, %v1176
      %v1179 = vmul.u32 %v1174, %v1177
      %v1180 = vmul.u32 %v1175, %v1176
      %v1181 = vmul.u32 %v1175, %v1177
      %v1182 = vshll.u32 %v1179, 16
      %v1183 = vshrl.u32 %v1179, 16
      %v1184 = vshll.u32 %v1180, 16
      %v1185 = vshrl.u32 %v1180, 16
      %vm1186 = vc.u32 %v1178, %v1182
      %v1187 = vsel %vm1186, 1, 0
      %v1188 = vadd.s32 %v1178, %v1182
      %v1189 = vadd.s32 %v1181, %v1187
      %vm1190 = vc.u32 %v1188, %v1184
      %v1191 = vsel %vm1190, 1, 0
      %v1192 = vadd.s32 %v1188, %v1184
      %v1193 = vadd.s32 %v1189, %v1191
      %v1194 = vadd.s32 %v1193, %v1183
      %v1195 = vadd.s32 %v1194, %v1185
      %v1196 = vmul.u32 %v1151, %v1142
      %v1197 = vadd.s32 %v1173, %v1192
      %vm1198 = vc.u32 %v1173, %v1192
      %v1199 = vadd.s32 %v1195, 1
      %v1200 = vsel %vm1198, %v1199, %v1195
      %v1201 = vadd.s32 %v1196, %v1200
      %v1202 = vadd.s32 %v1201, 536870912
      %v1203 = vshrl.u32 %v1202, 30
      %v1204 = vshll.u32 %v1203, 30
      %v1205 = vsub.s32 %v1201, %v1204
      %vm1206 = vcmp.lt.s32.totalorder %v1205, 0
      %v1207 = vsub.s32 0, %v1205
      %v1208 = vsel %vm1206, %v1207, %v1205
      %v1209 = vclz %v1208
      %v1210 = vsub.s32 %v1209, 2
      %vm1211 = vcmp.gt.s32.totalorder 0, %v1210
      %v1212 = vsel %vm1211, 0, %v1210
      %v1213 = vsub.s32 32, %v1212
      %v1214 = vshll.u32 %v1205, %v1212
      %v1215 = vshrl.u32 %v1197, %v1213
      %v1216 = vor.u32 %v1214, %v1215
      %v1217 = vsub.s32 4294967266, %v1212
      %v1218 = vadd.s32 %v1217, 127
      %v1219 = vshll.u32 %v1218, 23
      %v1220 = vor.u32 4788187, %v1219
      %v1221 = vand.u32 2147483647, %v1220
      %v1223 = vcvt.s32.f32 %v1216
      %v1224 = vmul.f32 %v1223, %v1221
      %v1225 = vxor.u32 %v1224, 2147483648
      %v1226 = vsel %vm1105, %v1225, %v1224
      %v1227 = vsub.s32 4, %v1203
      %v1228 = vsel %vm1105, %v1227, %v1203
      %v1229 = vsel %vm1104, %v320, %v1226
      %v1230 = vsel %vm1104, 0, %v1228
      %v1231 = vmul.f32 %v1229, %v1229
      %v1232 = vmul.f32 %v1231, -0.001358992
      %v1233 = vadd.f32 %v1232, 0.041655596
      %v1234 = vmul.f32 %v1231, %v1233
      %v1235 = vadd.f32 %v1234, -0.4999988
      %v1236 = vmul.f32 %v1231, %v1235
      %v1237 = vadd.f32 1.0, %v1236
      %v1238 = vmul.f32 %v1229, %v1229
      %v1239 = vmul.f32 %v1238, -0.00019511016
      %v1240 = vadd.f32 %v1239, 0.008332121
      %v1241 = vmul.f32 %v1238, %v1240
      %v1242 = vadd.f32 %v1241, -0.16666654
      %v1243 = vmul.f32 %v1238, %v1242
      %v1244 = vadd.f32 %v1243, 1.0
      %v1245 = vmul.f32 %v1244, %v1229
      %vm1246 = vweird.f32 %v320
      %v1247 = vand.u32 %v1230, 3
      %vm1248 = vcmp.lt.s32.totalorder %v1247, 2
      %vm1249 = vcmp.eq.s32.totalorder %v1247, 0
      %v1250 = vxor.u32 %v1245, 2147483648
      %v1251 = vsel %vm1249, %v1237, %v1250
      %vm1252 = vcmp.eq.s32.totalorder %v1247, 2
      %v1253 = vxor.u32 %v1237, 2147483648
      %v1254 = vsel %vm1252, %v1253, %v1245
      %v1255 = vsel %vm1248, %v1251, %v1254
      %v1256 = vsel %vm1246, nan, %v1255
      %v1257 = vand.u32 2147483647, %v327
      %vm1258 = vcmp.le.f32.partialorder %v1257, 0.7853982
      %vm1259 = vcmp.lt.s32.totalorder %v327, 0
      %v1260 = vand.u32 %v327, 2139095040
      %v1261 = vshrl.u32 %v1260, 23
      %v1262 = vsub.s32 %v1261, 127
      %v1263 = vand.u32 2147483647, %v327
      %v1264 = vand.u32 %v1263, 8388607
      %v1265 = vor.u32 %v1264, 8388608
      %v1266 = vsub.s32 0, %v1265
      %v1267 = vadd.s32 %v1262, 1
      %vm1268 = vcmp.gt.s32.totalorder %v1267, 0
      %v1269 = vsel %vm1268, %v1267, 0
      %v1270 = vshrl.u32 %v1269, 5
      %v1271 = vand.u32 %v1269, 31
      %v1272 = vsub.s32 32, %v1271
      %v1273 = vshrl.u32 683565275, %v1272
      %v1274 = vshll.u32 683565275, %v1271
      %v1275 = vshrl.u32 2475754826, %v1272
      %v1276 = vor.u32 %v1274, %v1275
      %v1277 = vshll.u32 2475754826, %v1271
      %v1278 = vshrl.u32 2131351028, %v1272
      %v1279 = vor.u32 %v1277, %v1278
      %v1280 = vshll.u32 2131351028, %v1271
      %v1281 = vshrl.u32 2102212464, %v1272
      %v1282 = vor.u32 %v1280, %v1281
      %v1283 = vshll.u32 2102212464, %v1271
      %v1284 = vshrl.u32 920167782, %v1272
      %v1285 = vor.u32 %v1283, %v1284
      %v1286 = vshll.u32 920167782, %v1271
      %v1287 = vshrl.u32 1326507024, %v1272
      %v1288 = vor.u32 %v1286, %v1287
      %vm1289 = vcmp.lt.s32.totalorder %v1270, 1
      %vm1290 = vcmp.lt.s32.totalorder %v1270, 2
      %vm1291 = vcmp.lt.s32.totalorder %v1270, 3
      %vm1292 = vcmp.lt.s32.totalorder %v1270, 4
      %v1293 = vsel %vm1289, %v1273, %v1276
      %v1294 = vsel %vm1292, %v1282, 2102212464
      %v1295 = vsel %vm1291, %v1279, %v1294
      %v1296 = vsel %vm1290, %v1293, %v1295
      %v1297 = vsel %vm1289, %v1276, %v1279
      %v1298 = vsel %vm1292, %v1285, 920167782
      %v1299 = vsel %vm1291, %v1282, %v1298
      %v1300 = vsel %vm1290, %v1297, %v1299
      %v1301 = vsel %vm1289, %v1279, %v1282
      %v1302 = vsel %vm1292, %v1288, 1326507024
      %v1303 = vsel %vm1291, %v1285, %v1302
      %v1304 = vsel %vm1290, %v1301, %v1303
      %v1305 = vshll.u32 %v1265, 8
      %v1306 = vand.u32 %v1305, 65535
      %v1307 = vshrl.u32 %v1305, 16
      %v1308 = vand.u32 %v1304, 65535
      %v1309 = vshrl.u32 %v1304, 16
      %v1310 = vmul.u32 %v1306, %v1308
      %v1311 = vmul.u32 %v1306, %v1309
      %v1312 = vmul.u32 %v1307, %v1308
      %v1313 = vmul.u32 %v1307, %v1309
      %v1314 = vshll.u32 %v1311, 16
      %v1315 = vshrl.u32 %v1311, 16
      %v1316 = vshll.u32 %v1312, 16
      %v1317 = vshrl.u32 %v1312, 16
      %vm1318 = vc.u32 %v1310, %v1314
      %v1319 = vsel %vm1318, 1, 0
      %v1320 = vadd.s32 %v1310, %v1314
      %v1321 = vadd.s32 %v1313, %v1319
      %vm1322 = vc.u32 %v1320, %v1316
      %v1323 = vsel %vm1322, 1, 0
      %v1324 = vadd.s32 %v1320, %v1316
      %v1325 = vadd.s32 %v1321, %v1323
      %v1326 = vadd.s32 %v1325, %v1315
      %v1327 = vadd.s32 %v1326, %v1317
      %v1328 = vand.u32 %v1305, 65535
      %v1329 = vshrl.u32 %v1305, 16
      %v1330 = vand.u32 %v1300, 65535
      %v1331 = vshrl.u32 %v1300, 16
      %v1332 = vmul.u32 %v1328, %v1330
      %v1333 = vmul.u32 %v1328, %v1331
      %v1334 = vmul.u32 %v1329, %v1330
      %v1335 = vmul.u32 %v1329, %v1331
      %v1336 = vshll.u32 %v1333, 16
      %v1337 = vshrl.u32 %v1333, 16
      %v1338 = vshll.u32 %v1334, 16
      %v1339 = vshrl.u32 %v1334, 16
      %vm1340 = vc.u32 %v1332, %v1336
      %v1341 = vsel %vm1340, 1, 0
      %v1342 = vadd.s32 %v1332, %v1336
      %v1343 = vadd.s32 %v1335, %v1341
      %vm1344 = vc.u32 %v1342, %v1338
      %v1345 = vsel %vm1344, 1, 0
      %v1346 = vadd.s32 %v1342, %v1338
      %v1347 = vadd.s32 %v1343, %v1345
      %v1348 = vadd.s32 %v1347, %v1337
      %v1349 = vadd.s32 %v1348, %v1339
      %v1350 = vmul.u32 %v1305, %v1296
      %v1351 = vadd.s32 %v1327, %v1346
      %vm1352 = vc.u32 %v1327, %v1346
      %v1353 = vadd.s32 %v1349, 1
      %v1354 = vsel %vm1352, %v1353, %v1349
      %v1355 = vadd.s32 %v1350, %v1354
      %v1356 = vadd.s32 %v1355, 536870912
      %v1357 = vshrl.u32 %v1356, 30
      %v1358 = vshll.u32 %v1357, 30
      %v1359 = vsub.s32 %v1355, %v1358
      %vm1360 = vcmp.lt.s32.totalorder %v1359, 0
      %v1361 = vsub.s32 0, %v1359
      %v1362 = vsel %vm1360, %v1361, %v1359
      %v1363 = vclz %v1362
      %v1364 = vsub.s32 %v1363, 2
      %vm1365 = vcmp.gt.s32.totalorder 0, %v1364
      %v1366 = vsel %vm1365, 0, %v1364
      %v1367 = vsub.s32 32, %v1366
      %v1368 = vshll.u32 %v1359, %v1366
      %v1369 = vshrl.u32 %v1351, %v1367
      %v1370 = vor.u32 %v1368, %v1369
      %v1371 = vsub.s32 4294967266, %v1366
      %v1372 = vadd.s32 %v1371, 127
      %v1373 = vshll.u32 %v1372, 23
      %v1374 = vor.u32 4788187, %v1373
      %v1375 = vand.u32 2147483647, %v1374
      %v1377 = vcvt.s32.f32 %v1370
      %v1378 = vmul.f32 %v1377, %v1375
      %v1379 = vxor.u32 %v1378, 2147483648
      %v1380 = vsel %vm1259, %v1379, %v1378
      %v1381 = vsub.s32 4, %v1357
      %v1382 = vsel %vm1259, %v1381, %v1357
      %v1383 = vsel %vm1258, %v327, %v1380
      %v1384 = vsel %vm1258, 0, %v1382
      %v1385 = vmul.f32 %v1383, %v1383
      %v1386 = vmul.f32 %v1385, -0.001358992
      %v1387 = vadd.f32 %v1386, 0.041655596
      %v1388 = vmul.f32 %v1385, %v1387
      %v1389 = vadd.f32 %v1388, -0.4999988
      %v1390 = vmul.f32 %v1385, %v1389
      %v1391 = vadd.f32 1.0, %v1390
      %v1392 = vmul.f32 %v1383, %v1383
      %v1393 = vmul.f32 %v1392, -0.00019511016
      %v1394 = vadd.f32 %v1393, 0.008332121
      %v1395 = vmul.f32 %v1392, %v1394
      %v1396 = vadd.f32 %v1395, -0.16666654
      %v1397 = vmul.f32 %v1392, %v1396
      %v1398 = vadd.f32 %v1397, 1.0
      %v1399 = vmul.f32 %v1398, %v1383
      %vm1400 = vweird.f32 %v327
      %v1401 = vand.u32 %v1384, 3
      %vm1402 = vcmp.lt.s32.totalorder %v1401, 2
      %vm1403 = vcmp.eq.s32.totalorder %v1401, 0
      %v1404 = vxor.u32 %v1399, 2147483648
      %v1405 = vsel %vm1403, %v1391, %v1404
      %vm1406 = vcmp.eq.s32.totalorder %v1401, 2
      %v1407 = vxor.u32 %v1391, 2147483648
      %v1408 = vsel %vm1406, %v1407, %v1399
      %v1409 = vsel %vm1402, %v1405, %v1408
      %v1410 = vsel %vm1400, nan, %v1409
      %v1411 = vand.u32 2147483647, %v328
      %vm1412 = vcmp.le.f32.partialorder %v1411, 0.7853982
      %vm1413 = vcmp.lt.s32.totalorder %v328, 0
      %v1414 = vand.u32 %v328, 2139095040
      %v1415 = vshrl.u32 %v1414, 23
      %v1416 = vsub.s32 %v1415, 127
      %v1417 = vand.u32 2147483647, %v328
      %v1418 = vand.u32 %v1417, 8388607
      %v1419 = vor.u32 %v1418, 8388608
      %v1420 = vsub.s32 0, %v1419
      %v1421 = vadd.s32 %v1416, 1
      %vm1422 = vcmp.gt.s32.totalorder %v1421, 0
      %v1423 = vsel %vm1422, %v1421, 0
      %v1424 = vshrl.u32 %v1423, 5
      %v1425 = vand.u32 %v1423, 31
      %v1426 = vsub.s32 32, %v1425
      %v1427 = vshrl.u32 683565275, %v1426
      %v1428 = vshll.u32 683565275, %v1425
      %v1429 = vshrl.u32 2475754826, %v1426
      %v1430 = vor.u32 %v1428, %v1429
      %v1431 = vshll.u32 2475754826, %v1425
      %v1432 = vshrl.u32 2131351028, %v1426
      %v1433 = vor.u32 %v1431, %v1432
      %v1434 = vshll.u32 2131351028, %v1425
      %v1435 = vshrl.u32 2102212464, %v1426
      %v1436 = vor.u32 %v1434, %v1435
      %v1437 = vshll.u32 2102212464, %v1425
      %v1438 = vshrl.u32 920167782, %v1426
      %v1439 = vor.u32 %v1437, %v1438
      %v1440 = vshll.u32 920167782, %v1425
      %v1441 = vshrl.u32 1326507024, %v1426
      %v1442 = vor.u32 %v1440, %v1441
      %vm1443 = vcmp.lt.s32.totalorder %v1424, 1
      %vm1444 = vcmp.lt.s32.totalorder %v1424, 2
      %vm1445 = vcmp.lt.s32.totalorder %v1424, 3
      %vm1446 = vcmp.lt.s32.totalorder %v1424, 4
      %v1447 = vsel %vm1443, %v1427, %v1430
      %v1448 = vsel %vm1446, %v1436, 2102212464
      %v1449 = vsel %vm1445, %v1433, %v1448
      %v1450 = vsel %vm1444, %v1447, %v1449
      %v1451 = vsel %vm1443, %v1430, %v1433
      %v1452 = vsel %vm1446, %v1439, 920167782
      %v1453 = vsel %vm1445, %v1436, %v1452
      %v1454 = vsel %vm1444, %v1451, %v1453
      %v1455 = vsel %vm1443, %v1433, %v1436
      %v1456 = vsel %vm1446, %v1442, 1326507024
      %v1457 = vsel %vm1445, %v1439, %v1456
      %v1458 = vsel %vm1444, %v1455, %v1457
      %v1459 = vshll.u32 %v1419, 8
      %v1460 = vand.u32 %v1459, 65535
      %v1461 = vshrl.u32 %v1459, 16
      %v1462 = vand.u32 %v1458, 65535
      %v1463 = vshrl.u32 %v1458, 16
      %v1464 = vmul.u32 %v1460, %v1462
      %v1465 = vmul.u32 %v1460, %v1463
      %v1466 = vmul.u32 %v1461, %v1462
      %v1467 = vmul.u32 %v1461, %v1463
      %v1468 = vshll.u32 %v1465, 16
      %v1469 = vshrl.u32 %v1465, 16
      %v1470 = vshll.u32 %v1466, 16
      %v1471 = vshrl.u32 %v1466, 16
      %vm1472 = vc.u32 %v1464, %v1468
      %v1473 = vsel %vm1472, 1, 0
      %v1474 = vadd.s32 %v1464, %v1468
      %v1475 = vadd.s32 %v1467, %v1473
      %vm1476 = vc.u32 %v1474, %v1470
      %v1477 = vsel %vm1476, 1, 0
      %v1478 = vadd.s32 %v1474, %v1470
      %v1479 = vadd.s32 %v1475, %v1477
      %v1480 = vadd.s32 %v1479, %v1469
      %v1481 = vadd.s32 %v1480, %v1471
      %v1482 = vand.u32 %v1459, 65535
      %v1483 = vshrl.u32 %v1459, 16
      %v1484 = vand.u32 %v1454, 65535
      %v1485 = vshrl.u32 %v1454, 16
      %v1486 = vmul.u32 %v1482, %v1484
      %v1487 = vmul.u32 %v1482, %v1485
      %v1488 = vmul.u32 %v1483, %v1484
      %v1489 = vmul.u32 %v1483, %v1485
      %v1490 = vshll.u32 %v1487, 16
      %v1491 = vshrl.u32 %v1487, 16
      %v1492 = vshll.u32 %v1488, 16
      %v1493 = vshrl.u32 %v1488, 16
      %vm1494 = vc.u32 %v1486, %v1490
      %v1495 = vsel %vm1494, 1, 0
      %v1496 = vadd.s32 %v1486, %v1490
      %v1497 = vadd.s32 %v1489, %v1495
      %vm1498 = vc.u32 %v1496, %v1492
      %v1499 = vsel %vm1498, 1, 0
      %v1500 = vadd.s32 %v1496, %v1492
      %v1501 = vadd.s32 %v1497, %v1499
      %v1502 = vadd.s32 %v1501, %v1491
      %v1503 = vadd.s32 %v1502, %v1493
      %v1504 = vmul.u32 %v1459, %v1450
      %v1505 = vadd.s32 %v1481, %v1500
      %vm1506 = vc.u32 %v1481, %v1500
      %v1507 = vadd.s32 %v1503, 1
      %v1508 = vsel %vm1506, %v1507, %v1503
      %v1509 = vadd.s32 %v1504, %v1508
      %v1510 = vadd.s32 %v1509, 536870912
      %v1511 = vshrl.u32 %v1510, 30
      %v1512 = vshll.u32 %v1511, 30
      %v1513 = vsub.s32 %v1509, %v1512
      %vm1514 = vcmp.lt.s32.totalorder %v1513, 0
      %v1515 = vsub.s32 0, %v1513
      %v1516 = vsel %vm1514, %v1515, %v1513
      %v1517 = vclz %v1516
      %v1518 = vsub.s32 %v1517, 2
      %vm1519 = vcmp.gt.s32.totalorder 0, %v1518
      %v1520 = vsel %vm1519, 0, %v1518
      %v1521 = vsub.s32 32, %v1520
      %v1522 = vshll.u32 %v1513, %v1520
      %v1523 = vshrl.u32 %v1505, %v1521
      %v1524 = vor.u32 %v1522, %v1523
      %v1525 = vsub.s32 4294967266, %v1520
      %v1526 = vadd.s32 %v1525, 127
      %v1527 = vshll.u32 %v1526, 23
      %v1528 = vor.u32 4788187, %v1527
      %v1529 = vand.u32 2147483647, %v1528
      %v1531 = vcvt.s32.f32 %v1524
      %v1532 = vmul.f32 %v1531, %v1529
      %v1533 = vxor.u32 %v1532, 2147483648
      %v1534 = vsel %vm1413, %v1533, %v1532
      %v1535 = vsub.s32 4, %v1511
      %v1536 = vsel %vm1413, %v1535, %v1511
      %v1537 = vsel %vm1412, %v328, %v1534
      %v1538 = vsel %vm1412, 0, %v1536
      %v1539 = vmul.f32 %v1537, %v1537
      %v1540 = vmul.f32 %v1539, -0.001358992
      %v1541 = vadd.f32 %v1540, 0.041655596
      %v1542 = vmul.f32 %v1539, %v1541
      %v1543 = vadd.f32 %v1542, -0.4999988
      %v1544 = vmul.f32 %v1539, %v1543
      %v1545 = vadd.f32 1.0, %v1544
      %v1546 = vmul.f32 %v1537, %v1537
      %v1547 = vmul.f32 %v1546, -0.00019511016
      %v1548 = vadd.f32 %v1547, 0.008332121
      %v1549 = vmul.f32 %v1546, %v1548
      %v1550 = vadd.f32 %v1549, -0.16666654
      %v1551 = vmul.f32 %v1546, %v1550
      %v1552 = vadd.f32 %v1551, 1.0
      %v1553 = vmul.f32 %v1552, %v1537
      %vm1554 = vweird.f32 %v328
      %v1555 = vand.u32 %v1538, 3
      %vm1556 = vcmp.lt.s32.totalorder %v1555, 2
      %vm1557 = vcmp.eq.s32.totalorder %v1555, 0
      %v1558 = vxor.u32 %v1553, 2147483648
      %v1559 = vsel %vm1557, %v1545, %v1558
      %vm1560 = vcmp.eq.s32.totalorder %v1555, 2
      %v1561 = vxor.u32 %v1545, 2147483648
      %v1562 = vsel %vm1560, %v1561, %v1553
      %v1563 = vsel %vm1556, %v1559, %v1562
      %v1564 = vsel %vm1554, nan, %v1563
      %v1565 = vand.u32 2147483647, %v321
      %vm1566 = vcmp.le.f32.partialorder %v1565, 0.7853982
      %vm1567 = vcmp.lt.s32.totalorder %v321, 0
      %v1568 = vand.u32 %v321, 2139095040
      %v1569 = vshrl.u32 %v1568, 23
      %v1570 = vsub.s32 %v1569, 127
      %v1571 = vand.u32 2147483647, %v321
      %v1572 = vand.u32 %v1571, 8388607
      %v1573 = vor.u32 %v1572, 8388608
      %v1574 = vsub.s32 0, %v1573
      %v1575 = vadd.s32 %v1570, 1
      %vm1576 = vcmp.gt.s32.totalorder %v1575, 0
      %v1577 = vsel %vm1576, %v1575, 0
      %v1578 = vshrl.u32 %v1577, 5
      %v1579 = vand.u32 %v1577, 31
      %v1580 = vsub.s32 32, %v1579
      %v1581 = vshrl.u32 683565275, %v1580
      %v1582 = vshll.u32 683565275, %v1579
      %v1583 = vshrl.u32 2475754826, %v1580
      %v1584 = vor.u32 %v1582, %v1583
      %v1585 = vshll.u32 2475754826, %v1579
      %v1586 = vshrl.u32 2131351028, %v1580
      %v1587 = vor.u32 %v1585, %v1586
      %v1588 = vshll.u32 2131351028, %v1579
      %v1589 = vshrl.u32 2102212464, %v1580
      %v1590 = vor.u32 %v1588, %v1589
      %v1591 = vshll.u32 2102212464, %v1579
      %v1592 = vshrl.u32 920167782, %v1580
      %v1593 = vor.u32 %v1591, %v1592
      %v1594 = vshll.u32 920167782, %v1579
      %v1595 = vshrl.u32 1326507024, %v1580
      %v1596 = vor.u32 %v1594, %v1595
      %vm1597 = vcmp.lt.s32.totalorder %v1578, 1
      %vm1598 = vcmp.lt.s32.totalorder %v1578, 2
      %vm1599 = vcmp.lt.s32.totalorder %v1578, 3
      %vm1600 = vcmp.lt.s32.totalorder %v1578, 4
      %v1601 = vsel %vm1597, %v1581, %v1584
      %v1602 = vsel %vm1600, %v1590, 2102212464
      %v1603 = vsel %vm1599, %v1587, %v1602
      %v1604 = vsel %vm1598, %v1601, %v1603
      %v1605 = vsel %vm1597, %v1584, %v1587
      %v1606 = vsel %vm1600, %v1593, 920167782
      %v1607 = vsel %vm1599, %v1590, %v1606
      %v1608 = vsel %vm1598, %v1605, %v1607
      %v1609 = vsel %vm1597, %v1587, %v1590
      %v1610 = vsel %vm1600, %v1596, 1326507024
      %v1611 = vsel %vm1599, %v1593, %v1610
      %v1612 = vsel %vm1598, %v1609, %v1611
      %v1613 = vshll.u32 %v1573, 8
      %v1614 = vand.u32 %v1613, 65535
      %v1615 = vshrl.u32 %v1613, 16
      %v1616 = vand.u32 %v1612, 65535
      %v1617 = vshrl.u32 %v1612, 16
      %v1618 = vmul.u32 %v1614, %v1616
      %v1619 = vmul.u32 %v1614, %v1617
      %v1620 = vmul.u32 %v1615, %v1616
      %v1621 = vmul.u32 %v1615, %v1617
      %v1622 = vshll.u32 %v1619, 16
      %v1623 = vshrl.u32 %v1619, 16
      %v1624 = vshll.u32 %v1620, 16
      %v1625 = vshrl.u32 %v1620, 16
      %vm1626 = vc.u32 %v1618, %v1622
      %v1627 = vsel %vm1626, 1, 0
      %v1628 = vadd.s32 %v1618, %v1622
      %v1629 = vadd.s32 %v1621, %v1627
      %vm1630 = vc.u32 %v1628, %v1624
      %v1631 = vsel %vm1630, 1, 0
      %v1632 = vadd.s32 %v1628, %v1624
      %v1633 = vadd.s32 %v1629, %v1631
      %v1634 = vadd.s32 %v1633, %v1623
      %v1635 = vadd.s32 %v1634, %v1625
      %v1636 = vand.u32 %v1613, 65535
      %v1637 = vshrl.u32 %v1613, 16
      %v1638 = vand.u32 %v1608, 65535
      %v1639 = vshrl.u32 %v1608, 16
      %v1640 = vmul.u32 %v1636, %v1638
      %v1641 = vmul.u32 %v1636, %v1639
      %v1642 = vmul.u32 %v1637, %v1638
      %v1643 = vmul.u32 %v1637, %v1639
      %v1644 = vshll.u32 %v1641, 16
      %v1645 = vshrl.u32 %v1641, 16
      %v1646 = vshll.u32 %v1642, 16
      %v1647 = vshrl.u32 %v1642, 16
      %vm1648 = vc.u32 %v1640, %v1644
      %v1649 = vsel %vm1648, 1, 0
      %v1650 = vadd.s32 %v1640, %v1644
      %v1651 = vadd.s32 %v1643, %v1649
      %vm1652 = vc.u32 %v1650, %v1646
      %v1653 = vsel %vm1652, 1, 0
      %v1654 = vadd.s32 %v1650, %v1646
      %v1655 = vadd.s32 %v1651, %v1653
      %v1656 = vadd.s32 %v1655, %v1645
      %v1657 = vadd.s32 %v1656, %v1647
      %v1658 = vmul.u32 %v1613, %v1604
      %v1659 = vadd.s32 %v1635, %v1654
      %vm1660 = vc.u32 %v1635, %v1654
      %v1661 = vadd.s32 %v1657, 1
      %v1662 = vsel %vm1660, %v1661, %v1657
      %v1663 = vadd.s32 %v1658, %v1662
      %v1664 = vadd.s32 %v1663, 536870912
      %v1665 = vshrl.u32 %v1664, 30
      %v1666 = vshll.u32 %v1665, 30
      %v1667 = vsub.s32 %v1663, %v1666
      %vm1668 = vcmp.lt.s32.totalorder %v1667, 0
      %v1669 = vsub.s32 0, %v1667
      %v1670 = vsel %vm1668, %v1669, %v1667
      %v1671 = vclz %v1670
      %v1672 = vsub.s32 %v1671, 2
      %vm1673 = vcmp.gt.s32.totalorder 0, %v1672
      %v1674 = vsel %vm1673, 0, %v1672
      %v1675 = vsub.s32 32, %v1674
      %v1676 = vshll.u32 %v1667, %v1674
      %v1677 = vshrl.u32 %v1659, %v1675
      %v1678 = vor.u32 %v1676, %v1677
      %v1679 = vsub.s32 4294967266, %v1674
      %v1680 = vadd.s32 %v1679, 127
      %v1681 = vshll.u32 %v1680, 23
      %v1682 = vor.u32 4788187, %v1681
      %v1683 = vand.u32 2147483647, %v1682
      %v1685 = vcvt.s32.f32 %v1678
      %v1686 = vmul.f32 %v1685, %v1683
      %v1687 = vxor.u32 %v1686, 2147483648
      %v1688 = vsel %vm1567, %v1687, %v1686
      %v1689 = vsub.s32 4, %v1665
      %v1690 = vsel %vm1567, %v1689, %v1665
      %v1691 = vsel %vm1566, %v321, %v1688
      %v1692 = vsel %vm1566, 0, %v1690
      %v1693 = vmul.f32 %v1691, %v1691
      %v1694 = vmul.f32 %v1693, -0.001358992
      %v1695 = vadd.f32 %v1694, 0.041655596
      %v1696 = vmul.f32 %v1693, %v1695
      %v1697 = vadd.f32 %v1696, -0.4999988
      %v1698 = vmul.f32 %v1693, %v1697
      %v1699 = vadd.f32 1.0, %v1698
      %v1700 = vmul.f32 %v1691, %v1691
      %v1701 = vmul.f32 %v1700, -0.00019511016
      %v1702 = vadd.f32 %v1701, 0.008332121
      %v1703 = vmul.f32 %v1700, %v1702
      %v1704 = vadd.f32 %v1703, -0.16666654
      %v1705 = vmul.f32 %v1700, %v1704
      %v1706 = vadd.f32 %v1705, 1.0
      %v1707 = vmul.f32 %v1706, %v1691
      %vm1708 = vweird.f32 %v321
      %v1709 = vand.u32 %v1692, 3
      %vm1710 = vcmp.lt.s32.totalorder %v1709, 2
      %vm1711 = vcmp.eq.s32.totalorder %v1709, 0
      %v1712 = vxor.u32 %v1707, 2147483648
      %v1713 = vsel %vm1711, %v1699, %v1712
      %vm1714 = vcmp.eq.s32.totalorder %v1709, 2
      %v1715 = vxor.u32 %v1699, 2147483648
      %v1716 = vsel %vm1714, %v1715, %v1707
      %v1717 = vsel %vm1710, %v1713, %v1716
      %v1718 = vsel %vm1708, nan, %v1717
      %v1719 = vand.u32 2147483647, %v322
      %vm1720 = vcmp.le.f32.partialorder %v1719, 0.7853982
      %vm1721 = vcmp.lt.s32.totalorder %v322, 0
      %v1722 = vand.u32 %v322, 2139095040
      %v1723 = vshrl.u32 %v1722, 23
      %v1724 = vsub.s32 %v1723, 127
      %v1725 = vand.u32 2147483647, %v322
      %v1726 = vand.u32 %v1725, 8388607
      %v1727 = vor.u32 %v1726, 8388608
      %v1728 = vsub.s32 0, %v1727
      %v1729 = vadd.s32 %v1724, 1
      %vm1730 = vcmp.gt.s32.totalorder %v1729, 0
      %v1731 = vsel %vm1730, %v1729, 0
      %v1732 = vshrl.u32 %v1731, 5
      %v1733 = vand.u32 %v1731, 31
      %v1734 = vsub.s32 32, %v1733
      %v1735 = vshrl.u32 683565275, %v1734
      %v1736 = vshll.u32 683565275, %v1733
      %v1737 = vshrl.u32 2475754826, %v1734
      %v1738 = vor.u32 %v1736, %v1737
      %v1739 = vshll.u32 2475754826, %v1733
      %v1740 = vshrl.u32 2131351028, %v1734
      %v1741 = vor.u32 %v1739, %v1740
      %v1742 = vshll.u32 2131351028, %v1733
      %v1743 = vshrl.u32 2102212464, %v1734
      %v1744 = vor.u32 %v1742, %v1743
      %v1745 = vshll.u32 2102212464, %v1733
      %v1746 = vshrl.u32 920167782, %v1734
      %v1747 = vor.u32 %v1745, %v1746
      %v1748 = vshll.u32 920167782, %v1733
      %v1749 = vshrl.u32 1326507024, %v1734
      %v1750 = vor.u32 %v1748, %v1749
      %vm1751 = vcmp.lt.s32.totalorder %v1732, 1
      %vm1752 = vcmp.lt.s32.totalorder %v1732, 2
      %vm1753 = vcmp.lt.s32.totalorder %v1732, 3
      %vm1754 = vcmp.lt.s32.totalorder %v1732, 4
      %v1755 = vsel %vm1751, %v1735, %v1738
      %v1756 = vsel %vm1754, %v1744, 2102212464
      %v1757 = vsel %vm1753, %v1741, %v1756
      %v1758 = vsel %vm1752, %v1755, %v1757
      %v1759 = vsel %vm1751, %v1738, %v1741
      %v1760 = vsel %vm1754, %v1747, 920167782
      %v1761 = vsel %vm1753, %v1744, %v1760
      %v1762 = vsel %vm1752, %v1759, %v1761
      %v1763 = vsel %vm1751, %v1741, %v1744
      %v1764 = vsel %vm1754, %v1750, 1326507024
      %v1765 = vsel %vm1753, %v1747, %v1764
      %v1766 = vsel %vm1752, %v1763, %v1765
      %v1767 = vshll.u32 %v1727, 8
      %v1768 = vand.u32 %v1767, 65535
      %v1769 = vshrl.u32 %v1767, 16
      %v1770 = vand.u32 %v1766, 65535
      %v1771 = vshrl.u32 %v1766, 16
      %v1772 = vmul.u32 %v1768, %v1770
      %v1773 = vmul.u32 %v1768, %v1771
      %v1774 = vmul.u32 %v1769, %v1770
      %v1775 = vmul.u32 %v1769, %v1771
      %v1776 = vshll.u32 %v1773, 16
      %v1777 = vshrl.u32 %v1773, 16
      %v1778 = vshll.u32 %v1774, 16
      %v1779 = vshrl.u32 %v1774, 16
      %vm1780 = vc.u32 %v1772, %v1776
      %v1781 = vsel %vm1780, 1, 0
      %v1782 = vadd.s32 %v1772, %v1776
      %v1783 = vadd.s32 %v1775, %v1781
      %vm1784 = vc.u32 %v1782, %v1778
      %v1785 = vsel %vm1784, 1, 0
      %v1786 = vadd.s32 %v1782, %v1778
      %v1787 = vadd.s32 %v1783, %v1785
      %v1788 = vadd.s32 %v1787, %v1777
      %v1789 = vadd.s32 %v1788, %v1779
      %v1790 = vand.u32 %v1767, 65535
      %v1791 = vshrl.u32 %v1767, 16
      %v1792 = vand.u32 %v1762, 65535
      %v1793 = vshrl.u32 %v1762, 16
      %v1794 = vmul.u32 %v1790, %v1792
      %v1795 = vmul.u32 %v1790, %v1793
      %v1796 = vmul.u32 %v1791, %v1792
      %v1797 = vmul.u32 %v1791, %v1793
      %v1798 = vshll.u32 %v1795, 16
      %v1799 = vshrl.u32 %v1795, 16
      %v1800 = vshll.u32 %v1796, 16
      %v1801 = vshrl.u32 %v1796, 16
      %vm1802 = vc.u32 %v1794, %v1798
      %v1803 = vsel %vm1802, 1, 0
      %v1804 = vadd.s32 %v1794, %v1798
      %v1805 = vadd.s32 %v1797, %v1803
      %vm1806 = vc.u32 %v1804, %v1800
      %v1807 = vsel %vm1806, 1, 0
      %v1808 = vadd.s32 %v1804, %v1800
      %v1809 = vadd.s32 %v1805, %v1807
      %v1810 = vadd.s32 %v1809, %v1799
      %v1811 = vadd.s32 %v1810, %v1801
      %v1812 = vmul.u32 %v1767, %v1758
      %v1813 = vadd.s32 %v1789, %v1808
      %vm1814 = vc.u32 %v1789, %v1808
      %v1815 = vadd.s32 %v1811, 1
      %v1816 = vsel %vm1814, %v1815, %v1811
      %v1817 = vadd.s32 %v1812, %v1816
      %v1818 = vadd.s32 %v1817, 536870912
      %v1819 = vshrl.u32 %v1818, 30
      %v1820 = vshll.u32 %v1819, 30
      %v1821 = vsub.s32 %v1817, %v1820
      %vm1822 = vcmp.lt.s32.totalorder %v1821, 0
      %v1823 = vsub.s32 0, %v1821
      %v1824 = vsel %vm1822, %v1823, %v1821
      %v1825 = vclz %v1824
      %v1826 = vsub.s32 %v1825, 2
      %vm1827 = vcmp.gt.s32.totalorder 0, %v1826
      %v1828 = vsel %vm1827, 0, %v1826
      %v1829 = vsub.s32 32, %v1828
      %v1830 = vshll.u32 %v1821, %v1828
      %v1831 = vshrl.u32 %v1813, %v1829
      %v1832 = vor.u32 %v1830, %v1831
      %v1833 = vsub.s32 4294967266, %v1828
      %v1834 = vadd.s32 %v1833, 127
      %v1835 = vshll.u32 %v1834, 23
      %v1836 = vor.u32 4788187, %v1835
      %v1837 = vand.u32 2147483647, %v1836
      %v1839 = vcvt.s32.f32 %v1832
      %v1840 = vmul.f32 %v1839, %v1837
      %v1841 = vxor.u32 %v1840, 2147483648
      %v1842 = vsel %vm1721, %v1841, %v1840
      %v1843 = vsub.s32 4, %v1819
      %v1844 = vsel %vm1721, %v1843, %v1819
      %v1845 = vsel %vm1720, %v322, %v1842
      %v1846 = vsel %vm1720, 0, %v1844
      %v1847 = vmul.f32 %v1845, %v1845
      %v1848 = vmul.f32 %v1847, -0.001358992
      %v1849 = vadd.f32 %v1848, 0.041655596
      %v1850 = vmul.f32 %v1847, %v1849
      %v1851 = vadd.f32 %v1850, -0.4999988
      %v1852 = vmul.f32 %v1847, %v1851
      %v1853 = vadd.f32 1.0, %v1852
      %v1854 = vmul.f32 %v1845, %v1845
      %v1855 = vmul.f32 %v1854, -0.00019511016
      %v1856 = vadd.f32 %v1855, 0.008332121
      %v1857 = vmul.f32 %v1854, %v1856
      %v1858 = vadd.f32 %v1857, -0.16666654
      %v1859 = vmul.f32 %v1854, %v1858
      %v1860 = vadd.f32 %v1859, 1.0
      %v1861 = vmul.f32 %v1860, %v1845
      %vm1862 = vweird.f32 %v322
      %v1863 = vand.u32 %v1846, 3
      %vm1864 = vcmp.lt.s32.totalorder %v1863, 2
      %vm1865 = vcmp.eq.s32.totalorder %v1863, 0
      %v1866 = vxor.u32 %v1861, 2147483648
      %v1867 = vsel %vm1865, %v1853, %v1866
      %vm1868 = vcmp.eq.s32.totalorder %v1863, 2
      %v1869 = vxor.u32 %v1853, 2147483648
      %v1870 = vsel %vm1868, %v1869, %v1861
      %v1871 = vsel %vm1864, %v1867, %v1870
      %v1872 = vsel %vm1862, nan, %v1871
      %v1873 = vand.u32 2147483647, %v329
      %vm1874 = vcmp.le.f32.partialorder %v1873, 0.7853982
      %vm1875 = vcmp.lt.s32.totalorder %v329, 0
      %v1876 = vand.u32 %v329, 2139095040
      %v1877 = vshrl.u32 %v1876, 23
      %v1878 = vsub.s32 %v1877, 127
      %v1879 = vand.u32 2147483647, %v329
      %v1880 = vand.u32 %v1879, 8388607
      %v1881 = vor.u32 %v1880, 8388608
      %v1882 = vsub.s32 0, %v1881
      %v1883 = vadd.s32 %v1878, 1
      %vm1884 = vcmp.gt.s32.totalorder %v1883, 0
      %v1885 = vsel %vm1884, %v1883, 0
      %v1886 = vshrl.u32 %v1885, 5
      %v1887 = vand.u32 %v1885, 31
      %v1888 = vsub.s32 32, %v1887
      %v1889 = vshrl.u32 683565275, %v1888
      %v1890 = vshll.u32 683565275, %v1887
      %v1891 = vshrl.u32 2475754826, %v1888
      %v1892 = vor.u32 %v1890, %v1891
      %v1893 = vshll.u32 2475754826, %v1887
      %v1894 = vshrl.u32 2131351028, %v1888
      %v1895 = vor.u32 %v1893, %v1894
      %v1896 = vshll.u32 2131351028, %v1887
      %v1897 = vshrl.u32 2102212464, %v1888
      %v1898 = vor.u32 %v1896, %v1897
      %v1899 = vshll.u32 2102212464, %v1887
      %v1900 = vshrl.u32 920167782, %v1888
      %v1901 = vor.u32 %v1899, %v1900
      %v1902 = vshll.u32 920167782, %v1887
      %v1903 = vshrl.u32 1326507024, %v1888
      %v1904 = vor.u32 %v1902, %v1903
      %vm1905 = vcmp.lt.s32.totalorder %v1886, 1
      %vm1906 = vcmp.lt.s32.totalorder %v1886, 2
      %vm1907 = vcmp.lt.s32.totalorder %v1886, 3
      %vm1908 = vcmp.lt.s32.totalorder %v1886, 4
      %v1909 = vsel %vm1905, %v1889, %v1892
      %v1910 = vsel %vm1908, %v1898, 2102212464
      %v1911 = vsel %vm1907, %v1895, %v1910
      %v1912 = vsel %vm1906, %v1909, %v1911
      %v1913 = vsel %vm1905, %v1892, %v1895
      %v1914 = vsel %vm1908, %v1901, 920167782
      %v1915 = vsel %vm1907, %v1898, %v1914
      %v1916 = vsel %vm1906, %v1913, %v1915
      %v1917 = vsel %vm1905, %v1895, %v1898
      %v1918 = vsel %vm1908, %v1904, 1326507024
      %v1919 = vsel %vm1907, %v1901, %v1918
      %v1920 = vsel %vm1906, %v1917, %v1919
      %v1921 = vshll.u32 %v1881, 8
      %v1922 = vand.u32 %v1921, 65535
      %v1923 = vshrl.u32 %v1921, 16
      %v1924 = vand.u32 %v1920, 65535
      %v1925 = vshrl.u32 %v1920, 16
      %v1926 = vmul.u32 %v1922, %v1924
      %v1927 = vmul.u32 %v1922, %v1925
      %v1928 = vmul.u32 %v1923, %v1924
      %v1929 = vmul.u32 %v1923, %v1925
      %v1930 = vshll.u32 %v1927, 16
      %v1931 = vshrl.u32 %v1927, 16
      %v1932 = vshll.u32 %v1928, 16
      %v1933 = vshrl.u32 %v1928, 16
      %vm1934 = vc.u32 %v1926, %v1930
      %v1935 = vsel %vm1934, 1, 0
      %v1936 = vadd.s32 %v1926, %v1930
      %v1937 = vadd.s32 %v1929, %v1935
      %vm1938 = vc.u32 %v1936, %v1932
      %v1939 = vsel %vm1938, 1, 0
      %v1940 = vadd.s32 %v1936, %v1932
      %v1941 = vadd.s32 %v1937, %v1939
      %v1942 = vadd.s32 %v1941, %v1931
      %v1943 = vadd.s32 %v1942, %v1933
      %v1944 = vand.u32 %v1921, 65535
      %v1945 = vshrl.u32 %v1921, 16
      %v1946 = vand.u32 %v1916, 65535
      %v1947 = vshrl.u32 %v1916, 16
      %v1948 = vmul.u32 %v1944, %v1946
      %v1949 = vmul.u32 %v1944, %v1947
      %v1950 = vmul.u32 %v1945, %v1946
      %v1951 = vmul.u32 %v1945, %v1947
      %v1952 = vshll.u32 %v1949, 16
      %v1953 = vshrl.u32 %v1949, 16
      %v1954 = vshll.u32 %v1950, 16
      %v1955 = vshrl.u32 %v1950, 16
      %vm1956 = vc.u32 %v1948, %v1952
      %v1957 = vsel %vm1956, 1, 0
      %v1958 = vadd.s32 %v1948, %v1952
      %v1959 = vadd.s32 %v1951, %v1957
      %vm1960 = vc.u32 %v1958, %v1954
      %v1961 = vsel %vm1960, 1, 0
      %v1962 = vadd.s32 %v1958, %v1954
      %v1963 = vadd.s32 %v1959, %v1961
      %v1964 = vadd.s32 %v1963, %v1953
      %v1965 = vadd.s32 %v1964, %v1955
      %v1966 = vmul.u32 %v1921, %v1912
      %v1967 = vadd.s32 %v1943, %v1962
      %vm1968 = vc.u32 %v1943, %v1962
      %v1969 = vadd.s32 %v1965, 1
      %v1970 = vsel %vm1968, %v1969, %v1965
      %v1971 = vadd.s32 %v1966, %v1970
      %v1972 = vadd.s32 %v1971, 536870912
      %v1973 = vshrl.u32 %v1972, 30
      %v1974 = vshll.u32 %v1973, 30
      %v1975 = vsub.s32 %v1971, %v1974
      %vm1976 = vcmp.lt.s32.totalorder %v1975, 0
      %v1977 = vsub.s32 0, %v1975
      %v1978 = vsel %vm1976, %v1977, %v1975
      %v1979 = vclz %v1978
      %v1980 = vsub.s32 %v1979, 2
      %vm1981 = vcmp.gt.s32.totalorder 0, %v1980
      %v1982 = vsel %vm1981, 0, %v1980
      %v1983 = vsub.s32 32, %v1982
      %v1984 = vshll.u32 %v1975, %v1982
      %v1985 = vshrl.u32 %v1967, %v1983
      %v1986 = vor.u32 %v1984, %v1985
      %v1987 = vsub.s32 4294967266, %v1982
      %v1988 = vadd.s32 %v1987, 127
      %v1989 = vshll.u32 %v1988, 23
      %v1990 = vor.u32 4788187, %v1989
      %v1991 = vand.u32 2147483647, %v1990
      %v1993 = vcvt.s32.f32 %v1986
      %v1994 = vmul.f32 %v1993, %v1991
      %v1995 = vxor.u32 %v1994, 2147483648
      %v1996 = vsel %vm1875, %v1995, %v1994
      %v1997 = vsub.s32 4, %v1973
      %v1998 = vsel %vm1875, %v1997, %v1973
      %v1999 = vsel %vm1874, %v329, %v1996
      %v2000 = vsel %vm1874, 0, %v1998
      %v2001 = vmul.f32 %v1999, %v1999
      %v2002 = vmul.f32 %v2001, -0.001358992
      %v2003 = vadd.f32 %v2002, 0.041655596
      %v2004 = vmul.f32 %v2001, %v2003
      %v2005 = vadd.f32 %v2004, -0.4999988
      %v2006 = vmul.f32 %v2001, %v2005
      %v2007 = vadd.f32 1.0, %v2006
      %v2008 = vmul.f32 %v1999, %v1999
      %v2009 = vmul.f32 %v2008, -0.00019511016
      %v2010 = vadd.f32 %v2009, 0.008332121
      %v2011 = vmul.f32 %v2008, %v2010
      %v2012 = vadd.f32 %v2011, -0.16666654
      %v2013 = vmul.f32 %v2008, %v2012
      %v2014 = vadd.f32 %v2013, 1.0
      %v2015 = vmul.f32 %v2014, %v1999
      %vm2016 = vweird.f32 %v329
      %v2017 = vand.u32 %v2000, 3
      %vm2018 = vcmp.lt.s32.totalorder %v2017, 2
      %vm2019 = vcmp.eq.s32.totalorder %v2017, 0
      %v2020 = vxor.u32 %v2015, 2147483648
      %v2021 = vsel %vm2019, %v2007, %v2020
      %vm2022 = vcmp.eq.s32.totalorder %v2017, 2
      %v2023 = vxor.u32 %v2007, 2147483648
      %v2024 = vsel %vm2022, %v2023, %v2015
      %v2025 = vsel %vm2018, %v2021, %v2024
      %v2026 = vsel %vm2016, nan, %v2025
      %v2027 = vand.u32 2147483647, %v330
      %vm2028 = vcmp.le.f32.partialorder %v2027, 0.7853982
      %vm2029 = vcmp.lt.s32.totalorder %v330, 0
      %v2030 = vand.u32 %v330, 2139095040
      %v2031 = vshrl.u32 %v2030, 23
      %v2032 = vsub.s32 %v2031, 127
      %v2033 = vand.u32 2147483647, %v330
      %v2034 = vand.u32 %v2033, 8388607
      %v2035 = vor.u32 %v2034, 8388608
      %v2036 = vsub.s32 0, %v2035
      %v2037 = vadd.s32 %v2032, 1
      %vm2038 = vcmp.gt.s32.totalorder %v2037, 0
      %v2039 = vsel %vm2038, %v2037, 0
      %v2040 = vshrl.u32 %v2039, 5
      %v2041 = vand.u32 %v2039, 31
      %v2042 = vsub.s32 32, %v2041
      %v2043 = vshrl.u32 683565275, %v2042
      %v2044 = vshll.u32 683565275, %v2041
      %v2045 = vshrl.u32 2475754826, %v2042
      %v2046 = vor.u32 %v2044, %v2045
      %v2047 = vshll.u32 2475754826, %v2041
      %v2048 = vshrl.u32 2131351028, %v2042
      %v2049 = vor.u32 %v2047, %v2048
      %v2050 = vshll.u32 2131351028, %v2041
      %v2051 = vshrl.u32 2102212464, %v2042
      %v2052 = vor.u32 %v2050, %v2051
      %v2053 = vshll.u32 2102212464, %v2041
      %v2054 = vshrl.u32 920167782, %v2042
      %v2055 = vor.u32 %v2053, %v2054
      %v2056 = vshll.u32 920167782, %v2041
      %v2057 = vshrl.u32 1326507024, %v2042
      %v2058 = vor.u32 %v2056, %v2057
      %vm2059 = vcmp.lt.s32.totalorder %v2040, 1
      %vm2060 = vcmp.lt.s32.totalorder %v2040, 2
      %vm2061 = vcmp.lt.s32.totalorder %v2040, 3
      %vm2062 = vcmp.lt.s32.totalorder %v2040, 4
      %v2063 = vsel %vm2059, %v2043, %v2046
      %v2064 = vsel %vm2062, %v2052, 2102212464
      %v2065 = vsel %vm2061, %v2049, %v2064
      %v2066 = vsel %vm2060, %v2063, %v2065
      %v2067 = vsel %vm2059, %v2046, %v2049
      %v2068 = vsel %vm2062, %v2055, 920167782
      %v2069 = vsel %vm2061, %v2052, %v2068
      %v2070 = vsel %vm2060, %v2067, %v2069
      %v2071 = vsel %vm2059, %v2049, %v2052
      %v2072 = vsel %vm2062, %v2058, 1326507024
      %v2073 = vsel %vm2061, %v2055, %v2072
      %v2074 = vsel %vm2060, %v2071, %v2073
      %v2075 = vshll.u32 %v2035, 8
      %v2076 = vand.u32 %v2075, 65535
      %v2077 = vshrl.u32 %v2075, 16
      %v2078 = vand.u32 %v2074, 65535
      %v2079 = vshrl.u32 %v2074, 16
      %v2080 = vmul.u32 %v2076, %v2078
      %v2081 = vmul.u32 %v2076, %v2079
      %v2082 = vmul.u32 %v2077, %v2078
      %v2083 = vmul.u32 %v2077, %v2079
      %v2084 = vshll.u32 %v2081, 16
      %v2085 = vshrl.u32 %v2081, 16
      %v2086 = vshll.u32 %v2082, 16
      %v2087 = vshrl.u32 %v2082, 16
      %vm2088 = vc.u32 %v2080, %v2084
      %v2089 = vsel %vm2088, 1, 0
      %v2090 = vadd.s32 %v2080, %v2084
      %v2091 = vadd.s32 %v2083, %v2089
      %vm2092 = vc.u32 %v2090, %v2086
      %v2093 = vsel %vm2092, 1, 0
      %v2094 = vadd.s32 %v2090, %v2086
      %v2095 = vadd.s32 %v2091, %v2093
      %v2096 = vadd.s32 %v2095, %v2085
      %v2097 = vadd.s32 %v2096, %v2087
      %v2098 = vand.u32 %v2075, 65535
      %v2099 = vshrl.u32 %v2075, 16
      %v2100 = vand.u32 %v2070, 65535
      %v2101 = vshrl.u32 %v2070, 16
      %v2102 = vmul.u32 %v2098, %v2100
      %v2103 = vmul.u32 %v2098, %v2101
      %v2104 = vmul.u32 %v2099, %v2100
      %v2105 = vmul.u32 %v2099, %v2101
      %v2106 = vshll.u32 %v2103, 16
      %v2107 = vshrl.u32 %v2103, 16
      %v2108 = vshll.u32 %v2104, 16
      %v2109 = vshrl.u32 %v2104, 16
      %vm2110 = vc.u32 %v2102, %v2106
      %v2111 = vsel %vm2110, 1, 0
      %v2112 = vadd.s32 %v2102, %v2106
      %v2113 = vadd.s32 %v2105, %v2111
      %vm2114 = vc.u32 %v2112, %v2108
      %v2115 = vsel %vm2114, 1, 0
      %v2116 = vadd.s32 %v2112, %v2108
      %v2117 = vadd.s32 %v2113, %v2115
      %v2118 = vadd.s32 %v2117, %v2107
      %v2119 = vadd.s32 %v2118, %v2109
      %v2120 = vmul.u32 %v2075, %v2066
      %v2121 = vadd.s32 %v2097, %v2116
      %vm2122 = vc.u32 %v2097, %v2116
      %v2123 = vadd.s32 %v2119, 1
      %v2124 = vsel %vm2122, %v2123, %v2119
      %v2125 = vadd.s32 %v2120, %v2124
      %v2126 = vadd.s32 %v2125, 536870912
      %v2127 = vshrl.u32 %v2126, 30
      %v2128 = vshll.u32 %v2127, 30
      %v2129 = vsub.s32 %v2125, %v2128
      %vm2130 = vcmp.lt.s32.totalorder %v2129, 0
      %v2131 = vsub.s32 0, %v2129
      %v2132 = vsel %vm2130, %v2131, %v2129
      %v2133 = vclz %v2132
      %v2134 = vsub.s32 %v2133, 2
      %vm2135 = vcmp.gt.s32.totalorder 0, %v2134
      %v2136 = vsel %vm2135, 0, %v2134
      %v2137 = vsub.s32 32, %v2136
      %v2138 = vshll.u32 %v2129, %v2136
      %v2139 = vshrl.u32 %v2121, %v2137
      %v2140 = vor.u32 %v2138, %v2139
      %v2141 = vsub.s32 4294967266, %v2136
      %v2142 = vadd.s32 %v2141, 127
      %v2143 = vshll.u32 %v2142, 23
      %v2144 = vor.u32 4788187, %v2143
      %v2145 = vand.u32 2147483647, %v2144
      %v2147 = vcvt.s32.f32 %v2140
      %v2148 = vmul.f32 %v2147, %v2145
      %v2149 = vxor.u32 %v2148, 2147483648
      %v2150 = vsel %vm2029, %v2149, %v2148
      %v2151 = vsub.s32 4, %v2127
      %v2152 = vsel %vm2029, %v2151, %v2127
      %v2153 = vsel %vm2028, %v330, %v2150
      %v2154 = vsel %vm2028, 0, %v2152
      %v2155 = vmul.f32 %v2153, %v2153
      %v2156 = vmul.f32 %v2155, -0.001358992
      %v2157 = vadd.f32 %v2156, 0.041655596
      %v2158 = vmul.f32 %v2155, %v2157
      %v2159 = vadd.f32 %v2158, -0.4999988
      %v2160 = vmul.f32 %v2155, %v2159
      %v2161 = vadd.f32 1.0, %v2160
      %v2162 = vmul.f32 %v2153, %v2153
      %v2163 = vmul.f32 %v2162, -0.00019511016
      %v2164 = vadd.f32 %v2163, 0.008332121
      %v2165 = vmul.f32 %v2162, %v2164
      %v2166 = vadd.f32 %v2165, -0.16666654
      %v2167 = vmul.f32 %v2162, %v2166
      %v2168 = vadd.f32 %v2167, 1.0
      %v2169 = vmul.f32 %v2168, %v2153
      %vm2170 = vweird.f32 %v330
      %v2171 = vand.u32 %v2154, 3
      %vm2172 = vcmp.lt.s32.totalorder %v2171, 2
      %vm2173 = vcmp.eq.s32.totalorder %v2171, 0
      %v2174 = vxor.u32 %v2169, 2147483648
      %v2175 = vsel %vm2173, %v2161, %v2174
      %vm2176 = vcmp.eq.s32.totalorder %v2171, 2
      %v2177 = vxor.u32 %v2161, 2147483648
      %v2178 = vsel %vm2176, %v2177, %v2169
      %v2179 = vsel %vm2172, %v2175, %v2178
      %v2180 = vsel %vm2170, nan, %v2179
      %v2181 = vand.u32 2147483647, %v323
      %vm2182 = vcmp.le.f32.partialorder %v2181, 0.7853982
      %vm2183 = vcmp.lt.s32.totalorder %v323, 0
      %v2184 = vand.u32 %v323, 2139095040
      %v2185 = vshrl.u32 %v2184, 23
      %v2186 = vsub.s32 %v2185, 127
      %v2187 = vand.u32 2147483647, %v323
      %v2188 = vand.u32 %v2187, 8388607
      %v2189 = vor.u32 %v2188, 8388608
      %v2190 = vsub.s32 0, %v2189
      %v2191 = vadd.s32 %v2186, 1
      %vm2192 = vcmp.gt.s32.totalorder %v2191, 0
      %v2193 = vsel %vm2192, %v2191, 0
      %v2194 = vshrl.u32 %v2193, 5
      %v2195 = vand.u32 %v2193, 31
      %v2196 = vsub.s32 32, %v2195
      %v2197 = vshrl.u32 683565275, %v2196
      %v2198 = vshll.u32 683565275, %v2195
      %v2199 = vshrl.u32 2475754826, %v2196
      %v2200 = vor.u32 %v2198, %v2199
      %v2201 = vshll.u32 2475754826, %v2195
      %v2202 = vshrl.u32 2131351028, %v2196
      %v2203 = vor.u32 %v2201, %v2202
      %v2204 = vshll.u32 2131351028, %v2195
      %v2205 = vshrl.u32 2102212464, %v2196
      %v2206 = vor.u32 %v2204, %v2205
      %v2207 = vshll.u32 2102212464, %v2195
      %v2208 = vshrl.u32 920167782, %v2196
      %v2209 = vor.u32 %v2207, %v2208
      %v2210 = vshll.u32 920167782, %v2195
      %v2211 = vshrl.u32 1326507024, %v2196
      %v2212 = vor.u32 %v2210, %v2211
      %vm2213 = vcmp.lt.s32.totalorder %v2194, 1
      %vm2214 = vcmp.lt.s32.totalorder %v2194, 2
      %vm2215 = vcmp.lt.s32.totalorder %v2194, 3
      %vm2216 = vcmp.lt.s32.totalorder %v2194, 4
      %v2217 = vsel %vm2213, %v2197, %v2200
      %v2218 = vsel %vm2216, %v2206, 2102212464
      %v2219 = vsel %vm2215, %v2203, %v2218
      %v2220 = vsel %vm2214, %v2217, %v2219
      %v2221 = vsel %vm2213, %v2200, %v2203
      %v2222 = vsel %vm2216, %v2209, 920167782
      %v2223 = vsel %vm2215, %v2206, %v2222
      %v2224 = vsel %vm2214, %v2221, %v2223
      %v2225 = vsel %vm2213, %v2203, %v2206
      %v2226 = vsel %vm2216, %v2212, 1326507024
      %v2227 = vsel %vm2215, %v2209, %v2226
      %v2228 = vsel %vm2214, %v2225, %v2227
      %v2229 = vshll.u32 %v2189, 8
      %v2230 = vand.u32 %v2229, 65535
      %v2231 = vshrl.u32 %v2229, 16
      %v2232 = vand.u32 %v2228, 65535
      %v2233 = vshrl.u32 %v2228, 16
      %v2234 = vmul.u32 %v2230, %v2232
      %v2235 = vmul.u32 %v2230, %v2233
      %v2236 = vmul.u32 %v2231, %v2232
      %v2237 = vmul.u32 %v2231, %v2233
      %v2238 = vshll.u32 %v2235, 16
      %v2239 = vshrl.u32 %v2235, 16
      %v2240 = vshll.u32 %v2236, 16
      %v2241 = vshrl.u32 %v2236, 16
      %vm2242 = vc.u32 %v2234, %v2238
      %v2243 = vsel %vm2242, 1, 0
      %v2244 = vadd.s32 %v2234, %v2238
      %v2245 = vadd.s32 %v2237, %v2243
      %vm2246 = vc.u32 %v2244, %v2240
      %v2247 = vsel %vm2246, 1, 0
      %v2248 = vadd.s32 %v2244, %v2240
      %v2249 = vadd.s32 %v2245, %v2247
      %v2250 = vadd.s32 %v2249, %v2239
      %v2251 = vadd.s32 %v2250, %v2241
      %v2252 = vand.u32 %v2229, 65535
      %v2253 = vshrl.u32 %v2229, 16
      %v2254 = vand.u32 %v2224, 65535
      %v2255 = vshrl.u32 %v2224, 16
      %v2256 = vmul.u32 %v2252, %v2254
      %v2257 = vmul.u32 %v2252, %v2255
      %v2258 = vmul.u32 %v2253, %v2254
      %v2259 = vmul.u32 %v2253, %v2255
      %v2260 = vshll.u32 %v2257, 16
      %v2261 = vshrl.u32 %v2257, 16
      %v2262 = vshll.u32 %v2258, 16
      %v2263 = vshrl.u32 %v2258, 16
      %vm2264 = vc.u32 %v2256, %v2260
      %v2265 = vsel %vm2264, 1, 0
      %v2266 = vadd.s32 %v2256, %v2260
      %v2267 = vadd.s32 %v2259, %v2265
      %vm2268 = vc.u32 %v2266, %v2262
      %v2269 = vsel %vm2268, 1, 0
      %v2270 = vadd.s32 %v2266, %v2262
      %v2271 = vadd.s32 %v2267, %v2269
      %v2272 = vadd.s32 %v2271, %v2261
      %v2273 = vadd.s32 %v2272, %v2263
      %v2274 = vmul.u32 %v2229, %v2220
      %v2275 = vadd.s32 %v2251, %v2270
      %vm2276 = vc.u32 %v2251, %v2270
      %v2277 = vadd.s32 %v2273, 1
      %v2278 = vsel %vm2276, %v2277, %v2273
      %v2279 = vadd.s32 %v2274, %v2278
      %v2280 = vadd.s32 %v2279, 536870912
      %v2281 = vshrl.u32 %v2280, 30
      %v2282 = vshll.u32 %v2281, 30
      %v2283 = vsub.s32 %v2279, %v2282
      %vm2284 = vcmp.lt.s32.totalorder %v2283, 0
      %v2285 = vsub.s32 0, %v2283
      %v2286 = vsel %vm2284, %v2285, %v2283
      %v2287 = vclz %v2286
      %v2288 = vsub.s32 %v2287, 2
      %vm2289 = vcmp.gt.s32.totalorder 0, %v2288
      %v2290 = vsel %vm2289, 0, %v2288
      %v2291 = vsub.s32 32, %v2290
      %v2292 = vshll.u32 %v2283, %v2290
      %v2293 = vshrl.u32 %v2275, %v2291
      %v2294 = vor.u32 %v2292, %v2293
      %v2295 = vsub.s32 4294967266, %v2290
      %v2296 = vadd.s32 %v2295, 127
      %v2297 = vshll.u32 %v2296, 23
      %v2298 = vor.u32 4788187, %v2297
      %v2299 = vand.u32 2147483647, %v2298
      %v2301 = vcvt.s32.f32 %v2294
      %v2302 = vmul.f32 %v2301, %v2299
      %v2303 = vxor.u32 %v2302, 2147483648
      %v2304 = vsel %vm2183, %v2303, %v2302
      %v2305 = vsub.s32 4, %v2281
      %v2306 = vsel %vm2183, %v2305, %v2281
      %v2307 = vsel %vm2182, %v323, %v2304
      %v2308 = vsel %vm2182, 0, %v2306
      %v2309 = vmul.f32 %v2307, %v2307
      %v2310 = vmul.f32 %v2309, -0.001358992
      %v2311 = vadd.f32 %v2310, 0.041655596
      %v2312 = vmul.f32 %v2309, %v2311
      %v2313 = vadd.f32 %v2312, -0.4999988
      %v2314 = vmul.f32 %v2309, %v2313
      %v2315 = vadd.f32 1.0, %v2314
      %v2316 = vmul.f32 %v2307, %v2307
      %v2317 = vmul.f32 %v2316, -0.00019511016
      %v2318 = vadd.f32 %v2317, 0.008332121
      %v2319 = vmul.f32 %v2316, %v2318
      %v2320 = vadd.f32 %v2319, -0.16666654
      %v2321 = vmul.f32 %v2316, %v2320
      %v2322 = vadd.f32 %v2321, 1.0
      %v2323 = vmul.f32 %v2322, %v2307
      %vm2324 = vweird.f32 %v323
      %v2325 = vand.u32 %v2308, 3
      %vm2326 = vcmp.lt.s32.totalorder %v2325, 2
      %vm2327 = vcmp.eq.s32.totalorder %v2325, 0
      %v2328 = vxor.u32 %v2323, 2147483648
      %v2329 = vsel %vm2327, %v2315, %v2328
      %vm2330 = vcmp.eq.s32.totalorder %v2325, 2
      %v2331 = vxor.u32 %v2315, 2147483648
      %v2332 = vsel %vm2330, %v2331, %v2323
      %v2333 = vsel %vm2326, %v2329, %v2332
      %v2334 = vsel %vm2324, nan, %v2333
      %v2335 = vand.u32 2147483647, %v324
      %vm2336 = vcmp.le.f32.partialorder %v2335, 0.7853982
      %vm2337 = vcmp.lt.s32.totalorder %v324, 0
      %v2338 = vand.u32 %v324, 2139095040
      %v2339 = vshrl.u32 %v2338, 23
      %v2340 = vsub.s32 %v2339, 127
      %v2341 = vand.u32 2147483647, %v324
      %v2342 = vand.u32 %v2341, 8388607
      %v2343 = vor.u32 %v2342, 8388608
      %v2344 = vsub.s32 0, %v2343
      %v2345 = vadd.s32 %v2340, 1
      %vm2346 = vcmp.gt.s32.totalorder %v2345, 0
      %v2347 = vsel %vm2346, %v2345, 0
      %v2348 = vshrl.u32 %v2347, 5
      %v2349 = vand.u32 %v2347, 31
      %v2350 = vsub.s32 32, %v2349
      %v2351 = vshrl.u32 683565275, %v2350
      %v2352 = vshll.u32 683565275, %v2349
      %v2353 = vshrl.u32 2475754826, %v2350
      %v2354 = vor.u32 %v2352, %v2353
      %v2355 = vshll.u32 2475754826, %v2349
      %v2356 = vshrl.u32 2131351028, %v2350
      %v2357 = vor.u32 %v2355, %v2356
      %v2358 = vshll.u32 2131351028, %v2349
      %v2359 = vshrl.u32 2102212464, %v2350
      %v2360 = vor.u32 %v2358, %v2359
      %v2361 = vshll.u32 2102212464, %v2349
      %v2362 = vshrl.u32 920167782, %v2350
      %v2363 = vor.u32 %v2361, %v2362
      %v2364 = vshll.u32 920167782, %v2349
      %v2365 = vshrl.u32 1326507024, %v2350
      %v2366 = vor.u32 %v2364, %v2365
      %vm2367 = vcmp.lt.s32.totalorder %v2348, 1
      %vm2368 = vcmp.lt.s32.totalorder %v2348, 2
      %vm2369 = vcmp.lt.s32.totalorder %v2348, 3
      %vm2370 = vcmp.lt.s32.totalorder %v2348, 4
      %v2371 = vsel %vm2367, %v2351, %v2354
      %v2372 = vsel %vm2370, %v2360, 2102212464
      %v2373 = vsel %vm2369, %v2357, %v2372
      %v2374 = vsel %vm2368, %v2371, %v2373
      %v2375 = vsel %vm2367, %v2354, %v2357
      %v2376 = vsel %vm2370, %v2363, 920167782
      %v2377 = vsel %vm2369, %v2360, %v2376
      %v2378 = vsel %vm2368, %v2375, %v2377
      %v2379 = vsel %vm2367, %v2357, %v2360
      %v2380 = vsel %vm2370, %v2366, 1326507024
      %v2381 = vsel %vm2369, %v2363, %v2380
      %v2382 = vsel %vm2368, %v2379, %v2381
      %v2383 = vshll.u32 %v2343, 8
      %v2384 = vand.u32 %v2383, 65535
      %v2385 = vshrl.u32 %v2383, 16
      %v2386 = vand.u32 %v2382, 65535
      %v2387 = vshrl.u32 %v2382, 16
      %v2388 = vmul.u32 %v2384, %v2386
      %v2389 = vmul.u32 %v2384, %v2387
      %v2390 = vmul.u32 %v2385, %v2386
      %v2391 = vmul.u32 %v2385, %v2387
      %v2392 = vshll.u32 %v2389, 16
      %v2393 = vshrl.u32 %v2389, 16
      %v2394 = vshll.u32 %v2390, 16
      %v2395 = vshrl.u32 %v2390, 16
      %vm2396 = vc.u32 %v2388, %v2392
      %v2397 = vsel %vm2396, 1, 0
      %v2398 = vadd.s32 %v2388, %v2392
      %v2399 = vadd.s32 %v2391, %v2397
      %vm2400 = vc.u32 %v2398, %v2394
      %v2401 = vsel %vm2400, 1, 0
      %v2402 = vadd.s32 %v2398, %v2394
      %v2403 = vadd.s32 %v2399, %v2401
      %v2404 = vadd.s32 %v2403, %v2393
      %v2405 = vadd.s32 %v2404, %v2395
      %v2406 = vand.u32 %v2383, 65535
      %v2407 = vshrl.u32 %v2383, 16
      %v2408 = vand.u32 %v2378, 65535
      %v2409 = vshrl.u32 %v2378, 16
      %v2410 = vmul.u32 %v2406, %v2408
      %v2411 = vmul.u32 %v2406, %v2409
      %v2412 = vmul.u32 %v2407, %v2408
      %v2413 = vmul.u32 %v2407, %v2409
      %v2414 = vshll.u32 %v2411, 16
      %v2415 = vshrl.u32 %v2411, 16
      %v2416 = vshll.u32 %v2412, 16
      %v2417 = vshrl.u32 %v2412, 16
      %vm2418 = vc.u32 %v2410, %v2414
      %v2419 = vsel %vm2418, 1, 0
      %v2420 = vadd.s32 %v2410, %v2414
      %v2421 = vadd.s32 %v2413, %v2419
      %vm2422 = vc.u32 %v2420, %v2416
      %v2423 = vsel %vm2422, 1, 0
      %v2424 = vadd.s32 %v2420, %v2416
      %v2425 = vadd.s32 %v2421, %v2423
      %v2426 = vadd.s32 %v2425, %v2415
      %v2427 = vadd.s32 %v2426, %v2417
      %v2428 = vmul.u32 %v2383, %v2374
      %v2429 = vadd.s32 %v2405, %v2424
      %vm2430 = vc.u32 %v2405, %v2424
      %v2431 = vadd.s32 %v2427, 1
      %v2432 = vsel %vm2430, %v2431, %v2427
      %v2433 = vadd.s32 %v2428, %v2432
      %v2434 = vadd.s32 %v2433, 536870912
      %v2435 = vshrl.u32 %v2434, 30
      %v2436 = vshll.u32 %v2435, 30
      %v2437 = vsub.s32 %v2433, %v2436
      %vm2438 = vcmp.lt.s32.totalorder %v2437, 0
      %v2439 = vsub.s32 0, %v2437
      %v2440 = vsel %vm2438, %v2439, %v2437
      %v2441 = vclz %v2440
      %v2442 = vsub.s32 %v2441, 2
      %vm2443 = vcmp.gt.s32.totalorder 0, %v2442
      %v2444 = vsel %vm2443, 0, %v2442
      %v2445 = vsub.s32 32, %v2444
      %v2446 = vshll.u32 %v2437, %v2444
      %v2447 = vshrl.u32 %v2429, %v2445
      %v2448 = vor.u32 %v2446, %v2447
      %v2449 = vsub.s32 4294967266, %v2444
      %v2450 = vadd.s32 %v2449, 127
      %v2451 = vshll.u32 %v2450, 23
      %v2452 = vor.u32 4788187, %v2451
      %v2453 = vand.u32 2147483647, %v2452
      %v2455 = vcvt.s32.f32 %v2448
      %v2456 = vmul.f32 %v2455, %v2453
      %v2457 = vxor.u32 %v2456, 2147483648
      %v2458 = vsel %vm2337, %v2457, %v2456
      %v2459 = vsub.s32 4, %v2435
      %v2460 = vsel %vm2337, %v2459, %v2435
      %v2461 = vsel %vm2336, %v324, %v2458
      %v2462 = vsel %vm2336, 0, %v2460
      %v2463 = vmul.f32 %v2461, %v2461
      %v2464 = vmul.f32 %v2463, -0.001358992
      %v2465 = vadd.f32 %v2464, 0.041655596
      %v2466 = vmul.f32 %v2463, %v2465
      %v2467 = vadd.f32 %v2466, -0.4999988
      %v2468 = vmul.f32 %v2463, %v2467
      %v2469 = vadd.f32 1.0, %v2468
      %v2470 = vmul.f32 %v2461, %v2461
      %v2471 = vmul.f32 %v2470, -0.00019511016
      %v2472 = vadd.f32 %v2471, 0.008332121
      %v2473 = vmul.f32 %v2470, %v2472
      %v2474 = vadd.f32 %v2473, -0.16666654
      %v2475 = vmul.f32 %v2470, %v2474
      %v2476 = vadd.f32 %v2475, 1.0
      %v2477 = vmul.f32 %v2476, %v2461
      %vm2478 = vweird.f32 %v324
      %v2479 = vand.u32 %v2462, 3
      %vm2480 = vcmp.lt.s32.totalorder %v2479, 2
      %vm2481 = vcmp.eq.s32.totalorder %v2479, 0
      %v2482 = vxor.u32 %v2477, 2147483648
      %v2483 = vsel %vm2481, %v2469, %v2482
      %vm2484 = vcmp.eq.s32.totalorder %v2479, 2
      %v2485 = vxor.u32 %v2469, 2147483648
      %v2486 = vsel %vm2484, %v2485, %v2477
      %v2487 = vsel %vm2480, %v2483, %v2486
      %v2488 = vsel %vm2478, nan, %v2487
      %v2489 = vand.u32 2147483647, %v331
      %vm2490 = vcmp.le.f32.partialorder %v2489, 0.7853982
      %vm2491 = vcmp.lt.s32.totalorder %v331, 0
      %v2492 = vand.u32 %v331, 2139095040
      %v2493 = vshrl.u32 %v2492, 23
      %v2494 = vsub.s32 %v2493, 127
      %v2495 = vand.u32 2147483647, %v331
      %v2496 = vand.u32 %v2495, 8388607
      %v2497 = vor.u32 %v2496, 8388608
      %v2498 = vsub.s32 0, %v2497
      %v2499 = vadd.s32 %v2494, 1
      %vm2500 = vcmp.gt.s32.totalorder %v2499, 0
      %v2501 = vsel %vm2500, %v2499, 0
      %v2502 = vshrl.u32 %v2501, 5
      %v2503 = vand.u32 %v2501, 31
      %v2504 = vsub.s32 32, %v2503
      %v2505 = vshrl.u32 683565275, %v2504
      %v2506 = vshll.u32 683565275, %v2503
      %v2507 = vshrl.u32 2475754826, %v2504
      %v2508 = vor.u32 %v2506, %v2507
      %v2509 = vshll.u32 2475754826, %v2503
      %v2510 = vshrl.u32 2131351028, %v2504
      %v2511 = vor.u32 %v2509, %v2510
      %v2512 = vshll.u32 2131351028, %v2503
      %v2513 = vshrl.u32 2102212464, %v2504
      %v2514 = vor.u32 %v2512, %v2513
      %v2515 = vshll.u32 2102212464, %v2503
      %v2516 = vshrl.u32 920167782, %v2504
      %v2517 = vor.u32 %v2515, %v2516
      %v2518 = vshll.u32 920167782, %v2503
      %v2519 = vshrl.u32 1326507024, %v2504
      %v2520 = vor.u32 %v2518, %v2519
      %vm2521 = vcmp.lt.s32.totalorder %v2502, 1
      %vm2522 = vcmp.lt.s32.totalorder %v2502, 2
      %vm2523 = vcmp.lt.s32.totalorder %v2502, 3
      %vm2524 = vcmp.lt.s32.totalorder %v2502, 4
      %v2525 = vsel %vm2521, %v2505, %v2508
      %v2526 = vsel %vm2524, %v2514, 2102212464
      %v2527 = vsel %vm2523, %v2511, %v2526
      %v2528 = vsel %vm2522, %v2525, %v2527
      %v2529 = vsel %vm2521, %v2508, %v2511
      %v2530 = vsel %vm2524, %v2517, 920167782
      %v2531 = vsel %vm2523, %v2514, %v2530
      %v2532 = vsel %vm2522, %v2529, %v2531
      %v2533 = vsel %vm2521, %v2511, %v2514
      %v2534 = vsel %vm2524, %v2520, 1326507024
      %v2535 = vsel %vm2523, %v2517, %v2534
      %v2536 = vsel %vm2522, %v2533, %v2535
      %v2537 = vshll.u32 %v2497, 8
      %v2538 = vand.u32 %v2537, 65535
      %v2539 = vshrl.u32 %v2537, 16
      %v2540 = vand.u32 %v2536, 65535
      %v2541 = vshrl.u32 %v2536, 16
      %v2542 = vmul.u32 %v2538, %v2540
      %v2543 = vmul.u32 %v2538, %v2541
      %v2544 = vmul.u32 %v2539, %v2540
      %v2545 = vmul.u32 %v2539, %v2541
      %v2546 = vshll.u32 %v2543, 16
      %v2547 = vshrl.u32 %v2543, 16
      %v2548 = vshll.u32 %v2544, 16
      %v2549 = vshrl.u32 %v2544, 16
      %vm2550 = vc.u32 %v2542, %v2546
      %v2551 = vsel %vm2550, 1, 0
      %v2552 = vadd.s32 %v2542, %v2546
      %v2553 = vadd.s32 %v2545, %v2551
      %vm2554 = vc.u32 %v2552, %v2548
      %v2555 = vsel %vm2554, 1, 0
      %v2556 = vadd.s32 %v2552, %v2548
      %v2557 = vadd.s32 %v2553, %v2555
      %v2558 = vadd.s32 %v2557, %v2547
      %v2559 = vadd.s32 %v2558, %v2549
      %v2560 = vand.u32 %v2537, 65535
      %v2561 = vshrl.u32 %v2537, 16
      %v2562 = vand.u32 %v2532, 65535
      %v2563 = vshrl.u32 %v2532, 16
      %v2564 = vmul.u32 %v2560, %v2562
      %v2565 = vmul.u32 %v2560, %v2563
      %v2566 = vmul.u32 %v2561, %v2562
      %v2567 = vmul.u32 %v2561, %v2563
      %v2568 = vshll.u32 %v2565, 16
      %v2569 = vshrl.u32 %v2565, 16
      %v2570 = vshll.u32 %v2566, 16
      %v2571 = vshrl.u32 %v2566, 16
      %vm2572 = vc.u32 %v2564, %v2568
      %v2573 = vsel %vm2572, 1, 0
      %v2574 = vadd.s32 %v2564, %v2568
      %v2575 = vadd.s32 %v2567, %v2573
      %vm2576 = vc.u32 %v2574, %v2570
      %v2577 = vsel %vm2576, 1, 0
      %v2578 = vadd.s32 %v2574, %v2570
      %v2579 = vadd.s32 %v2575, %v2577
      %v2580 = vadd.s32 %v2579, %v2569
      %v2581 = vadd.s32 %v2580, %v2571
      %v2582 = vmul.u32 %v2537, %v2528
      %v2583 = vadd.s32 %v2559, %v2578
      %vm2584 = vc.u32 %v2559, %v2578
      %v2585 = vadd.s32 %v2581, 1
      %v2586 = vsel %vm2584, %v2585, %v2581
      %v2587 = vadd.s32 %v2582, %v2586
      %v2588 = vadd.s32 %v2587, 536870912
      %v2589 = vshrl.u32 %v2588, 30
      %v2590 = vshll.u32 %v2589, 30
      %v2591 = vsub.s32 %v2587, %v2590
      %vm2592 = vcmp.lt.s32.totalorder %v2591, 0
      %v2593 = vsub.s32 0, %v2591
      %v2594 = vsel %vm2592, %v2593, %v2591
      %v2595 = vclz %v2594
      %v2596 = vsub.s32 %v2595, 2
      %vm2597 = vcmp.gt.s32.totalorder 0, %v2596
      %v2598 = vsel %vm2597, 0, %v2596
      %v2599 = vsub.s32 32, %v2598
      %v2600 = vshll.u32 %v2591, %v2598
      %v2601 = vshrl.u32 %v2583, %v2599
      %v2602 = vor.u32 %v2600, %v2601
      %v2603 = vsub.s32 4294967266, %v2598
      %v2604 = vadd.s32 %v2603, 127
      %v2605 = vshll.u32 %v2604, 23
      %v2606 = vor.u32 4788187, %v2605
      %v2607 = vand.u32 2147483647, %v2606
      %v2609 = vcvt.s32.f32 %v2602
      %v2610 = vmul.f32 %v2609, %v2607
      %v2611 = vxor.u32 %v2610, 2147483648
      %v2612 = vsel %vm2491, %v2611, %v2610
      %v2613 = vsub.s32 4, %v2589
      %v2614 = vsel %vm2491, %v2613, %v2589
      %v2615 = vsel %vm2490, %v331, %v2612
      %v2616 = vsel %vm2490, 0, %v2614
      %v2617 = vmul.f32 %v2615, %v2615
      %v2618 = vmul.f32 %v2617, -0.001358992
      %v2619 = vadd.f32 %v2618, 0.041655596
      %v2620 = vmul.f32 %v2617, %v2619
      %v2621 = vadd.f32 %v2620, -0.4999988
      %v2622 = vmul.f32 %v2617, %v2621
      %v2623 = vadd.f32 1.0, %v2622
      %v2624 = vmul.f32 %v2615, %v2615
      %v2625 = vmul.f32 %v2624, -0.00019511016
      %v2626 = vadd.f32 %v2625, 0.008332121
      %v2627 = vmul.f32 %v2624, %v2626
      %v2628 = vadd.f32 %v2627, -0.16666654
      %v2629 = vmul.f32 %v2624, %v2628
      %v2630 = vadd.f32 %v2629, 1.0
      %v2631 = vmul.f32 %v2630, %v2615
      %vm2632 = vweird.f32 %v331
      %v2633 = vand.u32 %v2616, 3
      %vm2634 = vcmp.lt.s32.totalorder %v2633, 2
      %vm2635 = vcmp.eq.s32.totalorder %v2633, 0
      %v2636 = vxor.u32 %v2631, 2147483648
      %v2637 = vsel %vm2635, %v2623, %v2636
      %vm2638 = vcmp.eq.s32.totalorder %v2633, 2
      %v2639 = vxor.u32 %v2623, 2147483648
      %v2640 = vsel %vm2638, %v2639, %v2631
      %v2641 = vsel %vm2634, %v2637, %v2640
      %v2642 = vsel %vm2632, nan, %v2641
      %v2643 = vand.u32 2147483647, %v332
      %vm2644 = vcmp.le.f32.partialorder %v2643, 0.7853982
      %vm2645 = vcmp.lt.s32.totalorder %v332, 0
      %v2646 = vand.u32 %v332, 2139095040
      %v2647 = vshrl.u32 %v2646, 23
      %v2648 = vsub.s32 %v2647, 127
      %v2649 = vand.u32 2147483647, %v332
      %v2650 = vand.u32 %v2649, 8388607
      %v2651 = vor.u32 %v2650, 8388608
      %v2652 = vsub.s32 0, %v2651
      %v2653 = vadd.s32 %v2648, 1
      %vm2654 = vcmp.gt.s32.totalorder %v2653, 0
      %v2655 = vsel %vm2654, %v2653, 0
      %v2656 = vshrl.u32 %v2655, 5
      %v2657 = vand.u32 %v2655, 31
      %v2658 = vsub.s32 32, %v2657
      %v2659 = vshrl.u32 683565275, %v2658
      %v2660 = vshll.u32 683565275, %v2657
      %v2661 = vshrl.u32 2475754826, %v2658
      %v2662 = vor.u32 %v2660, %v2661
      %v2663 = vshll.u32 2475754826, %v2657
      %v2664 = vshrl.u32 2131351028, %v2658
      %v2665 = vor.u32 %v2663, %v2664
      %v2666 = vshll.u32 2131351028, %v2657
      %v2667 = vshrl.u32 2102212464, %v2658
      %v2668 = vor.u32 %v2666, %v2667
      %v2669 = vshll.u32 2102212464, %v2657
      %v2670 = vshrl.u32 920167782, %v2658
      %v2671 = vor.u32 %v2669, %v2670
      %v2672 = vshll.u32 920167782, %v2657
      %v2673 = vshrl.u32 1326507024, %v2658
      %v2674 = vor.u32 %v2672, %v2673
      %vm2675 = vcmp.lt.s32.totalorder %v2656, 1
      %vm2676 = vcmp.lt.s32.totalorder %v2656, 2
      %vm2677 = vcmp.lt.s32.totalorder %v2656, 3
      %vm2678 = vcmp.lt.s32.totalorder %v2656, 4
      %v2679 = vsel %vm2675, %v2659, %v2662
      %v2680 = vsel %vm2678, %v2668, 2102212464
      %v2681 = vsel %vm2677, %v2665, %v2680
      %v2682 = vsel %vm2676, %v2679, %v2681
      %v2683 = vsel %vm2675, %v2662, %v2665
      %v2684 = vsel %vm2678, %v2671, 920167782
      %v2685 = vsel %vm2677, %v2668, %v2684
      %v2686 = vsel %vm2676, %v2683, %v2685
      %v2687 = vsel %vm2675, %v2665, %v2668
      %v2688 = vsel %vm2678, %v2674, 1326507024
      %v2689 = vsel %vm2677, %v2671, %v2688
      %v2690 = vsel %vm2676, %v2687, %v2689
      %v2691 = vshll.u32 %v2651, 8
      %v2692 = vand.u32 %v2691, 65535
      %v2693 = vshrl.u32 %v2691, 16
      %v2694 = vand.u32 %v2690, 65535
      %v2695 = vshrl.u32 %v2690, 16
      %v2696 = vmul.u32 %v2692, %v2694
      %v2697 = vmul.u32 %v2692, %v2695
      %v2698 = vmul.u32 %v2693, %v2694
      %v2699 = vmul.u32 %v2693, %v2695
      %v2700 = vshll.u32 %v2697, 16
      %v2701 = vshrl.u32 %v2697, 16
      %v2702 = vshll.u32 %v2698, 16
      %v2703 = vshrl.u32 %v2698, 16
      %vm2704 = vc.u32 %v2696, %v2700
      %v2705 = vsel %vm2704, 1, 0
      %v2706 = vadd.s32 %v2696, %v2700
      %v2707 = vadd.s32 %v2699, %v2705
      %vm2708 = vc.u32 %v2706, %v2702
      %v2709 = vsel %vm2708, 1, 0
      %v2710 = vadd.s32 %v2706, %v2702
      %v2711 = vadd.s32 %v2707, %v2709
      %v2712 = vadd.s32 %v2711, %v2701
      %v2713 = vadd.s32 %v2712, %v2703
      %v2714 = vand.u32 %v2691, 65535
      %v2715 = vshrl.u32 %v2691, 16
      %v2716 = vand.u32 %v2686, 65535
      %v2717 = vshrl.u32 %v2686, 16
      %v2718 = vmul.u32 %v2714, %v2716
      %v2719 = vmul.u32 %v2714, %v2717
      %v2720 = vmul.u32 %v2715, %v2716
      %v2721 = vmul.u32 %v2715, %v2717
      %v2722 = vshll.u32 %v2719, 16
      %v2723 = vshrl.u32 %v2719, 16
      %v2724 = vshll.u32 %v2720, 16
      %v2725 = vshrl.u32 %v2720, 16
      %vm2726 = vc.u32 %v2718, %v2722
      %v2727 = vsel %vm2726, 1, 0
      %v2728 = vadd.s32 %v2718, %v2722
      %v2729 = vadd.s32 %v2721, %v2727
      %vm2730 = vc.u32 %v2728, %v2724
      %v2731 = vsel %vm2730, 1, 0
      %v2732 = vadd.s32 %v2728, %v2724
      %v2733 = vadd.s32 %v2729, %v2731
      %v2734 = vadd.s32 %v2733, %v2723
      %v2735 = vadd.s32 %v2734, %v2725
      %v2736 = vmul.u32 %v2691, %v2682
      %v2737 = vadd.s32 %v2713, %v2732
      %vm2738 = vc.u32 %v2713, %v2732
      %v2739 = vadd.s32 %v2735, 1
      %v2740 = vsel %vm2738, %v2739, %v2735
      %v2741 = vadd.s32 %v2736, %v2740
      %v2742 = vadd.s32 %v2741, 536870912
      %v2743 = vshrl.u32 %v2742, 30
      %v2744 = vshll.u32 %v2743, 30
      %v2745 = vsub.s32 %v2741, %v2744
      %vm2746 = vcmp.lt.s32.totalorder %v2745, 0
      %v2747 = vsub.s32 0, %v2745
      %v2748 = vsel %vm2746, %v2747, %v2745
      %v2749 = vclz %v2748
      %v2750 = vsub.s32 %v2749, 2
      %vm2751 = vcmp.gt.s32.totalorder 0, %v2750
      %v2752 = vsel %vm2751, 0, %v2750
      %v2753 = vsub.s32 32, %v2752
      %v2754 = vshll.u32 %v2745, %v2752
      %v2755 = vshrl.u32 %v2737, %v2753
      %v2756 = vor.u32 %v2754, %v2755
      %v2757 = vsub.s32 4294967266, %v2752
      %v2758 = vadd.s32 %v2757, 127
      %v2759 = vshll.u32 %v2758, 23
      %v2760 = vor.u32 4788187, %v2759
      %v2761 = vand.u32 2147483647, %v2760
      %v2763 = vcvt.s32.f32 %v2756
      %v2764 = vmul.f32 %v2763, %v2761
      %v2765 = vxor.u32 %v2764, 2147483648
      %v2766 = vsel %vm2645, %v2765, %v2764
      %v2767 = vsub.s32 4, %v2743
      %v2768 = vsel %vm2645, %v2767, %v2743
      %v2769 = vsel %vm2644, %v332, %v2766
      %v2770 = vsel %vm2644, 0, %v2768
      %v2771 = vmul.f32 %v2769, %v2769
      %v2772 = vmul.f32 %v2771, -0.001358992
      %v2773 = vadd.f32 %v2772, 0.041655596
      %v2774 = vmul.f32 %v2771, %v2773
      %v2775 = vadd.f32 %v2774, -0.4999988
      %v2776 = vmul.f32 %v2771, %v2775
      %v2777 = vadd.f32 1.0, %v2776
      %v2778 = vmul.f32 %v2769, %v2769
      %v2779 = vmul.f32 %v2778, -0.00019511016
      %v2780 = vadd.f32 %v2779, 0.008332121
      %v2781 = vmul.f32 %v2778, %v2780
      %v2782 = vadd.f32 %v2781, -0.16666654
      %v2783 = vmul.f32 %v2778, %v2782
      %v2784 = vadd.f32 %v2783, 1.0
      %v2785 = vmul.f32 %v2784, %v2769
      %vm2786 = vweird.f32 %v332
      %v2787 = vand.u32 %v2770, 3
      %vm2788 = vcmp.lt.s32.totalorder %v2787, 2
      %vm2789 = vcmp.eq.s32.totalorder %v2787, 0
      %v2790 = vxor.u32 %v2785, 2147483648
      %v2791 = vsel %vm2789, %v2777, %v2790
      %vm2792 = vcmp.eq.s32.totalorder %v2787, 2
      %v2793 = vxor.u32 %v2777, 2147483648
      %v2794 = vsel %vm2792, %v2793, %v2785
      %v2795 = vsel %vm2788, %v2791, %v2794
      %v2796 = vsel %vm2786, nan, %v2795
      %v2797 = vpack.c.bf16 %v1102, %v486
      %v2798 = vpack.c.bf16 %v1256, %v640
      %v2799 = vpack.c.bf16 %v1410, %v794
      %v2800 = vpack.c.bf16 %v1564, %v948
      %v2801 = vpack.c.bf16 %v2334, %v1718
      %v2802 = vpack.c.bf16 %v2488, %v1872
      %v2803 = vpack.c.bf16 %v2642, %v2026
      %v2804 = vpack.c.bf16 %v2796, %v2180
      %v2806 = vperm.slane %v290, 0
      %v2807 = vperm.slane %v290, 1
      %v2810 = vmul.f32 %v295, %v2806
      %v2811 = vmul.f32 %v295, %v2807
      %v2812 = vmul.f32 %v300, %v2806
      %v2813 = vmul.f32 %v300, %v2807
      %v2814 = vmul.f32 %v305, %v2806
      %v2815 = vmul.f32 %v305, %v2807
      %v2816 = vmul.f32 %v310, %v2806
      %v2817 = vmul.f32 %v310, %v2807
      %v2818 = vand.u32 2147483647, %v2810
      %vm2819 = vcmp.le.f32.partialorder %v2818, 0.7853982
      %vm2820 = vcmp.lt.s32.totalorder %v2810, 0
      %v2821 = vand.u32 %v2810, 2139095040
      %v2822 = vshrl.u32 %v2821, 23
      %v2823 = vsub.s32 %v2822, 127
      %v2824 = vand.u32 2147483647, %v2810
      %v2825 = vand.u32 %v2824, 8388607
      %v2826 = vor.u32 %v2825, 8388608
      %v2827 = vsub.s32 0, %v2826
      %v2828 = vadd.s32 %v2823, 1
      %vm2829 = vcmp.gt.s32.totalorder %v2828, 0
      %v2830 = vsel %vm2829, %v2828, 0
      %v2831 = vshrl.u32 %v2830, 5
      %v2832 = vand.u32 %v2830, 31
      %v2833 = vsub.s32 32, %v2832
      %v2834 = vshrl.u32 683565275, %v2833
      %v2835 = vshll.u32 683565275, %v2832
      %v2836 = vshrl.u32 2475754826, %v2833
      %v2837 = vor.u32 %v2835, %v2836
      %v2838 = vshll.u32 2475754826, %v2832
      %v2839 = vshrl.u32 2131351028, %v2833
      %v2840 = vor.u32 %v2838, %v2839
      %v2841 = vshll.u32 2131351028, %v2832
      %v2842 = vshrl.u32 2102212464, %v2833
      %v2843 = vor.u32 %v2841, %v2842
      %v2844 = vshll.u32 2102212464, %v2832
      %v2845 = vshrl.u32 920167782, %v2833
      %v2846 = vor.u32 %v2844, %v2845
      %v2847 = vshll.u32 920167782, %v2832
      %v2848 = vshrl.u32 1326507024, %v2833
      %v2849 = vor.u32 %v2847, %v2848
      %vm2850 = vcmp.lt.s32.totalorder %v2831, 1
      %vm2851 = vcmp.lt.s32.totalorder %v2831, 2
      %vm2852 = vcmp.lt.s32.totalorder %v2831, 3
      %vm2853 = vcmp.lt.s32.totalorder %v2831, 4
      %v2854 = vsel %vm2850, %v2834, %v2837
      %v2855 = vsel %vm2853, %v2843, 2102212464
      %v2856 = vsel %vm2852, %v2840, %v2855
      %v2857 = vsel %vm2851, %v2854, %v2856
      %v2858 = vsel %vm2850, %v2837, %v2840
      %v2859 = vsel %vm2853, %v2846, 920167782
      %v2860 = vsel %vm2852, %v2843, %v2859
      %v2861 = vsel %vm2851, %v2858, %v2860
      %v2862 = vsel %vm2850, %v2840, %v2843
      %v2863 = vsel %vm2853, %v2849, 1326507024
      %v2864 = vsel %vm2852, %v2846, %v2863
      %v2865 = vsel %vm2851, %v2862, %v2864
      %v2866 = vshll.u32 %v2826, 8
      %v2867 = vand.u32 %v2866, 65535
      %v2868 = vshrl.u32 %v2866, 16
      %v2869 = vand.u32 %v2865, 65535
      %v2870 = vshrl.u32 %v2865, 16
      %v2871 = vmul.u32 %v2867, %v2869
      %v2872 = vmul.u32 %v2867, %v2870
      %v2873 = vmul.u32 %v2868, %v2869
      %v2874 = vmul.u32 %v2868, %v2870
      %v2875 = vshll.u32 %v2872, 16
      %v2876 = vshrl.u32 %v2872, 16
      %v2877 = vshll.u32 %v2873, 16
      %v2878 = vshrl.u32 %v2873, 16
      %vm2879 = vc.u32 %v2871, %v2875
      %v2880 = vsel %vm2879, 1, 0
      %v2881 = vadd.s32 %v2871, %v2875
      %v2882 = vadd.s32 %v2874, %v2880
      %vm2883 = vc.u32 %v2881, %v2877
      %v2884 = vsel %vm2883, 1, 0
      %v2885 = vadd.s32 %v2881, %v2877
      %v2886 = vadd.s32 %v2882, %v2884
      %v2887 = vadd.s32 %v2886, %v2876
      %v2888 = vadd.s32 %v2887, %v2878
      %v2889 = vand.u32 %v2866, 65535
      %v2890 = vshrl.u32 %v2866, 16
      %v2891 = vand.u32 %v2861, 65535
      %v2892 = vshrl.u32 %v2861, 16
      %v2893 = vmul.u32 %v2889, %v2891
      %v2894 = vmul.u32 %v2889, %v2892
      %v2895 = vmul.u32 %v2890, %v2891
      %v2896 = vmul.u32 %v2890, %v2892
      %v2897 = vshll.u32 %v2894, 16
      %v2898 = vshrl.u32 %v2894, 16
      %v2899 = vshll.u32 %v2895, 16
      %v2900 = vshrl.u32 %v2895, 16
      %vm2901 = vc.u32 %v2893, %v2897
      %v2902 = vsel %vm2901, 1, 0
      %v2903 = vadd.s32 %v2893, %v2897
      %v2904 = vadd.s32 %v2896, %v2902
      %vm2905 = vc.u32 %v2903, %v2899
      %v2906 = vsel %vm2905, 1, 0
      %v2907 = vadd.s32 %v2903, %v2899
      %v2908 = vadd.s32 %v2904, %v2906
      %v2909 = vadd.s32 %v2908, %v2898
      %v2910 = vadd.s32 %v2909, %v2900
      %v2911 = vmul.u32 %v2866, %v2857
      %v2912 = vadd.s32 %v2888, %v2907
      %vm2913 = vc.u32 %v2888, %v2907
      %v2914 = vadd.s32 %v2910, 1
      %v2915 = vsel %vm2913, %v2914, %v2910
      %v2916 = vadd.s32 %v2911, %v2915
      %v2917 = vadd.s32 %v2916, 536870912
      %v2918 = vshrl.u32 %v2917, 30
      %v2919 = vshll.u32 %v2918, 30
      %v2920 = vsub.s32 %v2916, %v2919
      %vm2921 = vcmp.lt.s32.totalorder %v2920, 0
      %v2922 = vsub.s32 0, %v2920
      %v2923 = vsel %vm2921, %v2922, %v2920
      %v2924 = vclz %v2923
      %v2925 = vsub.s32 %v2924, 2
      %vm2926 = vcmp.gt.s32.totalorder 0, %v2925
      %v2927 = vsel %vm2926, 0, %v2925
      %v2928 = vsub.s32 32, %v2927
      %v2929 = vshll.u32 %v2920, %v2927
      %v2930 = vshrl.u32 %v2912, %v2928
      %v2931 = vor.u32 %v2929, %v2930
      %v2932 = vsub.s32 4294967266, %v2927
      %v2933 = vadd.s32 %v2932, 127
      %v2934 = vshll.u32 %v2933, 23
      %v2935 = vor.u32 4788187, %v2934
      %v2936 = vand.u32 2147483647, %v2935
      %v2938 = vcvt.s32.f32 %v2931
      %v2939 = vmul.f32 %v2938, %v2936
      %v2940 = vxor.u32 %v2939, 2147483648
      %v2941 = vsel %vm2820, %v2940, %v2939
      %v2942 = vsub.s32 4, %v2918
      %v2943 = vsel %vm2820, %v2942, %v2918
      %v2944 = vsel %vm2819, %v2810, %v2941
      %v2945 = vsel %vm2819, 0, %v2943
      %v2946 = vmul.f32 %v2944, %v2944
      %v2947 = vmul.f32 %v2946, -0.001358992
      %v2948 = vadd.f32 %v2947, 0.041655596
      %v2949 = vmul.f32 %v2946, %v2948
      %v2950 = vadd.f32 %v2949, -0.4999988
      %v2951 = vmul.f32 %v2946, %v2950
      %v2952 = vadd.f32 1.0, %v2951
      %v2953 = vmul.f32 %v2944, %v2944
      %v2954 = vmul.f32 %v2953, -0.00019511016
      %v2955 = vadd.f32 %v2954, 0.008332121
      %v2956 = vmul.f32 %v2953, %v2955
      %v2957 = vadd.f32 %v2956, -0.16666654
      %v2958 = vmul.f32 %v2953, %v2957
      %v2959 = vadd.f32 %v2958, 1.0
      %v2960 = vmul.f32 %v2959, %v2944
      %vm2961 = vweird.f32 %v2810
      %v2962 = vand.u32 %v2945, 3
      %vm2963 = vcmp.lt.s32.totalorder %v2962, 2
      %vm2964 = vcmp.eq.s32.totalorder %v2962, 0
      %v2965 = vxor.u32 %v2960, 2147483648
      %v2966 = vsel %vm2964, %v2952, %v2965
      %vm2967 = vcmp.eq.s32.totalorder %v2962, 2
      %v2968 = vxor.u32 %v2952, 2147483648
      %v2969 = vsel %vm2967, %v2968, %v2960
      %v2970 = vsel %vm2963, %v2966, %v2969
      %v2971 = vsel %vm2961, nan, %v2970
      %v2972 = vand.u32 2147483647, %v2811
      %vm2973 = vcmp.le.f32.partialorder %v2972, 0.7853982
      %vm2974 = vcmp.lt.s32.totalorder %v2811, 0
      %v2975 = vand.u32 %v2811, 2139095040
      %v2976 = vshrl.u32 %v2975, 23
      %v2977 = vsub.s32 %v2976, 127
      %v2978 = vand.u32 2147483647, %v2811
      %v2979 = vand.u32 %v2978, 8388607
      %v2980 = vor.u32 %v2979, 8388608
      %v2981 = vsub.s32 0, %v2980
      %v2982 = vadd.s32 %v2977, 1
      %vm2983 = vcmp.gt.s32.totalorder %v2982, 0
      %v2984 = vsel %vm2983, %v2982, 0
      %v2985 = vshrl.u32 %v2984, 5
      %v2986 = vand.u32 %v2984, 31
      %v2987 = vsub.s32 32, %v2986
      %v2988 = vshrl.u32 683565275, %v2987
      %v2989 = vshll.u32 683565275, %v2986
      %v2990 = vshrl.u32 2475754826, %v2987
      %v2991 = vor.u32 %v2989, %v2990
      %v2992 = vshll.u32 2475754826, %v2986
      %v2993 = vshrl.u32 2131351028, %v2987
      %v2994 = vor.u32 %v2992, %v2993
      %v2995 = vshll.u32 2131351028, %v2986
      %v2996 = vshrl.u32 2102212464, %v2987
      %v2997 = vor.u32 %v2995, %v2996
      %v2998 = vshll.u32 2102212464, %v2986
      %v2999 = vshrl.u32 920167782, %v2987
      %v3000 = vor.u32 %v2998, %v2999
      %v3001 = vshll.u32 920167782, %v2986
      %v3002 = vshrl.u32 1326507024, %v2987
      %v3003 = vor.u32 %v3001, %v3002
      %vm3004 = vcmp.lt.s32.totalorder %v2985, 1
      %vm3005 = vcmp.lt.s32.totalorder %v2985, 2
      %vm3006 = vcmp.lt.s32.totalorder %v2985, 3
      %vm3007 = vcmp.lt.s32.totalorder %v2985, 4
      %v3008 = vsel %vm3004, %v2988, %v2991
      %v3009 = vsel %vm3007, %v2997, 2102212464
      %v3010 = vsel %vm3006, %v2994, %v3009
      %v3011 = vsel %vm3005, %v3008, %v3010
      %v3012 = vsel %vm3004, %v2991, %v2994
      %v3013 = vsel %vm3007, %v3000, 920167782
      %v3014 = vsel %vm3006, %v2997, %v3013
      %v3015 = vsel %vm3005, %v3012, %v3014
      %v3016 = vsel %vm3004, %v2994, %v2997
      %v3017 = vsel %vm3007, %v3003, 1326507024
      %v3018 = vsel %vm3006, %v3000, %v3017
      %v3019 = vsel %vm3005, %v3016, %v3018
      %v3020 = vshll.u32 %v2980, 8
      %v3021 = vand.u32 %v3020, 65535
      %v3022 = vshrl.u32 %v3020, 16
      %v3023 = vand.u32 %v3019, 65535
      %v3024 = vshrl.u32 %v3019, 16
      %v3025 = vmul.u32 %v3021, %v3023
      %v3026 = vmul.u32 %v3021, %v3024
      %v3027 = vmul.u32 %v3022, %v3023
      %v3028 = vmul.u32 %v3022, %v3024
      %v3029 = vshll.u32 %v3026, 16
      %v3030 = vshrl.u32 %v3026, 16
      %v3031 = vshll.u32 %v3027, 16
      %v3032 = vshrl.u32 %v3027, 16
      %vm3033 = vc.u32 %v3025, %v3029
      %v3034 = vsel %vm3033, 1, 0
      %v3035 = vadd.s32 %v3025, %v3029
      %v3036 = vadd.s32 %v3028, %v3034
      %vm3037 = vc.u32 %v3035, %v3031
      %v3038 = vsel %vm3037, 1, 0
      %v3039 = vadd.s32 %v3035, %v3031
      %v3040 = vadd.s32 %v3036, %v3038
      %v3041 = vadd.s32 %v3040, %v3030
      %v3042 = vadd.s32 %v3041, %v3032
      %v3043 = vand.u32 %v3020, 65535
      %v3044 = vshrl.u32 %v3020, 16
      %v3045 = vand.u32 %v3015, 65535
      %v3046 = vshrl.u32 %v3015, 16
      %v3047 = vmul.u32 %v3043, %v3045
      %v3048 = vmul.u32 %v3043, %v3046
      %v3049 = vmul.u32 %v3044, %v3045
      %v3050 = vmul.u32 %v3044, %v3046
      %v3051 = vshll.u32 %v3048, 16
      %v3052 = vshrl.u32 %v3048, 16
      %v3053 = vshll.u32 %v3049, 16
      %v3054 = vshrl.u32 %v3049, 16
      %vm3055 = vc.u32 %v3047, %v3051
      %v3056 = vsel %vm3055, 1, 0
      %v3057 = vadd.s32 %v3047, %v3051
      %v3058 = vadd.s32 %v3050, %v3056
      %vm3059 = vc.u32 %v3057, %v3053
      %v3060 = vsel %vm3059, 1, 0
      %v3061 = vadd.s32 %v3057, %v3053
      %v3062 = vadd.s32 %v3058, %v3060
      %v3063 = vadd.s32 %v3062, %v3052
      %v3064 = vadd.s32 %v3063, %v3054
      %v3065 = vmul.u32 %v3020, %v3011
      %v3066 = vadd.s32 %v3042, %v3061
      %vm3067 = vc.u32 %v3042, %v3061
      %v3068 = vadd.s32 %v3064, 1
      %v3069 = vsel %vm3067, %v3068, %v3064
      %v3070 = vadd.s32 %v3065, %v3069
      %v3071 = vadd.s32 %v3070, 536870912
      %v3072 = vshrl.u32 %v3071, 30
      %v3073 = vshll.u32 %v3072, 30
      %v3074 = vsub.s32 %v3070, %v3073
      %vm3075 = vcmp.lt.s32.totalorder %v3074, 0
      %v3076 = vsub.s32 0, %v3074
      %v3077 = vsel %vm3075, %v3076, %v3074
      %v3078 = vclz %v3077
      %v3079 = vsub.s32 %v3078, 2
      %vm3080 = vcmp.gt.s32.totalorder 0, %v3079
      %v3081 = vsel %vm3080, 0, %v3079
      %v3082 = vsub.s32 32, %v3081
      %v3083 = vshll.u32 %v3074, %v3081
      %v3084 = vshrl.u32 %v3066, %v3082
      %v3085 = vor.u32 %v3083, %v3084
      %v3086 = vsub.s32 4294967266, %v3081
      %v3087 = vadd.s32 %v3086, 127
      %v3088 = vshll.u32 %v3087, 23
      %v3089 = vor.u32 4788187, %v3088
      %v3090 = vand.u32 2147483647, %v3089
      %v3092 = vcvt.s32.f32 %v3085
      %v3093 = vmul.f32 %v3092, %v3090
      %v3094 = vxor.u32 %v3093, 2147483648
      %v3095 = vsel %vm2974, %v3094, %v3093
      %v3096 = vsub.s32 4, %v3072
      %v3097 = vsel %vm2974, %v3096, %v3072
      %v3098 = vsel %vm2973, %v2811, %v3095
      %v3099 = vsel %vm2973, 0, %v3097
      %v3100 = vmul.f32 %v3098, %v3098
      %v3101 = vmul.f32 %v3100, -0.001358992
      %v3102 = vadd.f32 %v3101, 0.041655596
      %v3103 = vmul.f32 %v3100, %v3102
      %v3104 = vadd.f32 %v3103, -0.4999988
      %v3105 = vmul.f32 %v3100, %v3104
      %v3106 = vadd.f32 1.0, %v3105
      %v3107 = vmul.f32 %v3098, %v3098
      %v3108 = vmul.f32 %v3107, -0.00019511016
      %v3109 = vadd.f32 %v3108, 0.008332121
      %v3110 = vmul.f32 %v3107, %v3109
      %v3111 = vadd.f32 %v3110, -0.16666654
      %v3112 = vmul.f32 %v3107, %v3111
      %v3113 = vadd.f32 %v3112, 1.0
      %v3114 = vmul.f32 %v3113, %v3098
      %vm3115 = vweird.f32 %v2811
      %v3116 = vand.u32 %v3099, 3
      %vm3117 = vcmp.lt.s32.totalorder %v3116, 2
      %vm3118 = vcmp.eq.s32.totalorder %v3116, 0
      %v3119 = vxor.u32 %v3114, 2147483648
      %v3120 = vsel %vm3118, %v3106, %v3119
      %vm3121 = vcmp.eq.s32.totalorder %v3116, 2
      %v3122 = vxor.u32 %v3106, 2147483648
      %v3123 = vsel %vm3121, %v3122, %v3114
      %v3124 = vsel %vm3117, %v3120, %v3123
      %v3125 = vsel %vm3115, nan, %v3124
      %v3126 = vand.u32 2147483647, %v2812
      %vm3127 = vcmp.le.f32.partialorder %v3126, 0.7853982
      %vm3128 = vcmp.lt.s32.totalorder %v2812, 0
      %v3129 = vand.u32 %v2812, 2139095040
      %v3130 = vshrl.u32 %v3129, 23
      %v3131 = vsub.s32 %v3130, 127
      %v3132 = vand.u32 2147483647, %v2812
      %v3133 = vand.u32 %v3132, 8388607
      %v3134 = vor.u32 %v3133, 8388608
      %v3135 = vsub.s32 0, %v3134
      %v3136 = vadd.s32 %v3131, 1
      %vm3137 = vcmp.gt.s32.totalorder %v3136, 0
      %v3138 = vsel %vm3137, %v3136, 0
      %v3139 = vshrl.u32 %v3138, 5
      %v3140 = vand.u32 %v3138, 31
      %v3141 = vsub.s32 32, %v3140
      %v3142 = vshrl.u32 683565275, %v3141
      %v3143 = vshll.u32 683565275, %v3140
      %v3144 = vshrl.u32 2475754826, %v3141
      %v3145 = vor.u32 %v3143, %v3144
      %v3146 = vshll.u32 2475754826, %v3140
      %v3147 = vshrl.u32 2131351028, %v3141
      %v3148 = vor.u32 %v3146, %v3147
      %v3149 = vshll.u32 2131351028, %v3140
      %v3150 = vshrl.u32 2102212464, %v3141
      %v3151 = vor.u32 %v3149, %v3150
      %v3152 = vshll.u32 2102212464, %v3140
      %v3153 = vshrl.u32 920167782, %v3141
      %v3154 = vor.u32 %v3152, %v3153
      %v3155 = vshll.u32 920167782, %v3140
      %v3156 = vshrl.u32 1326507024, %v3141
      %v3157 = vor.u32 %v3155, %v3156
      %vm3158 = vcmp.lt.s32.totalorder %v3139, 1
      %vm3159 = vcmp.lt.s32.totalorder %v3139, 2
      %vm3160 = vcmp.lt.s32.totalorder %v3139, 3
      %vm3161 = vcmp.lt.s32.totalorder %v3139, 4
      %v3162 = vsel %vm3158, %v3142, %v3145
      %v3163 = vsel %vm3161, %v3151, 2102212464
      %v3164 = vsel %vm3160, %v3148, %v3163
      %v3165 = vsel %vm3159, %v3162, %v3164
      %v3166 = vsel %vm3158, %v3145, %v3148
      %v3167 = vsel %vm3161, %v3154, 920167782
      %v3168 = vsel %vm3160, %v3151, %v3167
      %v3169 = vsel %vm3159, %v3166, %v3168
      %v3170 = vsel %vm3158, %v3148, %v3151
      %v3171 = vsel %vm3161, %v3157, 1326507024
      %v3172 = vsel %vm3160, %v3154, %v3171
      %v3173 = vsel %vm3159, %v3170, %v3172
      %v3174 = vshll.u32 %v3134, 8
      %v3175 = vand.u32 %v3174, 65535
      %v3176 = vshrl.u32 %v3174, 16
      %v3177 = vand.u32 %v3173, 65535
      %v3178 = vshrl.u32 %v3173, 16
      %v3179 = vmul.u32 %v3175, %v3177
      %v3180 = vmul.u32 %v3175, %v3178
      %v3181 = vmul.u32 %v3176, %v3177
      %v3182 = vmul.u32 %v3176, %v3178
      %v3183 = vshll.u32 %v3180, 16
      %v3184 = vshrl.u32 %v3180, 16
      %v3185 = vshll.u32 %v3181, 16
      %v3186 = vshrl.u32 %v3181, 16
      %vm3187 = vc.u32 %v3179, %v3183
      %v3188 = vsel %vm3187, 1, 0
      %v3189 = vadd.s32 %v3179, %v3183
      %v3190 = vadd.s32 %v3182, %v3188
      %vm3191 = vc.u32 %v3189, %v3185
      %v3192 = vsel %vm3191, 1, 0
      %v3193 = vadd.s32 %v3189, %v3185
      %v3194 = vadd.s32 %v3190, %v3192
      %v3195 = vadd.s32 %v3194, %v3184
      %v3196 = vadd.s32 %v3195, %v3186
      %v3197 = vand.u32 %v3174, 65535
      %v3198 = vshrl.u32 %v3174, 16
      %v3199 = vand.u32 %v3169, 65535
      %v3200 = vshrl.u32 %v3169, 16
      %v3201 = vmul.u32 %v3197, %v3199
      %v3202 = vmul.u32 %v3197, %v3200
      %v3203 = vmul.u32 %v3198, %v3199
      %v3204 = vmul.u32 %v3198, %v3200
      %v3205 = vshll.u32 %v3202, 16
      %v3206 = vshrl.u32 %v3202, 16
      %v3207 = vshll.u32 %v3203, 16
      %v3208 = vshrl.u32 %v3203, 16
      %vm3209 = vc.u32 %v3201, %v3205
      %v3210 = vsel %vm3209, 1, 0
      %v3211 = vadd.s32 %v3201, %v3205
      %v3212 = vadd.s32 %v3204, %v3210
      %vm3213 = vc.u32 %v3211, %v3207
      %v3214 = vsel %vm3213, 1, 0
      %v3215 = vadd.s32 %v3211, %v3207
      %v3216 = vadd.s32 %v3212, %v3214
      %v3217 = vadd.s32 %v3216, %v3206
      %v3218 = vadd.s32 %v3217, %v3208
      %v3219 = vmul.u32 %v3174, %v3165
      %v3220 = vadd.s32 %v3196, %v3215
      %vm3221 = vc.u32 %v3196, %v3215
      %v3222 = vadd.s32 %v3218, 1
      %v3223 = vsel %vm3221, %v3222, %v3218
      %v3224 = vadd.s32 %v3219, %v3223
      %v3225 = vadd.s32 %v3224, 536870912
      %v3226 = vshrl.u32 %v3225, 30
      %v3227 = vshll.u32 %v3226, 30
      %v3228 = vsub.s32 %v3224, %v3227
      %vm3229 = vcmp.lt.s32.totalorder %v3228, 0
      %v3230 = vsub.s32 0, %v3228
      %v3231 = vsel %vm3229, %v3230, %v3228
      %v3232 = vclz %v3231
      %v3233 = vsub.s32 %v3232, 2
      %vm3234 = vcmp.gt.s32.totalorder 0, %v3233
      %v3235 = vsel %vm3234, 0, %v3233
      %v3236 = vsub.s32 32, %v3235
      %v3237 = vshll.u32 %v3228, %v3235
      %v3238 = vshrl.u32 %v3220, %v3236
      %v3239 = vor.u32 %v3237, %v3238
      %v3240 = vsub.s32 4294967266, %v3235
      %v3241 = vadd.s32 %v3240, 127
      %v3242 = vshll.u32 %v3241, 23
      %v3243 = vor.u32 4788187, %v3242
      %v3244 = vand.u32 2147483647, %v3243
      %v3246 = vcvt.s32.f32 %v3239
      %v3247 = vmul.f32 %v3246, %v3244
      %v3248 = vxor.u32 %v3247, 2147483648
      %v3249 = vsel %vm3128, %v3248, %v3247
      %v3250 = vsub.s32 4, %v3226
      %v3251 = vsel %vm3128, %v3250, %v3226
      %v3252 = vsel %vm3127, %v2812, %v3249
      %v3253 = vsel %vm3127, 0, %v3251
      %v3254 = vmul.f32 %v3252, %v3252
      %v3255 = vmul.f32 %v3254, -0.001358992
      %v3256 = vadd.f32 %v3255, 0.041655596
      %v3257 = vmul.f32 %v3254, %v3256
      %v3258 = vadd.f32 %v3257, -0.4999988
      %v3259 = vmul.f32 %v3254, %v3258
      %v3260 = vadd.f32 1.0, %v3259
      %v3261 = vmul.f32 %v3252, %v3252
      %v3262 = vmul.f32 %v3261, -0.00019511016
      %v3263 = vadd.f32 %v3262, 0.008332121
      %v3264 = vmul.f32 %v3261, %v3263
      %v3265 = vadd.f32 %v3264, -0.16666654
      %v3266 = vmul.f32 %v3261, %v3265
      %v3267 = vadd.f32 %v3266, 1.0
      %v3268 = vmul.f32 %v3267, %v3252
      %vm3269 = vweird.f32 %v2812
      %v3270 = vand.u32 %v3253, 3
      %vm3271 = vcmp.lt.s32.totalorder %v3270, 2
      %vm3272 = vcmp.eq.s32.totalorder %v3270, 0
      %v3273 = vxor.u32 %v3268, 2147483648
      %v3274 = vsel %vm3272, %v3260, %v3273
      %vm3275 = vcmp.eq.s32.totalorder %v3270, 2
      %v3276 = vxor.u32 %v3260, 2147483648
      %v3277 = vsel %vm3275, %v3276, %v3268
      %v3278 = vsel %vm3271, %v3274, %v3277
      %v3279 = vsel %vm3269, nan, %v3278
      %v3280 = vand.u32 2147483647, %v2813
      %vm3281 = vcmp.le.f32.partialorder %v3280, 0.7853982
      %vm3282 = vcmp.lt.s32.totalorder %v2813, 0
      %v3283 = vand.u32 %v2813, 2139095040
      %v3284 = vshrl.u32 %v3283, 23
      %v3285 = vsub.s32 %v3284, 127
      %v3286 = vand.u32 2147483647, %v2813
      %v3287 = vand.u32 %v3286, 8388607
      %v3288 = vor.u32 %v3287, 8388608
      %v3289 = vsub.s32 0, %v3288
      %v3290 = vadd.s32 %v3285, 1
      %vm3291 = vcmp.gt.s32.totalorder %v3290, 0
      %v3292 = vsel %vm3291, %v3290, 0
      %v3293 = vshrl.u32 %v3292, 5
      %v3294 = vand.u32 %v3292, 31
      %v3295 = vsub.s32 32, %v3294
      %v3296 = vshrl.u32 683565275, %v3295
      %v3297 = vshll.u32 683565275, %v3294
      %v3298 = vshrl.u32 2475754826, %v3295
      %v3299 = vor.u32 %v3297, %v3298
      %v3300 = vshll.u32 2475754826, %v3294
      %v3301 = vshrl.u32 2131351028, %v3295
      %v3302 = vor.u32 %v3300, %v3301
      %v3303 = vshll.u32 2131351028, %v3294
      %v3304 = vshrl.u32 2102212464, %v3295
      %v3305 = vor.u32 %v3303, %v3304
      %v3306 = vshll.u32 2102212464, %v3294
      %v3307 = vshrl.u32 920167782, %v3295
      %v3308 = vor.u32 %v3306, %v3307
      %v3309 = vshll.u32 920167782, %v3294
      %v3310 = vshrl.u32 1326507024, %v3295
      %v3311 = vor.u32 %v3309, %v3310
      %vm3312 = vcmp.lt.s32.totalorder %v3293, 1
      %vm3313 = vcmp.lt.s32.totalorder %v3293, 2
      %vm3314 = vcmp.lt.s32.totalorder %v3293, 3
      %vm3315 = vcmp.lt.s32.totalorder %v3293, 4
      %v3316 = vsel %vm3312, %v3296, %v3299
      %v3317 = vsel %vm3315, %v3305, 2102212464
      %v3318 = vsel %vm3314, %v3302, %v3317
      %v3319 = vsel %vm3313, %v3316, %v3318
      %v3320 = vsel %vm3312, %v3299, %v3302
      %v3321 = vsel %vm3315, %v3308, 920167782
      %v3322 = vsel %vm3314, %v3305, %v3321
      %v3323 = vsel %vm3313, %v3320, %v3322
      %v3324 = vsel %vm3312, %v3302, %v3305
      %v3325 = vsel %vm3315, %v3311, 1326507024
      %v3326 = vsel %vm3314, %v3308, %v3325
      %v3327 = vsel %vm3313, %v3324, %v3326
      %v3328 = vshll.u32 %v3288, 8
      %v3329 = vand.u32 %v3328, 65535
      %v3330 = vshrl.u32 %v3328, 16
      %v3331 = vand.u32 %v3327, 65535
      %v3332 = vshrl.u32 %v3327, 16
      %v3333 = vmul.u32 %v3329, %v3331
      %v3334 = vmul.u32 %v3329, %v3332
      %v3335 = vmul.u32 %v3330, %v3331
      %v3336 = vmul.u32 %v3330, %v3332
      %v3337 = vshll.u32 %v3334, 16
      %v3338 = vshrl.u32 %v3334, 16
      %v3339 = vshll.u32 %v3335, 16
      %v3340 = vshrl.u32 %v3335, 16
      %vm3341 = vc.u32 %v3333, %v3337
      %v3342 = vsel %vm3341, 1, 0
      %v3343 = vadd.s32 %v3333, %v3337
      %v3344 = vadd.s32 %v3336, %v3342
      %vm3345 = vc.u32 %v3343, %v3339
      %v3346 = vsel %vm3345, 1, 0
      %v3347 = vadd.s32 %v3343, %v3339
      %v3348 = vadd.s32 %v3344, %v3346
      %v3349 = vadd.s32 %v3348, %v3338
      %v3350 = vadd.s32 %v3349, %v3340
      %v3351 = vand.u32 %v3328, 65535
      %v3352 = vshrl.u32 %v3328, 16
      %v3353 = vand.u32 %v3323, 65535
      %v3354 = vshrl.u32 %v3323, 16
      %v3355 = vmul.u32 %v3351, %v3353
      %v3356 = vmul.u32 %v3351, %v3354
      %v3357 = vmul.u32 %v3352, %v3353
      %v3358 = vmul.u32 %v3352, %v3354
      %v3359 = vshll.u32 %v3356, 16
      %v3360 = vshrl.u32 %v3356, 16
      %v3361 = vshll.u32 %v3357, 16
      %v3362 = vshrl.u32 %v3357, 16
      %vm3363 = vc.u32 %v3355, %v3359
      %v3364 = vsel %vm3363, 1, 0
      %v3365 = vadd.s32 %v3355, %v3359
      %v3366 = vadd.s32 %v3358, %v3364
      %vm3367 = vc.u32 %v3365, %v3361
      %v3368 = vsel %vm3367, 1, 0
      %v3369 = vadd.s32 %v3365, %v3361
      %v3370 = vadd.s32 %v3366, %v3368
      %v3371 = vadd.s32 %v3370, %v3360
      %v3372 = vadd.s32 %v3371, %v3362
      %v3373 = vmul.u32 %v3328, %v3319
      %v3374 = vadd.s32 %v3350, %v3369
      %vm3375 = vc.u32 %v3350, %v3369
      %v3376 = vadd.s32 %v3372, 1
      %v3377 = vsel %vm3375, %v3376, %v3372
      %v3378 = vadd.s32 %v3373, %v3377
      %v3379 = vadd.s32 %v3378, 536870912
      %v3380 = vshrl.u32 %v3379, 30
      %v3381 = vshll.u32 %v3380, 30
      %v3382 = vsub.s32 %v3378, %v3381
      %vm3383 = vcmp.lt.s32.totalorder %v3382, 0
      %v3384 = vsub.s32 0, %v3382
      %v3385 = vsel %vm3383, %v3384, %v3382
      %v3386 = vclz %v3385
      %v3387 = vsub.s32 %v3386, 2
      %vm3388 = vcmp.gt.s32.totalorder 0, %v3387
      %v3389 = vsel %vm3388, 0, %v3387
      %v3390 = vsub.s32 32, %v3389
      %v3391 = vshll.u32 %v3382, %v3389
      %v3392 = vshrl.u32 %v3374, %v3390
      %v3393 = vor.u32 %v3391, %v3392
      %v3394 = vsub.s32 4294967266, %v3389
      %v3395 = vadd.s32 %v3394, 127
      %v3396 = vshll.u32 %v3395, 23
      %v3397 = vor.u32 4788187, %v3396
      %v3398 = vand.u32 2147483647, %v3397
      %v3400 = vcvt.s32.f32 %v3393
      %v3401 = vmul.f32 %v3400, %v3398
      %v3402 = vxor.u32 %v3401, 2147483648
      %v3403 = vsel %vm3282, %v3402, %v3401
      %v3404 = vsub.s32 4, %v3380
      %v3405 = vsel %vm3282, %v3404, %v3380
      %v3406 = vsel %vm3281, %v2813, %v3403
      %v3407 = vsel %vm3281, 0, %v3405
      %v3408 = vmul.f32 %v3406, %v3406
      %v3409 = vmul.f32 %v3408, -0.001358992
      %v3410 = vadd.f32 %v3409, 0.041655596
      %v3411 = vmul.f32 %v3408, %v3410
      %v3412 = vadd.f32 %v3411, -0.4999988
      %v3413 = vmul.f32 %v3408, %v3412
      %v3414 = vadd.f32 1.0, %v3413
      %v3415 = vmul.f32 %v3406, %v3406
      %v3416 = vmul.f32 %v3415, -0.00019511016
      %v3417 = vadd.f32 %v3416, 0.008332121
      %v3418 = vmul.f32 %v3415, %v3417
      %v3419 = vadd.f32 %v3418, -0.16666654
      %v3420 = vmul.f32 %v3415, %v3419
      %v3421 = vadd.f32 %v3420, 1.0
      %v3422 = vmul.f32 %v3421, %v3406
      %vm3423 = vweird.f32 %v2813
      %v3424 = vand.u32 %v3407, 3
      %vm3425 = vcmp.lt.s32.totalorder %v3424, 2
      %vm3426 = vcmp.eq.s32.totalorder %v3424, 0
      %v3427 = vxor.u32 %v3422, 2147483648
      %v3428 = vsel %vm3426, %v3414, %v3427
      %vm3429 = vcmp.eq.s32.totalorder %v3424, 2
      %v3430 = vxor.u32 %v3414, 2147483648
      %v3431 = vsel %vm3429, %v3430, %v3422
      %v3432 = vsel %vm3425, %v3428, %v3431
      %v3433 = vsel %vm3423, nan, %v3432
      %v3434 = vand.u32 2147483647, %v2814
      %vm3435 = vcmp.le.f32.partialorder %v3434, 0.7853982
      %vm3436 = vcmp.lt.s32.totalorder %v2814, 0
      %v3437 = vand.u32 %v2814, 2139095040
      %v3438 = vshrl.u32 %v3437, 23
      %v3439 = vsub.s32 %v3438, 127
      %v3440 = vand.u32 2147483647, %v2814
      %v3441 = vand.u32 %v3440, 8388607
      %v3442 = vor.u32 %v3441, 8388608
      %v3443 = vsub.s32 0, %v3442
      %v3444 = vadd.s32 %v3439, 1
      %vm3445 = vcmp.gt.s32.totalorder %v3444, 0
      %v3446 = vsel %vm3445, %v3444, 0
      %v3447 = vshrl.u32 %v3446, 5
      %v3448 = vand.u32 %v3446, 31
      %v3449 = vsub.s32 32, %v3448
      %v3450 = vshrl.u32 683565275, %v3449
      %v3451 = vshll.u32 683565275, %v3448
      %v3452 = vshrl.u32 2475754826, %v3449
      %v3453 = vor.u32 %v3451, %v3452
      %v3454 = vshll.u32 2475754826, %v3448
      %v3455 = vshrl.u32 2131351028, %v3449
      %v3456 = vor.u32 %v3454, %v3455
      %v3457 = vshll.u32 2131351028, %v3448
      %v3458 = vshrl.u32 2102212464, %v3449
      %v3459 = vor.u32 %v3457, %v3458
      %v3460 = vshll.u32 2102212464, %v3448
      %v3461 = vshrl.u32 920167782, %v3449
      %v3462 = vor.u32 %v3460, %v3461
      %v3463 = vshll.u32 920167782, %v3448
      %v3464 = vshrl.u32 1326507024, %v3449
      %v3465 = vor.u32 %v3463, %v3464
      %vm3466 = vcmp.lt.s32.totalorder %v3447, 1
      %vm3467 = vcmp.lt.s32.totalorder %v3447, 2
      %vm3468 = vcmp.lt.s32.totalorder %v3447, 3
      %vm3469 = vcmp.lt.s32.totalorder %v3447, 4
      %v3470 = vsel %vm3466, %v3450, %v3453
      %v3471 = vsel %vm3469, %v3459, 2102212464
      %v3472 = vsel %vm3468, %v3456, %v3471
      %v3473 = vsel %vm3467, %v3470, %v3472
      %v3474 = vsel %vm3466, %v3453, %v3456
      %v3475 = vsel %vm3469, %v3462, 920167782
      %v3476 = vsel %vm3468, %v3459, %v3475
      %v3477 = vsel %vm3467, %v3474, %v3476
      %v3478 = vsel %vm3466, %v3456, %v3459
      %v3479 = vsel %vm3469, %v3465, 1326507024
      %v3480 = vsel %vm3468, %v3462, %v3479
      %v3481 = vsel %vm3467, %v3478, %v3480
      %v3482 = vshll.u32 %v3442, 8
      %v3483 = vand.u32 %v3482, 65535
      %v3484 = vshrl.u32 %v3482, 16
      %v3485 = vand.u32 %v3481, 65535
      %v3486 = vshrl.u32 %v3481, 16
      %v3487 = vmul.u32 %v3483, %v3485
      %v3488 = vmul.u32 %v3483, %v3486
      %v3489 = vmul.u32 %v3484, %v3485
      %v3490 = vmul.u32 %v3484, %v3486
      %v3491 = vshll.u32 %v3488, 16
      %v3492 = vshrl.u32 %v3488, 16
      %v3493 = vshll.u32 %v3489, 16
      %v3494 = vshrl.u32 %v3489, 16
      %vm3495 = vc.u32 %v3487, %v3491
      %v3496 = vsel %vm3495, 1, 0
      %v3497 = vadd.s32 %v3487, %v3491
      %v3498 = vadd.s32 %v3490, %v3496
      %vm3499 = vc.u32 %v3497, %v3493
      %v3500 = vsel %vm3499, 1, 0
      %v3501 = vadd.s32 %v3497, %v3493
      %v3502 = vadd.s32 %v3498, %v3500
      %v3503 = vadd.s32 %v3502, %v3492
      %v3504 = vadd.s32 %v3503, %v3494
      %v3505 = vand.u32 %v3482, 65535
      %v3506 = vshrl.u32 %v3482, 16
      %v3507 = vand.u32 %v3477, 65535
      %v3508 = vshrl.u32 %v3477, 16
      %v3509 = vmul.u32 %v3505, %v3507
      %v3510 = vmul.u32 %v3505, %v3508
      %v3511 = vmul.u32 %v3506, %v3507
      %v3512 = vmul.u32 %v3506, %v3508
      %v3513 = vshll.u32 %v3510, 16
      %v3514 = vshrl.u32 %v3510, 16
      %v3515 = vshll.u32 %v3511, 16
      %v3516 = vshrl.u32 %v3511, 16
      %vm3517 = vc.u32 %v3509, %v3513
      %v3518 = vsel %vm3517, 1, 0
      %v3519 = vadd.s32 %v3509, %v3513
      %v3520 = vadd.s32 %v3512, %v3518
      %vm3521 = vc.u32 %v3519, %v3515
      %v3522 = vsel %vm3521, 1, 0
      %v3523 = vadd.s32 %v3519, %v3515
      %v3524 = vadd.s32 %v3520, %v3522
      %v3525 = vadd.s32 %v3524, %v3514
      %v3526 = vadd.s32 %v3525, %v3516
      %v3527 = vmul.u32 %v3482, %v3473
      %v3528 = vadd.s32 %v3504, %v3523
      %vm3529 = vc.u32 %v3504, %v3523
      %v3530 = vadd.s32 %v3526, 1
      %v3531 = vsel %vm3529, %v3530, %v3526
      %v3532 = vadd.s32 %v3527, %v3531
      %v3533 = vadd.s32 %v3532, 536870912
      %v3534 = vshrl.u32 %v3533, 30
      %v3535 = vshll.u32 %v3534, 30
      %v3536 = vsub.s32 %v3532, %v3535
      %vm3537 = vcmp.lt.s32.totalorder %v3536, 0
      %v3538 = vsub.s32 0, %v3536
      %v3539 = vsel %vm3537, %v3538, %v3536
      %v3540 = vclz %v3539
      %v3541 = vsub.s32 %v3540, 2
      %vm3542 = vcmp.gt.s32.totalorder 0, %v3541
      %v3543 = vsel %vm3542, 0, %v3541
      %v3544 = vsub.s32 32, %v3543
      %v3545 = vshll.u32 %v3536, %v3543
      %v3546 = vshrl.u32 %v3528, %v3544
      %v3547 = vor.u32 %v3545, %v3546
      %v3548 = vsub.s32 4294967266, %v3543
      %v3549 = vadd.s32 %v3548, 127
      %v3550 = vshll.u32 %v3549, 23
      %v3551 = vor.u32 4788187, %v3550
      %v3552 = vand.u32 2147483647, %v3551
      %v3554 = vcvt.s32.f32 %v3547
      %v3555 = vmul.f32 %v3554, %v3552
      %v3556 = vxor.u32 %v3555, 2147483648
      %v3557 = vsel %vm3436, %v3556, %v3555
      %v3558 = vsub.s32 4, %v3534
      %v3559 = vsel %vm3436, %v3558, %v3534
      %v3560 = vsel %vm3435, %v2814, %v3557
      %v3561 = vsel %vm3435, 0, %v3559
      %v3562 = vmul.f32 %v3560, %v3560
      %v3563 = vmul.f32 %v3562, -0.001358992
      %v3564 = vadd.f32 %v3563, 0.041655596
      %v3565 = vmul.f32 %v3562, %v3564
      %v3566 = vadd.f32 %v3565, -0.4999988
      %v3567 = vmul.f32 %v3562, %v3566
      %v3568 = vadd.f32 1.0, %v3567
      %v3569 = vmul.f32 %v3560, %v3560
      %v3570 = vmul.f32 %v3569, -0.00019511016
      %v3571 = vadd.f32 %v3570, 0.008332121
      %v3572 = vmul.f32 %v3569, %v3571
      %v3573 = vadd.f32 %v3572, -0.16666654
      %v3574 = vmul.f32 %v3569, %v3573
      %v3575 = vadd.f32 %v3574, 1.0
      %v3576 = vmul.f32 %v3575, %v3560
      %vm3577 = vweird.f32 %v2814
      %v3578 = vand.u32 %v3561, 3
      %vm3579 = vcmp.lt.s32.totalorder %v3578, 2
      %vm3580 = vcmp.eq.s32.totalorder %v3578, 0
      %v3581 = vxor.u32 %v3576, 2147483648
      %v3582 = vsel %vm3580, %v3568, %v3581
      %vm3583 = vcmp.eq.s32.totalorder %v3578, 2
      %v3584 = vxor.u32 %v3568, 2147483648
      %v3585 = vsel %vm3583, %v3584, %v3576
      %v3586 = vsel %vm3579, %v3582, %v3585
      %v3587 = vsel %vm3577, nan, %v3586
      %v3588 = vand.u32 2147483647, %v2815
      %vm3589 = vcmp.le.f32.partialorder %v3588, 0.7853982
      %vm3590 = vcmp.lt.s32.totalorder %v2815, 0
      %v3591 = vand.u32 %v2815, 2139095040
      %v3592 = vshrl.u32 %v3591, 23
      %v3593 = vsub.s32 %v3592, 127
      %v3594 = vand.u32 2147483647, %v2815
      %v3595 = vand.u32 %v3594, 8388607
      %v3596 = vor.u32 %v3595, 8388608
      %v3597 = vsub.s32 0, %v3596
      %v3598 = vadd.s32 %v3593, 1
      %vm3599 = vcmp.gt.s32.totalorder %v3598, 0
      %v3600 = vsel %vm3599, %v3598, 0
      %v3601 = vshrl.u32 %v3600, 5
      %v3602 = vand.u32 %v3600, 31
      %v3603 = vsub.s32 32, %v3602
      %v3604 = vshrl.u32 683565275, %v3603
      %v3605 = vshll.u32 683565275, %v3602
      %v3606 = vshrl.u32 2475754826, %v3603
      %v3607 = vor.u32 %v3605, %v3606
      %v3608 = vshll.u32 2475754826, %v3602
      %v3609 = vshrl.u32 2131351028, %v3603
      %v3610 = vor.u32 %v3608, %v3609
      %v3611 = vshll.u32 2131351028, %v3602
      %v3612 = vshrl.u32 2102212464, %v3603
      %v3613 = vor.u32 %v3611, %v3612
      %v3614 = vshll.u32 2102212464, %v3602
      %v3615 = vshrl.u32 920167782, %v3603
      %v3616 = vor.u32 %v3614, %v3615
      %v3617 = vshll.u32 920167782, %v3602
      %v3618 = vshrl.u32 1326507024, %v3603
      %v3619 = vor.u32 %v3617, %v3618
      %vm3620 = vcmp.lt.s32.totalorder %v3601, 1
      %vm3621 = vcmp.lt.s32.totalorder %v3601, 2
      %vm3622 = vcmp.lt.s32.totalorder %v3601, 3
      %vm3623 = vcmp.lt.s32.totalorder %v3601, 4
      %v3624 = vsel %vm3620, %v3604, %v3607
      %v3625 = vsel %vm3623, %v3613, 2102212464
      %v3626 = vsel %vm3622, %v3610, %v3625
      %v3627 = vsel %vm3621, %v3624, %v3626
      %v3628 = vsel %vm3620, %v3607, %v3610
      %v3629 = vsel %vm3623, %v3616, 920167782
      %v3630 = vsel %vm3622, %v3613, %v3629
      %v3631 = vsel %vm3621, %v3628, %v3630
      %v3632 = vsel %vm3620, %v3610, %v3613
      %v3633 = vsel %vm3623, %v3619, 1326507024
      %v3634 = vsel %vm3622, %v3616, %v3633
      %v3635 = vsel %vm3621, %v3632, %v3634
      %v3636 = vshll.u32 %v3596, 8
      %v3637 = vand.u32 %v3636, 65535
      %v3638 = vshrl.u32 %v3636, 16
      %v3639 = vand.u32 %v3635, 65535
      %v3640 = vshrl.u32 %v3635, 16
      %v3641 = vmul.u32 %v3637, %v3639
      %v3642 = vmul.u32 %v3637, %v3640
      %v3643 = vmul.u32 %v3638, %v3639
      %v3644 = vmul.u32 %v3638, %v3640
      %v3645 = vshll.u32 %v3642, 16
      %v3646 = vshrl.u32 %v3642, 16
      %v3647 = vshll.u32 %v3643, 16
      %v3648 = vshrl.u32 %v3643, 16
      %vm3649 = vc.u32 %v3641, %v3645
      %v3650 = vsel %vm3649, 1, 0
      %v3651 = vadd.s32 %v3641, %v3645
      %v3652 = vadd.s32 %v3644, %v3650
      %vm3653 = vc.u32 %v3651, %v3647
      %v3654 = vsel %vm3653, 1, 0
      %v3655 = vadd.s32 %v3651, %v3647
      %v3656 = vadd.s32 %v3652, %v3654
      %v3657 = vadd.s32 %v3656, %v3646
      %v3658 = vadd.s32 %v3657, %v3648
      %v3659 = vand.u32 %v3636, 65535
      %v3660 = vshrl.u32 %v3636, 16
      %v3661 = vand.u32 %v3631, 65535
      %v3662 = vshrl.u32 %v3631, 16
      %v3663 = vmul.u32 %v3659, %v3661
      %v3664 = vmul.u32 %v3659, %v3662
      %v3665 = vmul.u32 %v3660, %v3661
      %v3666 = vmul.u32 %v3660, %v3662
      %v3667 = vshll.u32 %v3664, 16
      %v3668 = vshrl.u32 %v3664, 16
      %v3669 = vshll.u32 %v3665, 16
      %v3670 = vshrl.u32 %v3665, 16
      %vm3671 = vc.u32 %v3663, %v3667
      %v3672 = vsel %vm3671, 1, 0
      %v3673 = vadd.s32 %v3663, %v3667
      %v3674 = vadd.s32 %v3666, %v3672
      %vm3675 = vc.u32 %v3673, %v3669
      %v3676 = vsel %vm3675, 1, 0
      %v3677 = vadd.s32 %v3673, %v3669
      %v3678 = vadd.s32 %v3674, %v3676
      %v3679 = vadd.s32 %v3678, %v3668
      %v3680 = vadd.s32 %v3679, %v3670
      %v3681 = vmul.u32 %v3636, %v3627
      %v3682 = vadd.s32 %v3658, %v3677
      %vm3683 = vc.u32 %v3658, %v3677
      %v3684 = vadd.s32 %v3680, 1
      %v3685 = vsel %vm3683, %v3684, %v3680
      %v3686 = vadd.s32 %v3681, %v3685
      %v3687 = vadd.s32 %v3686, 536870912
      %v3688 = vshrl.u32 %v3687, 30
      %v3689 = vshll.u32 %v3688, 30
      %v3690 = vsub.s32 %v3686, %v3689
      %vm3691 = vcmp.lt.s32.totalorder %v3690, 0
      %v3692 = vsub.s32 0, %v3690
      %v3693 = vsel %vm3691, %v3692, %v3690
      %v3694 = vclz %v3693
      %v3695 = vsub.s32 %v3694, 2
      %vm3696 = vcmp.gt.s32.totalorder 0, %v3695
      %v3697 = vsel %vm3696, 0, %v3695
      %v3698 = vsub.s32 32, %v3697
      %v3699 = vshll.u32 %v3690, %v3697
      %v3700 = vshrl.u32 %v3682, %v3698
      %v3701 = vor.u32 %v3699, %v3700
      %v3702 = vsub.s32 4294967266, %v3697
      %v3703 = vadd.s32 %v3702, 127
      %v3704 = vshll.u32 %v3703, 23
      %v3705 = vor.u32 4788187, %v3704
      %v3706 = vand.u32 2147483647, %v3705
      %v3708 = vcvt.s32.f32 %v3701
      %v3709 = vmul.f32 %v3708, %v3706
      %v3710 = vxor.u32 %v3709, 2147483648
      %v3711 = vsel %vm3590, %v3710, %v3709
      %v3712 = vsub.s32 4, %v3688
      %v3713 = vsel %vm3590, %v3712, %v3688
      %v3714 = vsel %vm3589, %v2815, %v3711
      %v3715 = vsel %vm3589, 0, %v3713
      %v3716 = vmul.f32 %v3714, %v3714
      %v3717 = vmul.f32 %v3716, -0.001358992
      %v3718 = vadd.f32 %v3717, 0.041655596
      %v3719 = vmul.f32 %v3716, %v3718
      %v3720 = vadd.f32 %v3719, -0.4999988
      %v3721 = vmul.f32 %v3716, %v3720
      %v3722 = vadd.f32 1.0, %v3721
      %v3723 = vmul.f32 %v3714, %v3714
      %v3724 = vmul.f32 %v3723, -0.00019511016
      %v3725 = vadd.f32 %v3724, 0.008332121
      %v3726 = vmul.f32 %v3723, %v3725
      %v3727 = vadd.f32 %v3726, -0.16666654
      %v3728 = vmul.f32 %v3723, %v3727
      %v3729 = vadd.f32 %v3728, 1.0
      %v3730 = vmul.f32 %v3729, %v3714
      %vm3731 = vweird.f32 %v2815
      %v3732 = vand.u32 %v3715, 3
      %vm3733 = vcmp.lt.s32.totalorder %v3732, 2
      %vm3734 = vcmp.eq.s32.totalorder %v3732, 0
      %v3735 = vxor.u32 %v3730, 2147483648
      %v3736 = vsel %vm3734, %v3722, %v3735
      %vm3737 = vcmp.eq.s32.totalorder %v3732, 2
      %v3738 = vxor.u32 %v3722, 2147483648
      %v3739 = vsel %vm3737, %v3738, %v3730
      %v3740 = vsel %vm3733, %v3736, %v3739
      %v3741 = vsel %vm3731, nan, %v3740
      %v3742 = vand.u32 2147483647, %v2816
      %vm3743 = vcmp.le.f32.partialorder %v3742, 0.7853982
      %vm3744 = vcmp.lt.s32.totalorder %v2816, 0
      %v3745 = vand.u32 %v2816, 2139095040
      %v3746 = vshrl.u32 %v3745, 23
      %v3747 = vsub.s32 %v3746, 127
      %v3748 = vand.u32 2147483647, %v2816
      %v3749 = vand.u32 %v3748, 8388607
      %v3750 = vor.u32 %v3749, 8388608
      %v3751 = vsub.s32 0, %v3750
      %v3752 = vadd.s32 %v3747, 1
      %vm3753 = vcmp.gt.s32.totalorder %v3752, 0
      %v3754 = vsel %vm3753, %v3752, 0
      %v3755 = vshrl.u32 %v3754, 5
      %v3756 = vand.u32 %v3754, 31
      %v3757 = vsub.s32 32, %v3756
      %v3758 = vshrl.u32 683565275, %v3757
      %v3759 = vshll.u32 683565275, %v3756
      %v3760 = vshrl.u32 2475754826, %v3757
      %v3761 = vor.u32 %v3759, %v3760
      %v3762 = vshll.u32 2475754826, %v3756
      %v3763 = vshrl.u32 2131351028, %v3757
      %v3764 = vor.u32 %v3762, %v3763
      %v3765 = vshll.u32 2131351028, %v3756
      %v3766 = vshrl.u32 2102212464, %v3757
      %v3767 = vor.u32 %v3765, %v3766
      %v3768 = vshll.u32 2102212464, %v3756
      %v3769 = vshrl.u32 920167782, %v3757
      %v3770 = vor.u32 %v3768, %v3769
      %v3771 = vshll.u32 920167782, %v3756
      %v3772 = vshrl.u32 1326507024, %v3757
      %v3773 = vor.u32 %v3771, %v3772
      %vm3774 = vcmp.lt.s32.totalorder %v3755, 1
      %vm3775 = vcmp.lt.s32.totalorder %v3755, 2
      %vm3776 = vcmp.lt.s32.totalorder %v3755, 3
      %vm3777 = vcmp.lt.s32.totalorder %v3755, 4
      %v3778 = vsel %vm3774, %v3758, %v3761
      %v3779 = vsel %vm3777, %v3767, 2102212464
      %v3780 = vsel %vm3776, %v3764, %v3779
      %v3781 = vsel %vm3775, %v3778, %v3780
      %v3782 = vsel %vm3774, %v3761, %v3764
      %v3783 = vsel %vm3777, %v3770, 920167782
      %v3784 = vsel %vm3776, %v3767, %v3783
      %v3785 = vsel %vm3775, %v3782, %v3784
      %v3786 = vsel %vm3774, %v3764, %v3767
      %v3787 = vsel %vm3777, %v3773, 1326507024
      %v3788 = vsel %vm3776, %v3770, %v3787
      %v3789 = vsel %vm3775, %v3786, %v3788
      %v3790 = vshll.u32 %v3750, 8
      %v3791 = vand.u32 %v3790, 65535
      %v3792 = vshrl.u32 %v3790, 16
      %v3793 = vand.u32 %v3789, 65535
      %v3794 = vshrl.u32 %v3789, 16
      %v3795 = vmul.u32 %v3791, %v3793
      %v3796 = vmul.u32 %v3791, %v3794
      %v3797 = vmul.u32 %v3792, %v3793
      %v3798 = vmul.u32 %v3792, %v3794
      %v3799 = vshll.u32 %v3796, 16
      %v3800 = vshrl.u32 %v3796, 16
      %v3801 = vshll.u32 %v3797, 16
      %v3802 = vshrl.u32 %v3797, 16
      %vm3803 = vc.u32 %v3795, %v3799
      %v3804 = vsel %vm3803, 1, 0
      %v3805 = vadd.s32 %v3795, %v3799
      %v3806 = vadd.s32 %v3798, %v3804
      %vm3807 = vc.u32 %v3805, %v3801
      %v3808 = vsel %vm3807, 1, 0
      %v3809 = vadd.s32 %v3805, %v3801
      %v3810 = vadd.s32 %v3806, %v3808
      %v3811 = vadd.s32 %v3810, %v3800
      %v3812 = vadd.s32 %v3811, %v3802
      %v3813 = vand.u32 %v3790, 65535
      %v3814 = vshrl.u32 %v3790, 16
      %v3815 = vand.u32 %v3785, 65535
      %v3816 = vshrl.u32 %v3785, 16
      %v3817 = vmul.u32 %v3813, %v3815
      %v3818 = vmul.u32 %v3813, %v3816
      %v3819 = vmul.u32 %v3814, %v3815
      %v3820 = vmul.u32 %v3814, %v3816
      %v3821 = vshll.u32 %v3818, 16
      %v3822 = vshrl.u32 %v3818, 16
      %v3823 = vshll.u32 %v3819, 16
      %v3824 = vshrl.u32 %v3819, 16
      %vm3825 = vc.u32 %v3817, %v3821
      %v3826 = vsel %vm3825, 1, 0
      %v3827 = vadd.s32 %v3817, %v3821
      %v3828 = vadd.s32 %v3820, %v3826
      %vm3829 = vc.u32 %v3827, %v3823
      %v3830 = vsel %vm3829, 1, 0
      %v3831 = vadd.s32 %v3827, %v3823
      %v3832 = vadd.s32 %v3828, %v3830
      %v3833 = vadd.s32 %v3832, %v3822
      %v3834 = vadd.s32 %v3833, %v3824
      %v3835 = vmul.u32 %v3790, %v3781
      %v3836 = vadd.s32 %v3812, %v3831
      %vm3837 = vc.u32 %v3812, %v3831
      %v3838 = vadd.s32 %v3834, 1
      %v3839 = vsel %vm3837, %v3838, %v3834
      %v3840 = vadd.s32 %v3835, %v3839
      %v3841 = vadd.s32 %v3840, 536870912
      %v3842 = vshrl.u32 %v3841, 30
      %v3843 = vshll.u32 %v3842, 30
      %v3844 = vsub.s32 %v3840, %v3843
      %vm3845 = vcmp.lt.s32.totalorder %v3844, 0
      %v3846 = vsub.s32 0, %v3844
      %v3847 = vsel %vm3845, %v3846, %v3844
      %v3848 = vclz %v3847
      %v3849 = vsub.s32 %v3848, 2
      %vm3850 = vcmp.gt.s32.totalorder 0, %v3849
      %v3851 = vsel %vm3850, 0, %v3849
      %v3852 = vsub.s32 32, %v3851
      %v3853 = vshll.u32 %v3844, %v3851
      %v3854 = vshrl.u32 %v3836, %v3852
      %v3855 = vor.u32 %v3853, %v3854
      %v3856 = vsub.s32 4294967266, %v3851
      %v3857 = vadd.s32 %v3856, 127
      %v3858 = vshll.u32 %v3857, 23
      %v3859 = vor.u32 4788187, %v3858
      %v3860 = vand.u32 2147483647, %v3859
      %v3862 = vcvt.s32.f32 %v3855
      %v3863 = vmul.f32 %v3862, %v3860
      %v3864 = vxor.u32 %v3863, 2147483648
      %v3865 = vsel %vm3744, %v3864, %v3863
      %v3866 = vsub.s32 4, %v3842
      %v3867 = vsel %vm3744, %v3866, %v3842
      %v3868 = vsel %vm3743, %v2816, %v3865
      %v3869 = vsel %vm3743, 0, %v3867
      %v3870 = vmul.f32 %v3868, %v3868
      %v3871 = vmul.f32 %v3870, -0.001358992
      %v3872 = vadd.f32 %v3871, 0.041655596
      %v3873 = vmul.f32 %v3870, %v3872
      %v3874 = vadd.f32 %v3873, -0.4999988
      %v3875 = vmul.f32 %v3870, %v3874
      %v3876 = vadd.f32 1.0, %v3875
      %v3877 = vmul.f32 %v3868, %v3868
      %v3878 = vmul.f32 %v3877, -0.00019511016
      %v3879 = vadd.f32 %v3878, 0.008332121
      %v3880 = vmul.f32 %v3877, %v3879
      %v3881 = vadd.f32 %v3880, -0.16666654
      %v3882 = vmul.f32 %v3877, %v3881
      %v3883 = vadd.f32 %v3882, 1.0
      %v3884 = vmul.f32 %v3883, %v3868
      %vm3885 = vweird.f32 %v2816
      %v3886 = vand.u32 %v3869, 3
      %vm3887 = vcmp.lt.s32.totalorder %v3886, 2
      %vm3888 = vcmp.eq.s32.totalorder %v3886, 0
      %v3889 = vxor.u32 %v3884, 2147483648
      %v3890 = vsel %vm3888, %v3876, %v3889
      %vm3891 = vcmp.eq.s32.totalorder %v3886, 2
      %v3892 = vxor.u32 %v3876, 2147483648
      %v3893 = vsel %vm3891, %v3892, %v3884
      %v3894 = vsel %vm3887, %v3890, %v3893
      %v3895 = vsel %vm3885, nan, %v3894
      %v3896 = vand.u32 2147483647, %v2817
      %vm3897 = vcmp.le.f32.partialorder %v3896, 0.7853982
      %vm3898 = vcmp.lt.s32.totalorder %v2817, 0
      %v3899 = vand.u32 %v2817, 2139095040
      %v3900 = vshrl.u32 %v3899, 23
      %v3901 = vsub.s32 %v3900, 127
      %v3902 = vand.u32 2147483647, %v2817
      %v3903 = vand.u32 %v3902, 8388607
      %v3904 = vor.u32 %v3903, 8388608
      %v3905 = vsub.s32 0, %v3904
      %v3906 = vadd.s32 %v3901, 1
      %vm3907 = vcmp.gt.s32.totalorder %v3906, 0
      %v3908 = vsel %vm3907, %v3906, 0
      %v3909 = vshrl.u32 %v3908, 5
      %v3910 = vand.u32 %v3908, 31
      %v3911 = vsub.s32 32, %v3910
      %v3912 = vshrl.u32 683565275, %v3911
      %v3913 = vshll.u32 683565275, %v3910
      %v3914 = vshrl.u32 2475754826, %v3911
      %v3915 = vor.u32 %v3913, %v3914
      %v3916 = vshll.u32 2475754826, %v3910
      %v3917 = vshrl.u32 2131351028, %v3911
      %v3918 = vor.u32 %v3916, %v3917
      %v3919 = vshll.u32 2131351028, %v3910
      %v3920 = vshrl.u32 2102212464, %v3911
      %v3921 = vor.u32 %v3919, %v3920
      %v3922 = vshll.u32 2102212464, %v3910
      %v3923 = vshrl.u32 920167782, %v3911
      %v3924 = vor.u32 %v3922, %v3923
      %v3925 = vshll.u32 920167782, %v3910
      %v3926 = vshrl.u32 1326507024, %v3911
      %v3927 = vor.u32 %v3925, %v3926
      %vm3928 = vcmp.lt.s32.totalorder %v3909, 1
      %vm3929 = vcmp.lt.s32.totalorder %v3909, 2
      %vm3930 = vcmp.lt.s32.totalorder %v3909, 3
      %vm3931 = vcmp.lt.s32.totalorder %v3909, 4
      %v3932 = vsel %vm3928, %v3912, %v3915
      %v3933 = vsel %vm3931, %v3921, 2102212464
      %v3934 = vsel %vm3930, %v3918, %v3933
      %v3935 = vsel %vm3929, %v3932, %v3934
      %v3936 = vsel %vm3928, %v3915, %v3918
      %v3937 = vsel %vm3931, %v3924, 920167782
      %v3938 = vsel %vm3930, %v3921, %v3937
      %v3939 = vsel %vm3929, %v3936, %v3938
      %v3940 = vsel %vm3928, %v3918, %v3921
      %v3941 = vsel %vm3931, %v3927, 1326507024
      %v3942 = vsel %vm3930, %v3924, %v3941
      %v3943 = vsel %vm3929, %v3940, %v3942
      %v3944 = vshll.u32 %v3904, 8
      %v3945 = vand.u32 %v3944, 65535
      %v3946 = vshrl.u32 %v3944, 16
      %v3947 = vand.u32 %v3943, 65535
      %v3948 = vshrl.u32 %v3943, 16
      %v3949 = vmul.u32 %v3945, %v3947
      %v3950 = vmul.u32 %v3945, %v3948
      %v3951 = vmul.u32 %v3946, %v3947
      %v3952 = vmul.u32 %v3946, %v3948
      %v3953 = vshll.u32 %v3950, 16
      %v3954 = vshrl.u32 %v3950, 16
      %v3955 = vshll.u32 %v3951, 16
      %v3956 = vshrl.u32 %v3951, 16
      %vm3957 = vc.u32 %v3949, %v3953
      %v3958 = vsel %vm3957, 1, 0
      %v3959 = vadd.s32 %v3949, %v3953
      %v3960 = vadd.s32 %v3952, %v3958
      %vm3961 = vc.u32 %v3959, %v3955
      %v3962 = vsel %vm3961, 1, 0
      %v3963 = vadd.s32 %v3959, %v3955
      %v3964 = vadd.s32 %v3960, %v3962
      %v3965 = vadd.s32 %v3964, %v3954
      %v3966 = vadd.s32 %v3965, %v3956
      %v3967 = vand.u32 %v3944, 65535
      %v3968 = vshrl.u32 %v3944, 16
      %v3969 = vand.u32 %v3939, 65535
      %v3970 = vshrl.u32 %v3939, 16
      %v3971 = vmul.u32 %v3967, %v3969
      %v3972 = vmul.u32 %v3967, %v3970
      %v3973 = vmul.u32 %v3968, %v3969
      %v3974 = vmul.u32 %v3968, %v3970
      %v3975 = vshll.u32 %v3972, 16
      %v3976 = vshrl.u32 %v3972, 16
      %v3977 = vshll.u32 %v3973, 16
      %v3978 = vshrl.u32 %v3973, 16
      %vm3979 = vc.u32 %v3971, %v3975
      %v3980 = vsel %vm3979, 1, 0
      %v3981 = vadd.s32 %v3971, %v3975
      %v3982 = vadd.s32 %v3974, %v3980
      %vm3983 = vc.u32 %v3981, %v3977
      %v3984 = vsel %vm3983, 1, 0
      %v3985 = vadd.s32 %v3981, %v3977
      %v3986 = vadd.s32 %v3982, %v3984
      %v3987 = vadd.s32 %v3986, %v3976
      %v3988 = vadd.s32 %v3987, %v3978
      %v3989 = vmul.u32 %v3944, %v3935
      %v3990 = vadd.s32 %v3966, %v3985
      %vm3991 = vc.u32 %v3966, %v3985
      %v3992 = vadd.s32 %v3988, 1
      %v3993 = vsel %vm3991, %v3992, %v3988
      %v3994 = vadd.s32 %v3989, %v3993
      %v3995 = vadd.s32 %v3994, 536870912
      %v3996 = vshrl.u32 %v3995, 30
      %v3997 = vshll.u32 %v3996, 30
      %v3998 = vsub.s32 %v3994, %v3997
      %vm3999 = vcmp.lt.s32.totalorder %v3998, 0
      %v4000 = vsub.s32 0, %v3998
      %v4001 = vsel %vm3999, %v4000, %v3998
      %v4002 = vclz %v4001
      %v4003 = vsub.s32 %v4002, 2
      %vm4004 = vcmp.gt.s32.totalorder 0, %v4003
      %v4005 = vsel %vm4004, 0, %v4003
      %v4006 = vsub.s32 32, %v4005
      %v4007 = vshll.u32 %v3998, %v4005
      %v4008 = vshrl.u32 %v3990, %v4006
      %v4009 = vor.u32 %v4007, %v4008
      %v4010 = vsub.s32 4294967266, %v4005
      %v4011 = vadd.s32 %v4010, 127
      %v4012 = vshll.u32 %v4011, 23
      %v4013 = vor.u32 4788187, %v4012
      %v4014 = vand.u32 2147483647, %v4013
      %v4016 = vcvt.s32.f32 %v4009
      %v4017 = vmul.f32 %v4016, %v4014
      %v4018 = vxor.u32 %v4017, 2147483648
      %v4019 = vsel %vm3898, %v4018, %v4017
      %v4020 = vsub.s32 4, %v3996
      %v4021 = vsel %vm3898, %v4020, %v3996
      %v4022 = vsel %vm3897, %v2817, %v4019
      %v4023 = vsel %vm3897, 0, %v4021
      %v4024 = vmul.f32 %v4022, %v4022
      %v4025 = vmul.f32 %v4024, -0.001358992
      %v4026 = vadd.f32 %v4025, 0.041655596
      %v4027 = vmul.f32 %v4024, %v4026
      %v4028 = vadd.f32 %v4027, -0.4999988
      %v4029 = vmul.f32 %v4024, %v4028
      %v4030 = vadd.f32 1.0, %v4029
      %v4031 = vmul.f32 %v4022, %v4022
      %v4032 = vmul.f32 %v4031, -0.00019511016
      %v4033 = vadd.f32 %v4032, 0.008332121
      %v4034 = vmul.f32 %v4031, %v4033
      %v4035 = vadd.f32 %v4034, -0.16666654
      %v4036 = vmul.f32 %v4031, %v4035
      %v4037 = vadd.f32 %v4036, 1.0
      %v4038 = vmul.f32 %v4037, %v4022
      %vm4039 = vweird.f32 %v2817
      %v4040 = vand.u32 %v4023, 3
      %vm4041 = vcmp.lt.s32.totalorder %v4040, 2
      %vm4042 = vcmp.eq.s32.totalorder %v4040, 0
      %v4043 = vxor.u32 %v4038, 2147483648
      %v4044 = vsel %vm4042, %v4030, %v4043
      %vm4045 = vcmp.eq.s32.totalorder %v4040, 2
      %v4046 = vxor.u32 %v4030, 2147483648
      %v4047 = vsel %vm4045, %v4046, %v4038
      %v4048 = vsel %vm4041, %v4044, %v4047
      %v4049 = vsel %vm4039, nan, %v4048
      %v4050 = vand.u32 2147483647, %v2810
      %vm4051 = vcmp.le.f32.partialorder %v4050, 0.7853982
      %vm4052 = vcmp.lt.s32.totalorder %v2810, 0
      %v4053 = vand.u32 %v2810, 2139095040
      %v4054 = vshrl.u32 %v4053, 23
      %v4055 = vsub.s32 %v4054, 127
      %v4056 = vand.u32 2147483647, %v2810
      %v4057 = vand.u32 %v4056, 8388607
      %v4058 = vor.u32 %v4057, 8388608
      %v4059 = vsub.s32 0, %v4058
      %v4060 = vadd.s32 %v4055, 1
      %vm4061 = vcmp.gt.s32.totalorder %v4060, 0
      %v4062 = vsel %vm4061, %v4060, 0
      %v4063 = vshrl.u32 %v4062, 5
      %v4064 = vand.u32 %v4062, 31
      %v4065 = vsub.s32 32, %v4064
      %v4066 = vshrl.u32 683565275, %v4065
      %v4067 = vshll.u32 683565275, %v4064
      %v4068 = vshrl.u32 2475754826, %v4065
      %v4069 = vor.u32 %v4067, %v4068
      %v4070 = vshll.u32 2475754826, %v4064
      %v4071 = vshrl.u32 2131351028, %v4065
      %v4072 = vor.u32 %v4070, %v4071
      %v4073 = vshll.u32 2131351028, %v4064
      %v4074 = vshrl.u32 2102212464, %v4065
      %v4075 = vor.u32 %v4073, %v4074
      %v4076 = vshll.u32 2102212464, %v4064
      %v4077 = vshrl.u32 920167782, %v4065
      %v4078 = vor.u32 %v4076, %v4077
      %v4079 = vshll.u32 920167782, %v4064
      %v4080 = vshrl.u32 1326507024, %v4065
      %v4081 = vor.u32 %v4079, %v4080
      %vm4082 = vcmp.lt.s32.totalorder %v4063, 1
      %vm4083 = vcmp.lt.s32.totalorder %v4063, 2
      %vm4084 = vcmp.lt.s32.totalorder %v4063, 3
      %vm4085 = vcmp.lt.s32.totalorder %v4063, 4
      %v4086 = vsel %vm4082, %v4066, %v4069
      %v4087 = vsel %vm4085, %v4075, 2102212464
      %v4088 = vsel %vm4084, %v4072, %v4087
      %v4089 = vsel %vm4083, %v4086, %v4088
      %v4090 = vsel %vm4082, %v4069, %v4072
      %v4091 = vsel %vm4085, %v4078, 920167782
      %v4092 = vsel %vm4084, %v4075, %v4091
      %v4093 = vsel %vm4083, %v4090, %v4092
      %v4094 = vsel %vm4082, %v4072, %v4075
      %v4095 = vsel %vm4085, %v4081, 1326507024
      %v4096 = vsel %vm4084, %v4078, %v4095
      %v4097 = vsel %vm4083, %v4094, %v4096
      %v4098 = vshll.u32 %v4058, 8
      %v4099 = vand.u32 %v4098, 65535
      %v4100 = vshrl.u32 %v4098, 16
      %v4101 = vand.u32 %v4097, 65535
      %v4102 = vshrl.u32 %v4097, 16
      %v4103 = vmul.u32 %v4099, %v4101
      %v4104 = vmul.u32 %v4099, %v4102
      %v4105 = vmul.u32 %v4100, %v4101
      %v4106 = vmul.u32 %v4100, %v4102
      %v4107 = vshll.u32 %v4104, 16
      %v4108 = vshrl.u32 %v4104, 16
      %v4109 = vshll.u32 %v4105, 16
      %v4110 = vshrl.u32 %v4105, 16
      %vm4111 = vc.u32 %v4103, %v4107
      %v4112 = vsel %vm4111, 1, 0
      %v4113 = vadd.s32 %v4103, %v4107
      %v4114 = vadd.s32 %v4106, %v4112
      %vm4115 = vc.u32 %v4113, %v4109
      %v4116 = vsel %vm4115, 1, 0
      %v4117 = vadd.s32 %v4113, %v4109
      %v4118 = vadd.s32 %v4114, %v4116
      %v4119 = vadd.s32 %v4118, %v4108
      %v4120 = vadd.s32 %v4119, %v4110
      %v4121 = vand.u32 %v4098, 65535
      %v4122 = vshrl.u32 %v4098, 16
      %v4123 = vand.u32 %v4093, 65535
      %v4124 = vshrl.u32 %v4093, 16
      %v4125 = vmul.u32 %v4121, %v4123
      %v4126 = vmul.u32 %v4121, %v4124
      %v4127 = vmul.u32 %v4122, %v4123
      %v4128 = vmul.u32 %v4122, %v4124
      %v4129 = vshll.u32 %v4126, 16
      %v4130 = vshrl.u32 %v4126, 16
      %v4131 = vshll.u32 %v4127, 16
      %v4132 = vshrl.u32 %v4127, 16
      %vm4133 = vc.u32 %v4125, %v4129
      %v4134 = vsel %vm4133, 1, 0
      %v4135 = vadd.s32 %v4125, %v4129
      %v4136 = vadd.s32 %v4128, %v4134
      %vm4137 = vc.u32 %v4135, %v4131
      %v4138 = vsel %vm4137, 1, 0
      %v4139 = vadd.s32 %v4135, %v4131
      %v4140 = vadd.s32 %v4136, %v4138
      %v4141 = vadd.s32 %v4140, %v4130
      %v4142 = vadd.s32 %v4141, %v4132
      %v4143 = vmul.u32 %v4098, %v4089
      %v4144 = vadd.s32 %v4120, %v4139
      %vm4145 = vc.u32 %v4120, %v4139
      %v4146 = vadd.s32 %v4142, 1
      %v4147 = vsel %vm4145, %v4146, %v4142
      %v4148 = vadd.s32 %v4143, %v4147
      %v4149 = vadd.s32 %v4148, 536870912
      %v4150 = vshrl.u32 %v4149, 30
      %v4151 = vshll.u32 %v4150, 30
      %v4152 = vsub.s32 %v4148, %v4151
      %vm4153 = vcmp.lt.s32.totalorder %v4152, 0
      %v4154 = vsub.s32 0, %v4152
      %v4155 = vsel %vm4153, %v4154, %v4152
      %v4156 = vclz %v4155
      %v4157 = vsub.s32 %v4156, 2
      %vm4158 = vcmp.gt.s32.totalorder 0, %v4157
      %v4159 = vsel %vm4158, 0, %v4157
      %v4160 = vsub.s32 32, %v4159
      %v4161 = vshll.u32 %v4152, %v4159
      %v4162 = vshrl.u32 %v4144, %v4160
      %v4163 = vor.u32 %v4161, %v4162
      %v4164 = vsub.s32 4294967266, %v4159
      %v4165 = vadd.s32 %v4164, 127
      %v4166 = vshll.u32 %v4165, 23
      %v4167 = vor.u32 4788187, %v4166
      %v4168 = vand.u32 2147483647, %v4167
      %v4170 = vcvt.s32.f32 %v4163
      %v4171 = vmul.f32 %v4170, %v4168
      %v4172 = vxor.u32 %v4171, 2147483648
      %v4173 = vsel %vm4052, %v4172, %v4171
      %v4174 = vsub.s32 4, %v4150
      %v4175 = vsel %vm4052, %v4174, %v4150
      %v4176 = vsel %vm4051, %v2810, %v4173
      %v4177 = vsel %vm4051, 0, %v4175
      %v4178 = vmul.f32 %v4176, %v4176
      %v4179 = vmul.f32 %v4178, -0.001358992
      %v4180 = vadd.f32 %v4179, 0.041655596
      %v4181 = vmul.f32 %v4178, %v4180
      %v4182 = vadd.f32 %v4181, -0.4999988
      %v4183 = vmul.f32 %v4178, %v4182
      %v4184 = vadd.f32 1.0, %v4183
      %v4185 = vmul.f32 %v4176, %v4176
      %v4186 = vmul.f32 %v4185, -0.00019511016
      %v4187 = vadd.f32 %v4186, 0.008332121
      %v4188 = vmul.f32 %v4185, %v4187
      %v4189 = vadd.f32 %v4188, -0.16666654
      %v4190 = vmul.f32 %v4185, %v4189
      %v4191 = vadd.f32 %v4190, 1.0
      %v4192 = vmul.f32 %v4191, %v4176
      %vm4193 = vweird.f32 %v2810
      %v4194 = vadd.s32 %v4177, 3
      %v4195 = vand.u32 %v4194, 3
      %vm4196 = vcmp.lt.s32.totalorder %v4195, 2
      %vm4197 = vcmp.eq.s32.totalorder %v4195, 0
      %v4198 = vxor.u32 %v4192, 2147483648
      %v4199 = vsel %vm4197, %v4184, %v4198
      %vm4200 = vcmp.eq.s32.totalorder %v4195, 2
      %v4201 = vxor.u32 %v4184, 2147483648
      %v4202 = vsel %vm4200, %v4201, %v4192
      %v4203 = vsel %vm4196, %v4199, %v4202
      %v4204 = vsel %vm4193, nan, %v4203
      %v4205 = vand.u32 2147483647, %v2811
      %vm4206 = vcmp.le.f32.partialorder %v4205, 0.7853982
      %vm4207 = vcmp.lt.s32.totalorder %v2811, 0
      %v4208 = vand.u32 %v2811, 2139095040
      %v4209 = vshrl.u32 %v4208, 23
      %v4210 = vsub.s32 %v4209, 127
      %v4211 = vand.u32 2147483647, %v2811
      %v4212 = vand.u32 %v4211, 8388607
      %v4213 = vor.u32 %v4212, 8388608
      %v4214 = vsub.s32 0, %v4213
      %v4215 = vadd.s32 %v4210, 1
      %vm4216 = vcmp.gt.s32.totalorder %v4215, 0
      %v4217 = vsel %vm4216, %v4215, 0
      %v4218 = vshrl.u32 %v4217, 5
      %v4219 = vand.u32 %v4217, 31
      %v4220 = vsub.s32 32, %v4219
      %v4221 = vshrl.u32 683565275, %v4220
      %v4222 = vshll.u32 683565275, %v4219
      %v4223 = vshrl.u32 2475754826, %v4220
      %v4224 = vor.u32 %v4222, %v4223
      %v4225 = vshll.u32 2475754826, %v4219
      %v4226 = vshrl.u32 2131351028, %v4220
      %v4227 = vor.u32 %v4225, %v4226
      %v4228 = vshll.u32 2131351028, %v4219
      %v4229 = vshrl.u32 2102212464, %v4220
      %v4230 = vor.u32 %v4228, %v4229
      %v4231 = vshll.u32 2102212464, %v4219
      %v4232 = vshrl.u32 920167782, %v4220
      %v4233 = vor.u32 %v4231, %v4232
      %v4234 = vshll.u32 920167782, %v4219
      %v4235 = vshrl.u32 1326507024, %v4220
      %v4236 = vor.u32 %v4234, %v4235
      %vm4237 = vcmp.lt.s32.totalorder %v4218, 1
      %vm4238 = vcmp.lt.s32.totalorder %v4218, 2
      %vm4239 = vcmp.lt.s32.totalorder %v4218, 3
      %vm4240 = vcmp.lt.s32.totalorder %v4218, 4
      %v4241 = vsel %vm4237, %v4221, %v4224
      %v4242 = vsel %vm4240, %v4230, 2102212464
      %v4243 = vsel %vm4239, %v4227, %v4242
      %v4244 = vsel %vm4238, %v4241, %v4243
      %v4245 = vsel %vm4237, %v4224, %v4227
      %v4246 = vsel %vm4240, %v4233, 920167782
      %v4247 = vsel %vm4239, %v4230, %v4246
      %v4248 = vsel %vm4238, %v4245, %v4247
      %v4249 = vsel %vm4237, %v4227, %v4230
      %v4250 = vsel %vm4240, %v4236, 1326507024
      %v4251 = vsel %vm4239, %v4233, %v4250
      %v4252 = vsel %vm4238, %v4249, %v4251
      %v4253 = vshll.u32 %v4213, 8
      %v4254 = vand.u32 %v4253, 65535
      %v4255 = vshrl.u32 %v4253, 16
      %v4256 = vand.u32 %v4252, 65535
      %v4257 = vshrl.u32 %v4252, 16
      %v4258 = vmul.u32 %v4254, %v4256
      %v4259 = vmul.u32 %v4254, %v4257
      %v4260 = vmul.u32 %v4255, %v4256
      %v4261 = vmul.u32 %v4255, %v4257
      %v4262 = vshll.u32 %v4259, 16
      %v4263 = vshrl.u32 %v4259, 16
      %v4264 = vshll.u32 %v4260, 16
      %v4265 = vshrl.u32 %v4260, 16
      %vm4266 = vc.u32 %v4258, %v4262
      %v4267 = vsel %vm4266, 1, 0
      %v4268 = vadd.s32 %v4258, %v4262
      %v4269 = vadd.s32 %v4261, %v4267
      %vm4270 = vc.u32 %v4268, %v4264
      %v4271 = vsel %vm4270, 1, 0
      %v4272 = vadd.s32 %v4268, %v4264
      %v4273 = vadd.s32 %v4269, %v4271
      %v4274 = vadd.s32 %v4273, %v4263
      %v4275 = vadd.s32 %v4274, %v4265
      %v4276 = vand.u32 %v4253, 65535
      %v4277 = vshrl.u32 %v4253, 16
      %v4278 = vand.u32 %v4248, 65535
      %v4279 = vshrl.u32 %v4248, 16
      %v4280 = vmul.u32 %v4276, %v4278
      %v4281 = vmul.u32 %v4276, %v4279
      %v4282 = vmul.u32 %v4277, %v4278
      %v4283 = vmul.u32 %v4277, %v4279
      %v4284 = vshll.u32 %v4281, 16
      %v4285 = vshrl.u32 %v4281, 16
      %v4286 = vshll.u32 %v4282, 16
      %v4287 = vshrl.u32 %v4282, 16
      %vm4288 = vc.u32 %v4280, %v4284
      %v4289 = vsel %vm4288, 1, 0
      %v4290 = vadd.s32 %v4280, %v4284
      %v4291 = vadd.s32 %v4283, %v4289
      %vm4292 = vc.u32 %v4290, %v4286
      %v4293 = vsel %vm4292, 1, 0
      %v4294 = vadd.s32 %v4290, %v4286
      %v4295 = vadd.s32 %v4291, %v4293
      %v4296 = vadd.s32 %v4295, %v4285
      %v4297 = vadd.s32 %v4296, %v4287
      %v4298 = vmul.u32 %v4253, %v4244
      %v4299 = vadd.s32 %v4275, %v4294
      %vm4300 = vc.u32 %v4275, %v4294
      %v4301 = vadd.s32 %v4297, 1
      %v4302 = vsel %vm4300, %v4301, %v4297
      %v4303 = vadd.s32 %v4298, %v4302
      %v4304 = vadd.s32 %v4303, 536870912
      %v4305 = vshrl.u32 %v4304, 30
      %v4306 = vshll.u32 %v4305, 30
      %v4307 = vsub.s32 %v4303, %v4306
      %vm4308 = vcmp.lt.s32.totalorder %v4307, 0
      %v4309 = vsub.s32 0, %v4307
      %v4310 = vsel %vm4308, %v4309, %v4307
      %v4311 = vclz %v4310
      %v4312 = vsub.s32 %v4311, 2
      %vm4313 = vcmp.gt.s32.totalorder 0, %v4312
      %v4314 = vsel %vm4313, 0, %v4312
      %v4315 = vsub.s32 32, %v4314
      %v4316 = vshll.u32 %v4307, %v4314
      %v4317 = vshrl.u32 %v4299, %v4315
      %v4318 = vor.u32 %v4316, %v4317
      %v4319 = vsub.s32 4294967266, %v4314
      %v4320 = vadd.s32 %v4319, 127
      %v4321 = vshll.u32 %v4320, 23
      %v4322 = vor.u32 4788187, %v4321
      %v4323 = vand.u32 2147483647, %v4322
      %v4325 = vcvt.s32.f32 %v4318
      %v4326 = vmul.f32 %v4325, %v4323
      %v4327 = vxor.u32 %v4326, 2147483648
      %v4328 = vsel %vm4207, %v4327, %v4326
      %v4329 = vsub.s32 4, %v4305
      %v4330 = vsel %vm4207, %v4329, %v4305
      %v4331 = vsel %vm4206, %v2811, %v4328
      %v4332 = vsel %vm4206, 0, %v4330
      %v4333 = vmul.f32 %v4331, %v4331
      %v4334 = vmul.f32 %v4333, -0.001358992
      %v4335 = vadd.f32 %v4334, 0.041655596
      %v4336 = vmul.f32 %v4333, %v4335
      %v4337 = vadd.f32 %v4336, -0.4999988
      %v4338 = vmul.f32 %v4333, %v4337
      %v4339 = vadd.f32 1.0, %v4338
      %v4340 = vmul.f32 %v4331, %v4331
      %v4341 = vmul.f32 %v4340, -0.00019511016
      %v4342 = vadd.f32 %v4341, 0.008332121
      %v4343 = vmul.f32 %v4340, %v4342
      %v4344 = vadd.f32 %v4343, -0.16666654
      %v4345 = vmul.f32 %v4340, %v4344
      %v4346 = vadd.f32 %v4345, 1.0
      %v4347 = vmul.f32 %v4346, %v4331
      %vm4348 = vweird.f32 %v2811
      %v4349 = vadd.s32 %v4332, 3
      %v4350 = vand.u32 %v4349, 3
      %vm4351 = vcmp.lt.s32.totalorder %v4350, 2
      %vm4352 = vcmp.eq.s32.totalorder %v4350, 0
      %v4353 = vxor.u32 %v4347, 2147483648
      %v4354 = vsel %vm4352, %v4339, %v4353
      %vm4355 = vcmp.eq.s32.totalorder %v4350, 2
      %v4356 = vxor.u32 %v4339, 2147483648
      %v4357 = vsel %vm4355, %v4356, %v4347
      %v4358 = vsel %vm4351, %v4354, %v4357
      %v4359 = vsel %vm4348, nan, %v4358
      %v4360 = vand.u32 2147483647, %v2812
      %vm4361 = vcmp.le.f32.partialorder %v4360, 0.7853982
      %vm4362 = vcmp.lt.s32.totalorder %v2812, 0
      %v4363 = vand.u32 %v2812, 2139095040
      %v4364 = vshrl.u32 %v4363, 23
      %v4365 = vsub.s32 %v4364, 127
      %v4366 = vand.u32 2147483647, %v2812
      %v4367 = vand.u32 %v4366, 8388607
      %v4368 = vor.u32 %v4367, 8388608
      %v4369 = vsub.s32 0, %v4368
      %v4370 = vadd.s32 %v4365, 1
      %vm4371 = vcmp.gt.s32.totalorder %v4370, 0
      %v4372 = vsel %vm4371, %v4370, 0
      %v4373 = vshrl.u32 %v4372, 5
      %v4374 = vand.u32 %v4372, 31
      %v4375 = vsub.s32 32, %v4374
      %v4376 = vshrl.u32 683565275, %v4375
      %v4377 = vshll.u32 683565275, %v4374
      %v4378 = vshrl.u32 2475754826, %v4375
      %v4379 = vor.u32 %v4377, %v4378
      %v4380 = vshll.u32 2475754826, %v4374
      %v4381 = vshrl.u32 2131351028, %v4375
      %v4382 = vor.u32 %v4380, %v4381
      %v4383 = vshll.u32 2131351028, %v4374
      %v4384 = vshrl.u32 2102212464, %v4375
      %v4385 = vor.u32 %v4383, %v4384
      %v4386 = vshll.u32 2102212464, %v4374
      %v4387 = vshrl.u32 920167782, %v4375
      %v4388 = vor.u32 %v4386, %v4387
      %v4389 = vshll.u32 920167782, %v4374
      %v4390 = vshrl.u32 1326507024, %v4375
      %v4391 = vor.u32 %v4389, %v4390
      %vm4392 = vcmp.lt.s32.totalorder %v4373, 1
      %vm4393 = vcmp.lt.s32.totalorder %v4373, 2
      %vm4394 = vcmp.lt.s32.totalorder %v4373, 3
      %vm4395 = vcmp.lt.s32.totalorder %v4373, 4
      %v4396 = vsel %vm4392, %v4376, %v4379
      %v4397 = vsel %vm4395, %v4385, 2102212464
      %v4398 = vsel %vm4394, %v4382, %v4397
      %v4399 = vsel %vm4393, %v4396, %v4398
      %v4400 = vsel %vm4392, %v4379, %v4382
      %v4401 = vsel %vm4395, %v4388, 920167782
      %v4402 = vsel %vm4394, %v4385, %v4401
      %v4403 = vsel %vm4393, %v4400, %v4402
      %v4404 = vsel %vm4392, %v4382, %v4385
      %v4405 = vsel %vm4395, %v4391, 1326507024
      %v4406 = vsel %vm4394, %v4388, %v4405
      %v4407 = vsel %vm4393, %v4404, %v4406
      %v4408 = vshll.u32 %v4368, 8
      %v4409 = vand.u32 %v4408, 65535
      %v4410 = vshrl.u32 %v4408, 16
      %v4411 = vand.u32 %v4407, 65535
      %v4412 = vshrl.u32 %v4407, 16
      %v4413 = vmul.u32 %v4409, %v4411
      %v4414 = vmul.u32 %v4409, %v4412
      %v4415 = vmul.u32 %v4410, %v4411
      %v4416 = vmul.u32 %v4410, %v4412
      %v4417 = vshll.u32 %v4414, 16
      %v4418 = vshrl.u32 %v4414, 16
      %v4419 = vshll.u32 %v4415, 16
      %v4420 = vshrl.u32 %v4415, 16
      %vm4421 = vc.u32 %v4413, %v4417
      %v4422 = vsel %vm4421, 1, 0
      %v4423 = vadd.s32 %v4413, %v4417
      %v4424 = vadd.s32 %v4416, %v4422
      %vm4425 = vc.u32 %v4423, %v4419
      %v4426 = vsel %vm4425, 1, 0
      %v4427 = vadd.s32 %v4423, %v4419
      %v4428 = vadd.s32 %v4424, %v4426
      %v4429 = vadd.s32 %v4428, %v4418
      %v4430 = vadd.s32 %v4429, %v4420
      %v4431 = vand.u32 %v4408, 65535
      %v4432 = vshrl.u32 %v4408, 16
      %v4433 = vand.u32 %v4403, 65535
      %v4434 = vshrl.u32 %v4403, 16
      %v4435 = vmul.u32 %v4431, %v4433
      %v4436 = vmul.u32 %v4431, %v4434
      %v4437 = vmul.u32 %v4432, %v4433
      %v4438 = vmul.u32 %v4432, %v4434
      %v4439 = vshll.u32 %v4436, 16
      %v4440 = vshrl.u32 %v4436, 16
      %v4441 = vshll.u32 %v4437, 16
      %v4442 = vshrl.u32 %v4437, 16
      %vm4443 = vc.u32 %v4435, %v4439
      %v4444 = vsel %vm4443, 1, 0
      %v4445 = vadd.s32 %v4435, %v4439
      %v4446 = vadd.s32 %v4438, %v4444
      %vm4447 = vc.u32 %v4445, %v4441
      %v4448 = vsel %vm4447, 1, 0
      %v4449 = vadd.s32 %v4445, %v4441
      %v4450 = vadd.s32 %v4446, %v4448
      %v4451 = vadd.s32 %v4450, %v4440
      %v4452 = vadd.s32 %v4451, %v4442
      %v4453 = vmul.u32 %v4408, %v4399
      %v4454 = vadd.s32 %v4430, %v4449
      %vm4455 = vc.u32 %v4430, %v4449
      %v4456 = vadd.s32 %v4452, 1
      %v4457 = vsel %vm4455, %v4456, %v4452
      %v4458 = vadd.s32 %v4453, %v4457
      %v4459 = vadd.s32 %v4458, 536870912
      %v4460 = vshrl.u32 %v4459, 30
      %v4461 = vshll.u32 %v4460, 30
      %v4462 = vsub.s32 %v4458, %v4461
      %vm4463 = vcmp.lt.s32.totalorder %v4462, 0
      %v4464 = vsub.s32 0, %v4462
      %v4465 = vsel %vm4463, %v4464, %v4462
      %v4466 = vclz %v4465
      %v4467 = vsub.s32 %v4466, 2
      %vm4468 = vcmp.gt.s32.totalorder 0, %v4467
      %v4469 = vsel %vm4468, 0, %v4467
      %v4470 = vsub.s32 32, %v4469
      %v4471 = vshll.u32 %v4462, %v4469
      %v4472 = vshrl.u32 %v4454, %v4470
      %v4473 = vor.u32 %v4471, %v4472
      %v4474 = vsub.s32 4294967266, %v4469
      %v4475 = vadd.s32 %v4474, 127
      %v4476 = vshll.u32 %v4475, 23
      %v4477 = vor.u32 4788187, %v4476
      %v4478 = vand.u32 2147483647, %v4477
      %v4480 = vcvt.s32.f32 %v4473
      %v4481 = vmul.f32 %v4480, %v4478
      %v4482 = vxor.u32 %v4481, 2147483648
      %v4483 = vsel %vm4362, %v4482, %v4481
      %v4484 = vsub.s32 4, %v4460
      %v4485 = vsel %vm4362, %v4484, %v4460
      %v4486 = vsel %vm4361, %v2812, %v4483
      %v4487 = vsel %vm4361, 0, %v4485
      %v4488 = vmul.f32 %v4486, %v4486
      %v4489 = vmul.f32 %v4488, -0.001358992
      %v4490 = vadd.f32 %v4489, 0.041655596
      %v4491 = vmul.f32 %v4488, %v4490
      %v4492 = vadd.f32 %v4491, -0.4999988
      %v4493 = vmul.f32 %v4488, %v4492
      %v4494 = vadd.f32 1.0, %v4493
      %v4495 = vmul.f32 %v4486, %v4486
      %v4496 = vmul.f32 %v4495, -0.00019511016
      %v4497 = vadd.f32 %v4496, 0.008332121
      %v4498 = vmul.f32 %v4495, %v4497
      %v4499 = vadd.f32 %v4498, -0.16666654
      %v4500 = vmul.f32 %v4495, %v4499
      %v4501 = vadd.f32 %v4500, 1.0
      %v4502 = vmul.f32 %v4501, %v4486
      %vm4503 = vweird.f32 %v2812
      %v4504 = vadd.s32 %v4487, 3
      %v4505 = vand.u32 %v4504, 3
      %vm4506 = vcmp.lt.s32.totalorder %v4505, 2
      %vm4507 = vcmp.eq.s32.totalorder %v4505, 0
      %v4508 = vxor.u32 %v4502, 2147483648
      %v4509 = vsel %vm4507, %v4494, %v4508
      %vm4510 = vcmp.eq.s32.totalorder %v4505, 2
      %v4511 = vxor.u32 %v4494, 2147483648
      %v4512 = vsel %vm4510, %v4511, %v4502
      %v4513 = vsel %vm4506, %v4509, %v4512
      %v4514 = vsel %vm4503, nan, %v4513
      %v4515 = vand.u32 2147483647, %v2813
      %vm4516 = vcmp.le.f32.partialorder %v4515, 0.7853982
      %vm4517 = vcmp.lt.s32.totalorder %v2813, 0
      %v4518 = vand.u32 %v2813, 2139095040
      %v4519 = vshrl.u32 %v4518, 23
      %v4520 = vsub.s32 %v4519, 127
      %v4521 = vand.u32 2147483647, %v2813
      %v4522 = vand.u32 %v4521, 8388607
      %v4523 = vor.u32 %v4522, 8388608
      %v4524 = vsub.s32 0, %v4523
      %v4525 = vadd.s32 %v4520, 1
      %vm4526 = vcmp.gt.s32.totalorder %v4525, 0
      %v4527 = vsel %vm4526, %v4525, 0
      %v4528 = vshrl.u32 %v4527, 5
      %v4529 = vand.u32 %v4527, 31
      %v4530 = vsub.s32 32, %v4529
      %v4531 = vshrl.u32 683565275, %v4530
      %v4532 = vshll.u32 683565275, %v4529
      %v4533 = vshrl.u32 2475754826, %v4530
      %v4534 = vor.u32 %v4532, %v4533
      %v4535 = vshll.u32 2475754826, %v4529
      %v4536 = vshrl.u32 2131351028, %v4530
      %v4537 = vor.u32 %v4535, %v4536
      %v4538 = vshll.u32 2131351028, %v4529
      %v4539 = vshrl.u32 2102212464, %v4530
      %v4540 = vor.u32 %v4538, %v4539
      %v4541 = vshll.u32 2102212464, %v4529
      %v4542 = vshrl.u32 920167782, %v4530
      %v4543 = vor.u32 %v4541, %v4542
      %v4544 = vshll.u32 920167782, %v4529
      %v4545 = vshrl.u32 1326507024, %v4530
      %v4546 = vor.u32 %v4544, %v4545
      %vm4547 = vcmp.lt.s32.totalorder %v4528, 1
      %vm4548 = vcmp.lt.s32.totalorder %v4528, 2
      %vm4549 = vcmp.lt.s32.totalorder %v4528, 3
      %vm4550 = vcmp.lt.s32.totalorder %v4528, 4
      %v4551 = vsel %vm4547, %v4531, %v4534
      %v4552 = vsel %vm4550, %v4540, 2102212464
      %v4553 = vsel %vm4549, %v4537, %v4552
      %v4554 = vsel %vm4548, %v4551, %v4553
      %v4555 = vsel %vm4547, %v4534, %v4537
      %v4556 = vsel %vm4550, %v4543, 920167782
      %v4557 = vsel %vm4549, %v4540, %v4556
      %v4558 = vsel %vm4548, %v4555, %v4557
      %v4559 = vsel %vm4547, %v4537, %v4540
      %v4560 = vsel %vm4550, %v4546, 1326507024
      %v4561 = vsel %vm4549, %v4543, %v4560
      %v4562 = vsel %vm4548, %v4559, %v4561
      %v4563 = vshll.u32 %v4523, 8
      %v4564 = vand.u32 %v4563, 65535
      %v4565 = vshrl.u32 %v4563, 16
      %v4566 = vand.u32 %v4562, 65535
      %v4567 = vshrl.u32 %v4562, 16
      %v4568 = vmul.u32 %v4564, %v4566
      %v4569 = vmul.u32 %v4564, %v4567
      %v4570 = vmul.u32 %v4565, %v4566
      %v4571 = vmul.u32 %v4565, %v4567
      %v4572 = vshll.u32 %v4569, 16
      %v4573 = vshrl.u32 %v4569, 16
      %v4574 = vshll.u32 %v4570, 16
      %v4575 = vshrl.u32 %v4570, 16
      %vm4576 = vc.u32 %v4568, %v4572
      %v4577 = vsel %vm4576, 1, 0
      %v4578 = vadd.s32 %v4568, %v4572
      %v4579 = vadd.s32 %v4571, %v4577
      %vm4580 = vc.u32 %v4578, %v4574
      %v4581 = vsel %vm4580, 1, 0
      %v4582 = vadd.s32 %v4578, %v4574
      %v4583 = vadd.s32 %v4579, %v4581
      %v4584 = vadd.s32 %v4583, %v4573
      %v4585 = vadd.s32 %v4584, %v4575
      %v4586 = vand.u32 %v4563, 65535
      %v4587 = vshrl.u32 %v4563, 16
      %v4588 = vand.u32 %v4558, 65535
      %v4589 = vshrl.u32 %v4558, 16
      %v4590 = vmul.u32 %v4586, %v4588
      %v4591 = vmul.u32 %v4586, %v4589
      %v4592 = vmul.u32 %v4587, %v4588
      %v4593 = vmul.u32 %v4587, %v4589
      %v4594 = vshll.u32 %v4591, 16
      %v4595 = vshrl.u32 %v4591, 16
      %v4596 = vshll.u32 %v4592, 16
      %v4597 = vshrl.u32 %v4592, 16
      %vm4598 = vc.u32 %v4590, %v4594
      %v4599 = vsel %vm4598, 1, 0
      %v4600 = vadd.s32 %v4590, %v4594
      %v4601 = vadd.s32 %v4593, %v4599
      %vm4602 = vc.u32 %v4600, %v4596
      %v4603 = vsel %vm4602, 1, 0
      %v4604 = vadd.s32 %v4600, %v4596
      %v4605 = vadd.s32 %v4601, %v4603
      %v4606 = vadd.s32 %v4605, %v4595
      %v4607 = vadd.s32 %v4606, %v4597
      %v4608 = vmul.u32 %v4563, %v4554
      %v4609 = vadd.s32 %v4585, %v4604
      %vm4610 = vc.u32 %v4585, %v4604
      %v4611 = vadd.s32 %v4607, 1
      %v4612 = vsel %vm4610, %v4611, %v4607
      %v4613 = vadd.s32 %v4608, %v4612
      %v4614 = vadd.s32 %v4613, 536870912
      %v4615 = vshrl.u32 %v4614, 30
      %v4616 = vshll.u32 %v4615, 30
      %v4617 = vsub.s32 %v4613, %v4616
      %vm4618 = vcmp.lt.s32.totalorder %v4617, 0
      %v4619 = vsub.s32 0, %v4617
      %v4620 = vsel %vm4618, %v4619, %v4617
      %v4621 = vclz %v4620
      %v4622 = vsub.s32 %v4621, 2
      %vm4623 = vcmp.gt.s32.totalorder 0, %v4622
      %v4624 = vsel %vm4623, 0, %v4622
      %v4625 = vsub.s32 32, %v4624
      %v4626 = vshll.u32 %v4617, %v4624
      %v4627 = vshrl.u32 %v4609, %v4625
      %v4628 = vor.u32 %v4626, %v4627
      %v4629 = vsub.s32 4294967266, %v4624
      %v4630 = vadd.s32 %v4629, 127
      %v4631 = vshll.u32 %v4630, 23
      %v4632 = vor.u32 4788187, %v4631
      %v4633 = vand.u32 2147483647, %v4632
      %v4635 = vcvt.s32.f32 %v4628
      %v4636 = vmul.f32 %v4635, %v4633
      %v4637 = vxor.u32 %v4636, 2147483648
      %v4638 = vsel %vm4517, %v4637, %v4636
      %v4639 = vsub.s32 4, %v4615
      %v4640 = vsel %vm4517, %v4639, %v4615
      %v4641 = vsel %vm4516, %v2813, %v4638
      %v4642 = vsel %vm4516, 0, %v4640
      %v4643 = vmul.f32 %v4641, %v4641
      %v4644 = vmul.f32 %v4643, -0.001358992
      %v4645 = vadd.f32 %v4644, 0.041655596
      %v4646 = vmul.f32 %v4643, %v4645
      %v4647 = vadd.f32 %v4646, -0.4999988
      %v4648 = vmul.f32 %v4643, %v4647
      %v4649 = vadd.f32 1.0, %v4648
      %v4650 = vmul.f32 %v4641, %v4641
      %v4651 = vmul.f32 %v4650, -0.00019511016
      %v4652 = vadd.f32 %v4651, 0.008332121
      %v4653 = vmul.f32 %v4650, %v4652
      %v4654 = vadd.f32 %v4653, -0.16666654
      %v4655 = vmul.f32 %v4650, %v4654
      %v4656 = vadd.f32 %v4655, 1.0
      %v4657 = vmul.f32 %v4656, %v4641
      %vm4658 = vweird.f32 %v2813
      %v4659 = vadd.s32 %v4642, 3
      %v4660 = vand.u32 %v4659, 3
      %vm4661 = vcmp.lt.s32.totalorder %v4660, 2
      %vm4662 = vcmp.eq.s32.totalorder %v4660, 0
      %v4663 = vxor.u32 %v4657, 2147483648
      %v4664 = vsel %vm4662, %v4649, %v4663
      %vm4665 = vcmp.eq.s32.totalorder %v4660, 2
      %v4666 = vxor.u32 %v4649, 2147483648
      %v4667 = vsel %vm4665, %v4666, %v4657
      %v4668 = vsel %vm4661, %v4664, %v4667
      %v4669 = vsel %vm4658, nan, %v4668
      %v4670 = vand.u32 2147483647, %v2814
      %vm4671 = vcmp.le.f32.partialorder %v4670, 0.7853982
      %vm4672 = vcmp.lt.s32.totalorder %v2814, 0
      %v4673 = vand.u32 %v2814, 2139095040
      %v4674 = vshrl.u32 %v4673, 23
      %v4675 = vsub.s32 %v4674, 127
      %v4676 = vand.u32 2147483647, %v2814
      %v4677 = vand.u32 %v4676, 8388607
      %v4678 = vor.u32 %v4677, 8388608
      %v4679 = vsub.s32 0, %v4678
      %v4680 = vadd.s32 %v4675, 1
      %vm4681 = vcmp.gt.s32.totalorder %v4680, 0
      %v4682 = vsel %vm4681, %v4680, 0
      %v4683 = vshrl.u32 %v4682, 5
      %v4684 = vand.u32 %v4682, 31
      %v4685 = vsub.s32 32, %v4684
      %v4686 = vshrl.u32 683565275, %v4685
      %v4687 = vshll.u32 683565275, %v4684
      %v4688 = vshrl.u32 2475754826, %v4685
      %v4689 = vor.u32 %v4687, %v4688
      %v4690 = vshll.u32 2475754826, %v4684
      %v4691 = vshrl.u32 2131351028, %v4685
      %v4692 = vor.u32 %v4690, %v4691
      %v4693 = vshll.u32 2131351028, %v4684
      %v4694 = vshrl.u32 2102212464, %v4685
      %v4695 = vor.u32 %v4693, %v4694
      %v4696 = vshll.u32 2102212464, %v4684
      %v4697 = vshrl.u32 920167782, %v4685
      %v4698 = vor.u32 %v4696, %v4697
      %v4699 = vshll.u32 920167782, %v4684
      %v4700 = vshrl.u32 1326507024, %v4685
      %v4701 = vor.u32 %v4699, %v4700
      %vm4702 = vcmp.lt.s32.totalorder %v4683, 1
      %vm4703 = vcmp.lt.s32.totalorder %v4683, 2
      %vm4704 = vcmp.lt.s32.totalorder %v4683, 3
      %vm4705 = vcmp.lt.s32.totalorder %v4683, 4
      %v4706 = vsel %vm4702, %v4686, %v4689
      %v4707 = vsel %vm4705, %v4695, 2102212464
      %v4708 = vsel %vm4704, %v4692, %v4707
      %v4709 = vsel %vm4703, %v4706, %v4708
      %v4710 = vsel %vm4702, %v4689, %v4692
      %v4711 = vsel %vm4705, %v4698, 920167782
      %v4712 = vsel %vm4704, %v4695, %v4711
      %v4713 = vsel %vm4703, %v4710, %v4712
      %v4714 = vsel %vm4702, %v4692, %v4695
      %v4715 = vsel %vm4705, %v4701, 1326507024
      %v4716 = vsel %vm4704, %v4698, %v4715
      %v4717 = vsel %vm4703, %v4714, %v4716
      %v4718 = vshll.u32 %v4678, 8
      %v4719 = vand.u32 %v4718, 65535
      %v4720 = vshrl.u32 %v4718, 16
      %v4721 = vand.u32 %v4717, 65535
      %v4722 = vshrl.u32 %v4717, 16
      %v4723 = vmul.u32 %v4719, %v4721
      %v4724 = vmul.u32 %v4719, %v4722
      %v4725 = vmul.u32 %v4720, %v4721
      %v4726 = vmul.u32 %v4720, %v4722
      %v4727 = vshll.u32 %v4724, 16
      %v4728 = vshrl.u32 %v4724, 16
      %v4729 = vshll.u32 %v4725, 16
      %v4730 = vshrl.u32 %v4725, 16
      %vm4731 = vc.u32 %v4723, %v4727
      %v4732 = vsel %vm4731, 1, 0
      %v4733 = vadd.s32 %v4723, %v4727
      %v4734 = vadd.s32 %v4726, %v4732
      %vm4735 = vc.u32 %v4733, %v4729
      %v4736 = vsel %vm4735, 1, 0
      %v4737 = vadd.s32 %v4733, %v4729
      %v4738 = vadd.s32 %v4734, %v4736
      %v4739 = vadd.s32 %v4738, %v4728
      %v4740 = vadd.s32 %v4739, %v4730
      %v4741 = vand.u32 %v4718, 65535
      %v4742 = vshrl.u32 %v4718, 16
      %v4743 = vand.u32 %v4713, 65535
      %v4744 = vshrl.u32 %v4713, 16
      %v4745 = vmul.u32 %v4741, %v4743
      %v4746 = vmul.u32 %v4741, %v4744
      %v4747 = vmul.u32 %v4742, %v4743
      %v4748 = vmul.u32 %v4742, %v4744
      %v4749 = vshll.u32 %v4746, 16
      %v4750 = vshrl.u32 %v4746, 16
      %v4751 = vshll.u32 %v4747, 16
      %v4752 = vshrl.u32 %v4747, 16
      %vm4753 = vc.u32 %v4745, %v4749
      %v4754 = vsel %vm4753, 1, 0
      %v4755 = vadd.s32 %v4745, %v4749
      %v4756 = vadd.s32 %v4748, %v4754
      %vm4757 = vc.u32 %v4755, %v4751
      %v4758 = vsel %vm4757, 1, 0
      %v4759 = vadd.s32 %v4755, %v4751
      %v4760 = vadd.s32 %v4756, %v4758
      %v4761 = vadd.s32 %v4760, %v4750
      %v4762 = vadd.s32 %v4761, %v4752
      %v4763 = vmul.u32 %v4718, %v4709
      %v4764 = vadd.s32 %v4740, %v4759
      %vm4765 = vc.u32 %v4740, %v4759
      %v4766 = vadd.s32 %v4762, 1
      %v4767 = vsel %vm4765, %v4766, %v4762
      %v4768 = vadd.s32 %v4763, %v4767
      %v4769 = vadd.s32 %v4768, 536870912
      %v4770 = vshrl.u32 %v4769, 30
      %v4771 = vshll.u32 %v4770, 30
      %v4772 = vsub.s32 %v4768, %v4771
      %vm4773 = vcmp.lt.s32.totalorder %v4772, 0
      %v4774 = vsub.s32 0, %v4772
      %v4775 = vsel %vm4773, %v4774, %v4772
      %v4776 = vclz %v4775
      %v4777 = vsub.s32 %v4776, 2
      %vm4778 = vcmp.gt.s32.totalorder 0, %v4777
      %v4779 = vsel %vm4778, 0, %v4777
      %v4780 = vsub.s32 32, %v4779
      %v4781 = vshll.u32 %v4772, %v4779
      %v4782 = vshrl.u32 %v4764, %v4780
      %v4783 = vor.u32 %v4781, %v4782
      %v4784 = vsub.s32 4294967266, %v4779
      %v4785 = vadd.s32 %v4784, 127
      %v4786 = vshll.u32 %v4785, 23
      %v4787 = vor.u32 4788187, %v4786
      %v4788 = vand.u32 2147483647, %v4787
      %v4790 = vcvt.s32.f32 %v4783
      %v4791 = vmul.f32 %v4790, %v4788
      %v4792 = vxor.u32 %v4791, 2147483648
      %v4793 = vsel %vm4672, %v4792, %v4791
      %v4794 = vsub.s32 4, %v4770
      %v4795 = vsel %vm4672, %v4794, %v4770
      %v4796 = vsel %vm4671, %v2814, %v4793
      %v4797 = vsel %vm4671, 0, %v4795
      %v4798 = vmul.f32 %v4796, %v4796
      %v4799 = vmul.f32 %v4798, -0.001358992
      %v4800 = vadd.f32 %v4799, 0.041655596
      %v4801 = vmul.f32 %v4798, %v4800
      %v4802 = vadd.f32 %v4801, -0.4999988
      %v4803 = vmul.f32 %v4798, %v4802
      %v4804 = vadd.f32 1.0, %v4803
      %v4805 = vmul.f32 %v4796, %v4796
      %v4806 = vmul.f32 %v4805, -0.00019511016
      %v4807 = vadd.f32 %v4806, 0.008332121
      %v4808 = vmul.f32 %v4805, %v4807
      %v4809 = vadd.f32 %v4808, -0.16666654
      %v4810 = vmul.f32 %v4805, %v4809
      %v4811 = vadd.f32 %v4810, 1.0
      %v4812 = vmul.f32 %v4811, %v4796
      %vm4813 = vweird.f32 %v2814
      %v4814 = vadd.s32 %v4797, 3
      %v4815 = vand.u32 %v4814, 3
      %vm4816 = vcmp.lt.s32.totalorder %v4815, 2
      %vm4817 = vcmp.eq.s32.totalorder %v4815, 0
      %v4818 = vxor.u32 %v4812, 2147483648
      %v4819 = vsel %vm4817, %v4804, %v4818
      %vm4820 = vcmp.eq.s32.totalorder %v4815, 2
      %v4821 = vxor.u32 %v4804, 2147483648
      %v4822 = vsel %vm4820, %v4821, %v4812
      %v4823 = vsel %vm4816, %v4819, %v4822
      %v4824 = vsel %vm4813, nan, %v4823
      %v4825 = vand.u32 2147483647, %v2815
      %vm4826 = vcmp.le.f32.partialorder %v4825, 0.7853982
      %vm4827 = vcmp.lt.s32.totalorder %v2815, 0
      %v4828 = vand.u32 %v2815, 2139095040
      %v4829 = vshrl.u32 %v4828, 23
      %v4830 = vsub.s32 %v4829, 127
      %v4831 = vand.u32 2147483647, %v2815
      %v4832 = vand.u32 %v4831, 8388607
      %v4833 = vor.u32 %v4832, 8388608
      %v4834 = vsub.s32 0, %v4833
      %v4835 = vadd.s32 %v4830, 1
      %vm4836 = vcmp.gt.s32.totalorder %v4835, 0
      %v4837 = vsel %vm4836, %v4835, 0
      %v4838 = vshrl.u32 %v4837, 5
      %v4839 = vand.u32 %v4837, 31
      %v4840 = vsub.s32 32, %v4839
      %v4841 = vshrl.u32 683565275, %v4840
      %v4842 = vshll.u32 683565275, %v4839
      %v4843 = vshrl.u32 2475754826, %v4840
      %v4844 = vor.u32 %v4842, %v4843
      %v4845 = vshll.u32 2475754826, %v4839
      %v4846 = vshrl.u32 2131351028, %v4840
      %v4847 = vor.u32 %v4845, %v4846
      %v4848 = vshll.u32 2131351028, %v4839
      %v4849 = vshrl.u32 2102212464, %v4840
      %v4850 = vor.u32 %v4848, %v4849
      %v4851 = vshll.u32 2102212464, %v4839
      %v4852 = vshrl.u32 920167782, %v4840
      %v4853 = vor.u32 %v4851, %v4852
      %v4854 = vshll.u32 920167782, %v4839
      %v4855 = vshrl.u32 1326507024, %v4840
      %v4856 = vor.u32 %v4854, %v4855
      %vm4857 = vcmp.lt.s32.totalorder %v4838, 1
      %vm4858 = vcmp.lt.s32.totalorder %v4838, 2
      %vm4859 = vcmp.lt.s32.totalorder %v4838, 3
      %vm4860 = vcmp.lt.s32.totalorder %v4838, 4
      %v4861 = vsel %vm4857, %v4841, %v4844
      %v4862 = vsel %vm4860, %v4850, 2102212464
      %v4863 = vsel %vm4859, %v4847, %v4862
      %v4864 = vsel %vm4858, %v4861, %v4863
      %v4865 = vsel %vm4857, %v4844, %v4847
      %v4866 = vsel %vm4860, %v4853, 920167782
      %v4867 = vsel %vm4859, %v4850, %v4866
      %v4868 = vsel %vm4858, %v4865, %v4867
      %v4869 = vsel %vm4857, %v4847, %v4850
      %v4870 = vsel %vm4860, %v4856, 1326507024
      %v4871 = vsel %vm4859, %v4853, %v4870
      %v4872 = vsel %vm4858, %v4869, %v4871
      %v4873 = vshll.u32 %v4833, 8
      %v4874 = vand.u32 %v4873, 65535
      %v4875 = vshrl.u32 %v4873, 16
      %v4876 = vand.u32 %v4872, 65535
      %v4877 = vshrl.u32 %v4872, 16
      %v4878 = vmul.u32 %v4874, %v4876
      %v4879 = vmul.u32 %v4874, %v4877
      %v4880 = vmul.u32 %v4875, %v4876
      %v4881 = vmul.u32 %v4875, %v4877
      %v4882 = vshll.u32 %v4879, 16
      %v4883 = vshrl.u32 %v4879, 16
      %v4884 = vshll.u32 %v4880, 16
      %v4885 = vshrl.u32 %v4880, 16
      %vm4886 = vc.u32 %v4878, %v4882
      %v4887 = vsel %vm4886, 1, 0
      %v4888 = vadd.s32 %v4878, %v4882
      %v4889 = vadd.s32 %v4881, %v4887
      %vm4890 = vc.u32 %v4888, %v4884
      %v4891 = vsel %vm4890, 1, 0
      %v4892 = vadd.s32 %v4888, %v4884
      %v4893 = vadd.s32 %v4889, %v4891
      %v4894 = vadd.s32 %v4893, %v4883
      %v4895 = vadd.s32 %v4894, %v4885
      %v4896 = vand.u32 %v4873, 65535
      %v4897 = vshrl.u32 %v4873, 16
      %v4898 = vand.u32 %v4868, 65535
      %v4899 = vshrl.u32 %v4868, 16
      %v4900 = vmul.u32 %v4896, %v4898
      %v4901 = vmul.u32 %v4896, %v4899
      %v4902 = vmul.u32 %v4897, %v4898
      %v4903 = vmul.u32 %v4897, %v4899
      %v4904 = vshll.u32 %v4901, 16
      %v4905 = vshrl.u32 %v4901, 16
      %v4906 = vshll.u32 %v4902, 16
      %v4907 = vshrl.u32 %v4902, 16
      %vm4908 = vc.u32 %v4900, %v4904
      %v4909 = vsel %vm4908, 1, 0
      %v4910 = vadd.s32 %v4900, %v4904
      %v4911 = vadd.s32 %v4903, %v4909
      %vm4912 = vc.u32 %v4910, %v4906
      %v4913 = vsel %vm4912, 1, 0
      %v4914 = vadd.s32 %v4910, %v4906
      %v4915 = vadd.s32 %v4911, %v4913
      %v4916 = vadd.s32 %v4915, %v4905
      %v4917 = vadd.s32 %v4916, %v4907
      %v4918 = vmul.u32 %v4873, %v4864
      %v4919 = vadd.s32 %v4895, %v4914
      %vm4920 = vc.u32 %v4895, %v4914
      %v4921 = vadd.s32 %v4917, 1
      %v4922 = vsel %vm4920, %v4921, %v4917
      %v4923 = vadd.s32 %v4918, %v4922
      %v4924 = vadd.s32 %v4923, 536870912
      %v4925 = vshrl.u32 %v4924, 30
      %v4926 = vshll.u32 %v4925, 30
      %v4927 = vsub.s32 %v4923, %v4926
      %vm4928 = vcmp.lt.s32.totalorder %v4927, 0
      %v4929 = vsub.s32 0, %v4927
      %v4930 = vsel %vm4928, %v4929, %v4927
      %v4931 = vclz %v4930
      %v4932 = vsub.s32 %v4931, 2
      %vm4933 = vcmp.gt.s32.totalorder 0, %v4932
      %v4934 = vsel %vm4933, 0, %v4932
      %v4935 = vsub.s32 32, %v4934
      %v4936 = vshll.u32 %v4927, %v4934
      %v4937 = vshrl.u32 %v4919, %v4935
      %v4938 = vor.u32 %v4936, %v4937
      %v4939 = vsub.s32 4294967266, %v4934
      %v4940 = vadd.s32 %v4939, 127
      %v4941 = vshll.u32 %v4940, 23
      %v4942 = vor.u32 4788187, %v4941
      %v4943 = vand.u32 2147483647, %v4942
      %v4945 = vcvt.s32.f32 %v4938
      %v4946 = vmul.f32 %v4945, %v4943
      %v4947 = vxor.u32 %v4946, 2147483648
      %v4948 = vsel %vm4827, %v4947, %v4946
      %v4949 = vsub.s32 4, %v4925
      %v4950 = vsel %vm4827, %v4949, %v4925
      %v4951 = vsel %vm4826, %v2815, %v4948
      %v4952 = vsel %vm4826, 0, %v4950
      %v4953 = vmul.f32 %v4951, %v4951
      %v4954 = vmul.f32 %v4953, -0.001358992
      %v4955 = vadd.f32 %v4954, 0.041655596
      %v4956 = vmul.f32 %v4953, %v4955
      %v4957 = vadd.f32 %v4956, -0.4999988
      %v4958 = vmul.f32 %v4953, %v4957
      %v4959 = vadd.f32 1.0, %v4958
      %v4960 = vmul.f32 %v4951, %v4951
      %v4961 = vmul.f32 %v4960, -0.00019511016
      %v4962 = vadd.f32 %v4961, 0.008332121
      %v4963 = vmul.f32 %v4960, %v4962
      %v4964 = vadd.f32 %v4963, -0.16666654
      %v4965 = vmul.f32 %v4960, %v4964
      %v4966 = vadd.f32 %v4965, 1.0
      %v4967 = vmul.f32 %v4966, %v4951
      %vm4968 = vweird.f32 %v2815
      %v4969 = vadd.s32 %v4952, 3
      %v4970 = vand.u32 %v4969, 3
      %vm4971 = vcmp.lt.s32.totalorder %v4970, 2
      %vm4972 = vcmp.eq.s32.totalorder %v4970, 0
      %v4973 = vxor.u32 %v4967, 2147483648
      %v4974 = vsel %vm4972, %v4959, %v4973
      %vm4975 = vcmp.eq.s32.totalorder %v4970, 2
      %v4976 = vxor.u32 %v4959, 2147483648
      %v4977 = vsel %vm4975, %v4976, %v4967
      %v4978 = vsel %vm4971, %v4974, %v4977
      %v4979 = vsel %vm4968, nan, %v4978
      %v4980 = vand.u32 2147483647, %v2816
      %vm4981 = vcmp.le.f32.partialorder %v4980, 0.7853982
      %vm4982 = vcmp.lt.s32.totalorder %v2816, 0
      %v4983 = vand.u32 %v2816, 2139095040
      %v4984 = vshrl.u32 %v4983, 23
      %v4985 = vsub.s32 %v4984, 127
      %v4986 = vand.u32 2147483647, %v2816
      %v4987 = vand.u32 %v4986, 8388607
      %v4988 = vor.u32 %v4987, 8388608
      %v4989 = vsub.s32 0, %v4988
      %v4990 = vadd.s32 %v4985, 1
      %vm4991 = vcmp.gt.s32.totalorder %v4990, 0
      %v4992 = vsel %vm4991, %v4990, 0
      %v4993 = vshrl.u32 %v4992, 5
      %v4994 = vand.u32 %v4992, 31
      %v4995 = vsub.s32 32, %v4994
      %v4996 = vshrl.u32 683565275, %v4995
      %v4997 = vshll.u32 683565275, %v4994
      %v4998 = vshrl.u32 2475754826, %v4995
      %v4999 = vor.u32 %v4997, %v4998
      %v5000 = vshll.u32 2475754826, %v4994
      %v5001 = vshrl.u32 2131351028, %v4995
      %v5002 = vor.u32 %v5000, %v5001
      %v5003 = vshll.u32 2131351028, %v4994
      %v5004 = vshrl.u32 2102212464, %v4995
      %v5005 = vor.u32 %v5003, %v5004
      %v5006 = vshll.u32 2102212464, %v4994
      %v5007 = vshrl.u32 920167782, %v4995
      %v5008 = vor.u32 %v5006, %v5007
      %v5009 = vshll.u32 920167782, %v4994
      %v5010 = vshrl.u32 1326507024, %v4995
      %v5011 = vor.u32 %v5009, %v5010
      %vm5012 = vcmp.lt.s32.totalorder %v4993, 1
      %vm5013 = vcmp.lt.s32.totalorder %v4993, 2
      %vm5014 = vcmp.lt.s32.totalorder %v4993, 3
      %vm5015 = vcmp.lt.s32.totalorder %v4993, 4
      %v5016 = vsel %vm5012, %v4996, %v4999
      %v5017 = vsel %vm5015, %v5005, 2102212464
      %v5018 = vsel %vm5014, %v5002, %v5017
      %v5019 = vsel %vm5013, %v5016, %v5018
      %v5020 = vsel %vm5012, %v4999, %v5002
      %v5021 = vsel %vm5015, %v5008, 920167782
      %v5022 = vsel %vm5014, %v5005, %v5021
      %v5023 = vsel %vm5013, %v5020, %v5022
      %v5024 = vsel %vm5012, %v5002, %v5005
      %v5025 = vsel %vm5015, %v5011, 1326507024
      %v5026 = vsel %vm5014, %v5008, %v5025
      %v5027 = vsel %vm5013, %v5024, %v5026
      %v5028 = vshll.u32 %v4988, 8
      %v5029 = vand.u32 %v5028, 65535
      %v5030 = vshrl.u32 %v5028, 16
      %v5031 = vand.u32 %v5027, 65535
      %v5032 = vshrl.u32 %v5027, 16
      %v5033 = vmul.u32 %v5029, %v5031
      %v5034 = vmul.u32 %v5029, %v5032
      %v5035 = vmul.u32 %v5030, %v5031
      %v5036 = vmul.u32 %v5030, %v5032
      %v5037 = vshll.u32 %v5034, 16
      %v5038 = vshrl.u32 %v5034, 16
      %v5039 = vshll.u32 %v5035, 16
      %v5040 = vshrl.u32 %v5035, 16
      %vm5041 = vc.u32 %v5033, %v5037
      %v5042 = vsel %vm5041, 1, 0
      %v5043 = vadd.s32 %v5033, %v5037
      %v5044 = vadd.s32 %v5036, %v5042
      %vm5045 = vc.u32 %v5043, %v5039
      %v5046 = vsel %vm5045, 1, 0
      %v5047 = vadd.s32 %v5043, %v5039
      %v5048 = vadd.s32 %v5044, %v5046
      %v5049 = vadd.s32 %v5048, %v5038
      %v5050 = vadd.s32 %v5049, %v5040
      %v5051 = vand.u32 %v5028, 65535
      %v5052 = vshrl.u32 %v5028, 16
      %v5053 = vand.u32 %v5023, 65535
      %v5054 = vshrl.u32 %v5023, 16
      %v5055 = vmul.u32 %v5051, %v5053
      %v5056 = vmul.u32 %v5051, %v5054
      %v5057 = vmul.u32 %v5052, %v5053
      %v5058 = vmul.u32 %v5052, %v5054
      %v5059 = vshll.u32 %v5056, 16
      %v5060 = vshrl.u32 %v5056, 16
      %v5061 = vshll.u32 %v5057, 16
      %v5062 = vshrl.u32 %v5057, 16
      %vm5063 = vc.u32 %v5055, %v5059
      %v5064 = vsel %vm5063, 1, 0
      %v5065 = vadd.s32 %v5055, %v5059
      %v5066 = vadd.s32 %v5058, %v5064
      %vm5067 = vc.u32 %v5065, %v5061
      %v5068 = vsel %vm5067, 1, 0
      %v5069 = vadd.s32 %v5065, %v5061
      %v5070 = vadd.s32 %v5066, %v5068
      %v5071 = vadd.s32 %v5070, %v5060
      %v5072 = vadd.s32 %v5071, %v5062
      %v5073 = vmul.u32 %v5028, %v5019
      %v5074 = vadd.s32 %v5050, %v5069
      %vm5075 = vc.u32 %v5050, %v5069
      %v5076 = vadd.s32 %v5072, 1
      %v5077 = vsel %vm5075, %v5076, %v5072
      %v5078 = vadd.s32 %v5073, %v5077
      %v5079 = vadd.s32 %v5078, 536870912
      %v5080 = vshrl.u32 %v5079, 30
      %v5081 = vshll.u32 %v5080, 30
      %v5082 = vsub.s32 %v5078, %v5081
      %vm5083 = vcmp.lt.s32.totalorder %v5082, 0
      %v5084 = vsub.s32 0, %v5082
      %v5085 = vsel %vm5083, %v5084, %v5082
      %v5086 = vclz %v5085
      %v5087 = vsub.s32 %v5086, 2
      %vm5088 = vcmp.gt.s32.totalorder 0, %v5087
      %v5089 = vsel %vm5088, 0, %v5087
      %v5090 = vsub.s32 32, %v5089
      %v5091 = vshll.u32 %v5082, %v5089
      %v5092 = vshrl.u32 %v5074, %v5090
      %v5093 = vor.u32 %v5091, %v5092
      %v5094 = vsub.s32 4294967266, %v5089
      %v5095 = vadd.s32 %v5094, 127
      %v5096 = vshll.u32 %v5095, 23
      %v5097 = vor.u32 4788187, %v5096
      %v5098 = vand.u32 2147483647, %v5097
      %v5100 = vcvt.s32.f32 %v5093
      %v5101 = vmul.f32 %v5100, %v5098
      %v5102 = vxor.u32 %v5101, 2147483648
      %v5103 = vsel %vm4982, %v5102, %v5101
      %v5104 = vsub.s32 4, %v5080
      %v5105 = vsel %vm4982, %v5104, %v5080
      %v5106 = vsel %vm4981, %v2816, %v5103
      %v5107 = vsel %vm4981, 0, %v5105
      %v5108 = vmul.f32 %v5106, %v5106
      %v5109 = vmul.f32 %v5108, -0.001358992
      %v5110 = vadd.f32 %v5109, 0.041655596
      %v5111 = vmul.f32 %v5108, %v5110
      %v5112 = vadd.f32 %v5111, -0.4999988
      %v5113 = vmul.f32 %v5108, %v5112
      %v5114 = vadd.f32 1.0, %v5113
      %v5115 = vmul.f32 %v5106, %v5106
      %v5116 = vmul.f32 %v5115, -0.00019511016
      %v5117 = vadd.f32 %v5116, 0.008332121
      %v5118 = vmul.f32 %v5115, %v5117
      %v5119 = vadd.f32 %v5118, -0.16666654
      %v5120 = vmul.f32 %v5115, %v5119
      %v5121 = vadd.f32 %v5120, 1.0
      %v5122 = vmul.f32 %v5121, %v5106
      %vm5123 = vweird.f32 %v2816
      %v5124 = vadd.s32 %v5107, 3
      %v5125 = vand.u32 %v5124, 3
      %vm5126 = vcmp.lt.s32.totalorder %v5125, 2
      %vm5127 = vcmp.eq.s32.totalorder %v5125, 0
      %v5128 = vxor.u32 %v5122, 2147483648
      %v5129 = vsel %vm5127, %v5114, %v5128
      %vm5130 = vcmp.eq.s32.totalorder %v5125, 2
      %v5131 = vxor.u32 %v5114, 2147483648
      %v5132 = vsel %vm5130, %v5131, %v5122
      %v5133 = vsel %vm5126, %v5129, %v5132
      %v5134 = vsel %vm5123, nan, %v5133
      %v5135 = vand.u32 2147483647, %v2817
      %vm5136 = vcmp.le.f32.partialorder %v5135, 0.7853982
      %vm5137 = vcmp.lt.s32.totalorder %v2817, 0
      %v5138 = vand.u32 %v2817, 2139095040
      %v5139 = vshrl.u32 %v5138, 23
      %v5140 = vsub.s32 %v5139, 127
      %v5141 = vand.u32 2147483647, %v2817
      %v5142 = vand.u32 %v5141, 8388607
      %v5143 = vor.u32 %v5142, 8388608
      %v5144 = vsub.s32 0, %v5143
      %v5145 = vadd.s32 %v5140, 1
      %vm5146 = vcmp.gt.s32.totalorder %v5145, 0
      %v5147 = vsel %vm5146, %v5145, 0
      %v5148 = vshrl.u32 %v5147, 5
      %v5149 = vand.u32 %v5147, 31
      %v5150 = vsub.s32 32, %v5149
      %v5151 = vshrl.u32 683565275, %v5150
      %v5152 = vshll.u32 683565275, %v5149
      %v5153 = vshrl.u32 2475754826, %v5150
      %v5154 = vor.u32 %v5152, %v5153
      %v5155 = vshll.u32 2475754826, %v5149
      %v5156 = vshrl.u32 2131351028, %v5150
      %v5157 = vor.u32 %v5155, %v5156
      %v5158 = vshll.u32 2131351028, %v5149
      %v5159 = vshrl.u32 2102212464, %v5150
      %v5160 = vor.u32 %v5158, %v5159
      %v5161 = vshll.u32 2102212464, %v5149
      %v5162 = vshrl.u32 920167782, %v5150
      %v5163 = vor.u32 %v5161, %v5162
      %v5164 = vshll.u32 920167782, %v5149
      %v5165 = vshrl.u32 1326507024, %v5150
      %v5166 = vor.u32 %v5164, %v5165
      %vm5167 = vcmp.lt.s32.totalorder %v5148, 1
      %vm5168 = vcmp.lt.s32.totalorder %v5148, 2
      %vm5169 = vcmp.lt.s32.totalorder %v5148, 3
      %vm5170 = vcmp.lt.s32.totalorder %v5148, 4
      %v5171 = vsel %vm5167, %v5151, %v5154
      %v5172 = vsel %vm5170, %v5160, 2102212464
      %v5173 = vsel %vm5169, %v5157, %v5172
      %v5174 = vsel %vm5168, %v5171, %v5173
      %v5175 = vsel %vm5167, %v5154, %v5157
      %v5176 = vsel %vm5170, %v5163, 920167782
      %v5177 = vsel %vm5169, %v5160, %v5176
      %v5178 = vsel %vm5168, %v5175, %v5177
      %v5179 = vsel %vm5167, %v5157, %v5160
      %v5180 = vsel %vm5170, %v5166, 1326507024
      %v5181 = vsel %vm5169, %v5163, %v5180
      %v5182 = vsel %vm5168, %v5179, %v5181
      %v5183 = vshll.u32 %v5143, 8
      %v5184 = vand.u32 %v5183, 65535
      %v5185 = vshrl.u32 %v5183, 16
      %v5186 = vand.u32 %v5182, 65535
      %v5187 = vshrl.u32 %v5182, 16
      %v5188 = vmul.u32 %v5184, %v5186
      %v5189 = vmul.u32 %v5184, %v5187
      %v5190 = vmul.u32 %v5185, %v5186
      %v5191 = vmul.u32 %v5185, %v5187
      %v5192 = vshll.u32 %v5189, 16
      %v5193 = vshrl.u32 %v5189, 16
      %v5194 = vshll.u32 %v5190, 16
      %v5195 = vshrl.u32 %v5190, 16
      %vm5196 = vc.u32 %v5188, %v5192
      %v5197 = vsel %vm5196, 1, 0
      %v5198 = vadd.s32 %v5188, %v5192
      %v5199 = vadd.s32 %v5191, %v5197
      %vm5200 = vc.u32 %v5198, %v5194
      %v5201 = vsel %vm5200, 1, 0
      %v5202 = vadd.s32 %v5198, %v5194
      %v5203 = vadd.s32 %v5199, %v5201
      %v5204 = vadd.s32 %v5203, %v5193
      %v5205 = vadd.s32 %v5204, %v5195
      %v5206 = vand.u32 %v5183, 65535
      %v5207 = vshrl.u32 %v5183, 16
      %v5208 = vand.u32 %v5178, 65535
      %v5209 = vshrl.u32 %v5178, 16
      %v5210 = vmul.u32 %v5206, %v5208
      %v5211 = vmul.u32 %v5206, %v5209
      %v5212 = vmul.u32 %v5207, %v5208
      %v5213 = vmul.u32 %v5207, %v5209
      %v5214 = vshll.u32 %v5211, 16
      %v5215 = vshrl.u32 %v5211, 16
      %v5216 = vshll.u32 %v5212, 16
      %v5217 = vshrl.u32 %v5212, 16
      %vm5218 = vc.u32 %v5210, %v5214
      %v5219 = vsel %vm5218, 1, 0
      %v5220 = vadd.s32 %v5210, %v5214
      %v5221 = vadd.s32 %v5213, %v5219
      %vm5222 = vc.u32 %v5220, %v5216
      %v5223 = vsel %vm5222, 1, 0
      %v5224 = vadd.s32 %v5220, %v5216
      %v5225 = vadd.s32 %v5221, %v5223
      %v5226 = vadd.s32 %v5225, %v5215
      %v5227 = vadd.s32 %v5226, %v5217
      %v5228 = vmul.u32 %v5183, %v5174
      %v5229 = vadd.s32 %v5205, %v5224
      %vm5230 = vc.u32 %v5205, %v5224
      %v5231 = vadd.s32 %v5227, 1
      %v5232 = vsel %vm5230, %v5231, %v5227
      %v5233 = vadd.s32 %v5228, %v5232
      %v5234 = vadd.s32 %v5233, 536870912
      %v5235 = vshrl.u32 %v5234, 30
      %v5236 = vshll.u32 %v5235, 30
      %v5237 = vsub.s32 %v5233, %v5236
      %vm5238 = vcmp.lt.s32.totalorder %v5237, 0
      %v5239 = vsub.s32 0, %v5237
      %v5240 = vsel %vm5238, %v5239, %v5237
      %v5241 = vclz %v5240
      %v5242 = vsub.s32 %v5241, 2
      %vm5243 = vcmp.gt.s32.totalorder 0, %v5242
      %v5244 = vsel %vm5243, 0, %v5242
      %v5245 = vsub.s32 32, %v5244
      %v5246 = vshll.u32 %v5237, %v5244
      %v5247 = vshrl.u32 %v5229, %v5245
      %v5248 = vor.u32 %v5246, %v5247
      %v5249 = vsub.s32 4294967266, %v5244
      %v5250 = vadd.s32 %v5249, 127
      %v5251 = vshll.u32 %v5250, 23
      %v5252 = vor.u32 4788187, %v5251
      %v5253 = vand.u32 2147483647, %v5252
      %v5255 = vcvt.s32.f32 %v5248
      %v5256 = vmul.f32 %v5255, %v5253
      %v5257 = vxor.u32 %v5256, 2147483648
      %v5258 = vsel %vm5137, %v5257, %v5256
      %v5259 = vsub.s32 4, %v5235
      %v5260 = vsel %vm5137, %v5259, %v5235
      %v5261 = vsel %vm5136, %v2817, %v5258
      %v5262 = vsel %vm5136, 0, %v5260
      %v5263 = vmul.f32 %v5261, %v5261
      %v5264 = vmul.f32 %v5263, -0.001358992
      %v5265 = vadd.f32 %v5264, 0.041655596
      %v5266 = vmul.f32 %v5263, %v5265
      %v5267 = vadd.f32 %v5266, -0.4999988
      %v5268 = vmul.f32 %v5263, %v5267
      %v5269 = vadd.f32 1.0, %v5268
      %v5270 = vmul.f32 %v5261, %v5261
      %v5271 = vmul.f32 %v5270, -0.00019511016
      %v5272 = vadd.f32 %v5271, 0.008332121
      %v5273 = vmul.f32 %v5270, %v5272
      %v5274 = vadd.f32 %v5273, -0.16666654
      %v5275 = vmul.f32 %v5270, %v5274
      %v5276 = vadd.f32 %v5275, 1.0
      %v5277 = vmul.f32 %v5276, %v5261
      %vm5278 = vweird.f32 %v2817
      %v5279 = vadd.s32 %v5262, 3
      %v5280 = vand.u32 %v5279, 3
      %vm5281 = vcmp.lt.s32.totalorder %v5280, 2
      %vm5282 = vcmp.eq.s32.totalorder %v5280, 0
      %v5283 = vxor.u32 %v5277, 2147483648
      %v5284 = vsel %vm5282, %v5269, %v5283
      %vm5285 = vcmp.eq.s32.totalorder %v5280, 2
      %v5286 = vxor.u32 %v5269, 2147483648
      %v5287 = vsel %vm5285, %v5286, %v5277
      %v5288 = vsel %vm5281, %v5284, %v5287
      %v5289 = vsel %vm5278, nan, %v5288
      %v5290 = vld [vmem:[%s257] sm:$0xf]
      %v5291 = vld [vmem:[%s257 + $0x4] sm:$0xf]
      %v5292 = vld [vmem:[%s257 + $0x8] sm:$0xf]
      %v5293 = vld [vmem:[%s257 + $0xc] sm:$0xf]
      %v5294 = vld [vmem:[%s257 + $0x10] sm:$0xf]
      %v5295 = vld [vmem:[%s257 + $0x14] sm:$0xf]
      %v5296 = vld [vmem:[%s257 + $0x18] sm:$0xf]
      %v5297 = vld [vmem:[%s257 + $0x1c] sm:$0xf]
      %v5306 = vunpack.c.l.b16 %v5290
      %v5307 = vunpack.c.l.b16 %v5291
      %v5308 = vunpack.c.l.b16 %v5292
      %v5309 = vunpack.c.l.b16 %v5293
      %v5310 = vunpack.c.l.b16 %v5294
      %v5311 = vunpack.c.l.b16 %v5295
      %v5312 = vunpack.c.l.b16 %v5296
      %v5313 = vunpack.c.l.b16 %v5297
      %v5314 = vpack.c.b16 %v5307, %v5306
      %v5315 = vpack.c.b16 %v5309, %v5308
      %v5316 = vpack.c.b16 %v5311, %v5310
      %v5317 = vpack.c.b16 %v5313, %v5312
      %vm5318 = vcmask 261120
      %v5320 = vsel %vm5318, %v5314, 0
      %v5323 = vsel %vm5318, %v5315, 0
      %v5326 = vsel %vm5318, %v5316, 0
      %v5329 = vsel %vm5318, %v5317, 0
      %5331 = vmatpush.bf16.msra.mxu0 0
      %5332 = vmatpush.bf16.msra.mxu0 0
      %5333 = vmatpush.bf16.msra.mxu0 0
      %5334 = vmatpush.bf16.msra.mxu0 0
      %5335 = vmatpush.bf16.msra.mxu0 0
      %5336 = vmatpush.bf16.msra.mxu0 0
      %5337 = vmatpush.bf16.msra.mxu0 %v2801
      %5338 = vmatpush.bf16.msra.mxu0 %v2797
      %5339 = vmatmul.bf16.gmra.mxu0 %v5320
      %v5340 = vpop.f32.mrf.mxu0
      %v5341 = vadd.f32 0.0, %v5340
      %v5342 = vpop.f32.mrf.mxu0
      %v5343 = vadd.f32 0.0, %v5342
      %5344 = vmatmul.bf16.gmra.mxu0 %v5323
      %v5345 = vpop.f32.mrf.mxu0
      %v5346 = vadd.f32 0.0, %v5345
      %v5347 = vpop.f32.mrf.mxu0
      %v5348 = vadd.f32 0.0, %v5347
      %5349 = vmatmul.bf16.gmra.mxu0 %v5326
      %v5350 = vpop.f32.mrf.mxu0
      %v5351 = vadd.f32 0.0, %v5350
      %v5352 = vpop.f32.mrf.mxu0
      %v5353 = vadd.f32 0.0, %v5352
      %5354 = vmatmul.bf16.gmra.mxu0 %v5329
      %v5355 = vpop.f32.mrf.mxu0
      %v5356 = vadd.f32 0.0, %v5355
      %v5357 = vpop.f32.mrf.mxu0
      %v5358 = vadd.f32 0.0, %v5357
      %5359 = vdwg.mxu0
      %5360 = vmatpush.bf16.msra.mxu0 0
      %5361 = vmatpush.bf16.msra.mxu0 0
      %5362 = vmatpush.bf16.msra.mxu0 0
      %5363 = vmatpush.bf16.msra.mxu0 0
      %5364 = vmatpush.bf16.msra.mxu0 0
      %5365 = vmatpush.bf16.msra.mxu0 0
      %5366 = vmatpush.bf16.msra.mxu0 %v2802
      %5367 = vmatpush.bf16.msra.mxu0 %v2798
      %5368 = vmatmul.bf16.gmra.mxu0 %v5320
      %v5369 = vpop.f32.mrf.mxu0
      %v5370 = vadd.f32 0.0, %v5369
      %v5371 = vpop.f32.mrf.mxu0
      %v5372 = vadd.f32 0.0, %v5371
      %5373 = vmatmul.bf16.gmra.mxu0 %v5323
      %v5374 = vpop.f32.mrf.mxu0
      %v5375 = vadd.f32 0.0, %v5374
      %v5376 = vpop.f32.mrf.mxu0
      %v5377 = vadd.f32 0.0, %v5376
      %5378 = vmatmul.bf16.gmra.mxu0 %v5326
      %v5379 = vpop.f32.mrf.mxu0
      %v5380 = vadd.f32 0.0, %v5379
      %v5381 = vpop.f32.mrf.mxu0
      %v5382 = vadd.f32 0.0, %v5381
      %5383 = vmatmul.bf16.gmra.mxu0 %v5329
      %v5384 = vpop.f32.mrf.mxu0
      %v5385 = vadd.f32 0.0, %v5384
      %v5386 = vpop.f32.mrf.mxu0
      %v5387 = vadd.f32 0.0, %v5386
      %5388 = vdwg.mxu0
      %5389 = vmatpush.bf16.msra.mxu0 0
      %5390 = vmatpush.bf16.msra.mxu0 0
      %5391 = vmatpush.bf16.msra.mxu0 0
      %5392 = vmatpush.bf16.msra.mxu0 0
      %5393 = vmatpush.bf16.msra.mxu0 0
      %5394 = vmatpush.bf16.msra.mxu0 0
      %5395 = vmatpush.bf16.msra.mxu0 %v2803
      %5396 = vmatpush.bf16.msra.mxu0 %v2799
      %5397 = vmatmul.bf16.gmra.mxu0 %v5320
      %v5398 = vpop.f32.mrf.mxu0
      %v5399 = vadd.f32 0.0, %v5398
      %v5400 = vpop.f32.mrf.mxu0
      %v5401 = vadd.f32 0.0, %v5400
      %5402 = vmatmul.bf16.gmra.mxu0 %v5323
      %v5403 = vpop.f32.mrf.mxu0
      %v5404 = vadd.f32 0.0, %v5403
      %v5405 = vpop.f32.mrf.mxu0
      %v5406 = vadd.f32 0.0, %v5405
      %5407 = vmatmul.bf16.gmra.mxu0 %v5326
      %v5408 = vpop.f32.mrf.mxu0
      %v5409 = vadd.f32 0.0, %v5408
      %v5410 = vpop.f32.mrf.mxu0
      %v5411 = vadd.f32 0.0, %v5410
      %5412 = vmatmul.bf16.gmra.mxu0 %v5329
      %v5413 = vpop.f32.mrf.mxu0
      %v5414 = vadd.f32 0.0, %v5413
      %v5415 = vpop.f32.mrf.mxu0
      %v5416 = vadd.f32 0.0, %v5415
      %5417 = vdwg.mxu0
      %5418 = vmatpush.bf16.msra.mxu0 0
      %5419 = vmatpush.bf16.msra.mxu0 0
      %5420 = vmatpush.bf16.msra.mxu0 0
      %5421 = vmatpush.bf16.msra.mxu0 0
      %5422 = vmatpush.bf16.msra.mxu0 0
      %5423 = vmatpush.bf16.msra.mxu0 0
      %5424 = vmatpush.bf16.msra.mxu0 %v2804
      %5425 = vmatpush.bf16.msra.mxu0 %v2800
      %5426 = vmatmul.bf16.gmra.mxu0 %v5320
      %v5427 = vpop.f32.mrf.mxu0
      %v5428 = vadd.f32 0.0, %v5427
      %v5429 = vpop.f32.mrf.mxu0
      %v5430 = vadd.f32 0.0, %v5429
      %5431 = vmatmul.bf16.gmra.mxu0 %v5323
      %v5432 = vpop.f32.mrf.mxu0
      %v5433 = vadd.f32 0.0, %v5432
      %v5434 = vpop.f32.mrf.mxu0
      %v5435 = vadd.f32 0.0, %v5434
      %5436 = vmatmul.bf16.gmra.mxu0 %v5326
      %v5437 = vpop.f32.mrf.mxu0
      %v5438 = vadd.f32 0.0, %v5437
      %v5439 = vpop.f32.mrf.mxu0
      %v5440 = vadd.f32 0.0, %v5439
      %5441 = vmatmul.bf16.gmra.mxu0 %v5329
      %v5442 = vpop.f32.mrf.mxu0
      %v5443 = vadd.f32 0.0, %v5442
      %v5444 = vpop.f32.mrf.mxu0
      %v5445 = vadd.f32 0.0, %v5444
      %5446 = vdwg.mxu0
      %v5447 = vsub.f32 %v5341, %v5409
      %v5448 = vsub.f32 %v5370, %v5438
      %v5449 = vsub.f32 %v5343, %v5411
      %v5450 = vsub.f32 %v5372, %v5440
      %v5451 = vsub.f32 %v5346, %v5414
      %v5452 = vsub.f32 %v5375, %v5443
      %v5453 = vsub.f32 %v5348, %v5416
      %v5454 = vsub.f32 %v5377, %v5445
      %v5455 = vadd.f32 %v5399, %v5351
      %v5456 = vadd.f32 %v5428, %v5380
      %v5457 = vadd.f32 %v5401, %v5353
      %v5458 = vadd.f32 %v5430, %v5382
      %v5459 = vadd.f32 %v5404, %v5356
      %v5460 = vadd.f32 %v5433, %v5385
      %v5461 = vadd.f32 %v5406, %v5358
      %v5462 = vadd.f32 %v5435, %v5387
      %v5463 = vmul.f32 %v5447, %v2971
      %v5464 = vmul.f32 %v5448, %v3125
      %v5465 = vmul.f32 %v5449, %v3279
      %v5466 = vmul.f32 %v5450, %v3433
      %v5467 = vmul.f32 %v5451, %v3587
      %v5468 = vmul.f32 %v5452, %v3741
      %v5469 = vmul.f32 %v5453, %v3895
      %v5470 = vmul.f32 %v5454, %v4049
      %v5471 = vmul.f32 %v5455, %v4204
      %v5472 = vmul.f32 %v5456, %v4359
      %v5473 = vmul.f32 %v5457, %v4514
      %v5474 = vmul.f32 %v5458, %v4669
      %v5475 = vmul.f32 %v5459, %v4824
      %v5476 = vmul.f32 %v5460, %v4979
      %v5477 = vmul.f32 %v5461, %v5134
      %v5478 = vmul.f32 %v5462, %v5289
      %v5479 = vsub.f32 %v5463, %v5471
      %v5480 = vsub.f32 %v5464, %v5472
      %v5481 = vsub.f32 %v5465, %v5473
      %v5482 = vsub.f32 %v5466, %v5474
      %v5483 = vsub.f32 %v5467, %v5475
      %v5484 = vsub.f32 %v5468, %v5476
      %v5485 = vsub.f32 %v5469, %v5477
      %v5486 = vsub.f32 %v5470, %v5478
      %v5487 = vadd.f32 %v5479, %v5481
      %v5488 = vadd.f32 %v5487, %v5483
      %v5489 = vadd.f32 %v5488, %v5485
      %v5490 = vrot.slane %v5489, 4
      %v5491 = vadd.f32 %v5489, %v5490
      %v5492 = vrot.slane %v5491, 2
      %v5493 = vadd.f32 %v5491, %v5492
      %v5494 = vrot.slane %v5493, 1
      %v5495 = vadd.f32 %v5493, %v5494
      %v5496 = vadd.f32 %v5480, %v5482
      %v5497 = vadd.f32 %v5496, %v5484
      %v5498 = vadd.f32 %v5497, %v5486
      %v5499 = vrot.slane %v5498, 4
      %v5500 = vadd.f32 %v5498, %v5499
      %v5501 = vrot.slane %v5500, 2
      %v5502 = vadd.f32 %v5500, %v5501
      %v5503 = vrot.slane %v5502, 1
      %v5504 = vadd.f32 %v5502, %v5503
      %v5505 = vmul.f32 %v5495, 0.0009765625
      %v5506 = vmul.f32 %v5504, 0.0009765625
      %v5509 = vrot.slane %v5506, 7
      %vm5510 = vcmask 1040384
      %v5511 = vsel %vm5510, %v5505, %v5509
      %v5513 = vlaneseq
      %vm5514 = vcmp.ge.s32.totalorder %v5513, 0
      %vm5515 = vcmp.lt.s32.totalorder %v5513, 256
      %vm5516 = vmand %vm5514, %vm5515
      %5517 = vst.msk [vmem:[%s283] sm:$0x3] %vm5516, %v5511
      %s5518 = smul.u32 2, %s20
      %p5519 = scmp.lt.s32.totalorder %s19, 1
      %s5520 = scalar_select %p5519, %s19, 1
      %p5521 = scmp.lt.s32.totalorder %s5518, 1
      %s5522 = scalar_select %p5521, %s5518, 1
      %s5523 = smul.addr %s5520, 2
      %s5524 = sadd.s32 %s5522, %s5523
      %s5525 = scalar_lea.vmem %s4, %s5524
      // Predicated region
      $region37: #{field2point_forward.1} parent=35 // pred_check
        %p5526 = pneg %p150
      $region38: #{field2point_forward.1} parent=35 // pred_check_branch
        %5528 = sbr.rel (%p5526) target = $region40
      $region39: #{field2point_forward.1} parent=35 // pred_region
        %s5529 = smul.u32 2, %s20
      $region40: #{field2point_forward.1} parent=35 // pred_fallthru
        _
    $region36: #{field2point_forward.1} parent=5 // pred_fallthru
      _
    %p5530 = scmp.le.s32.totalorder 2, %s10
    // Predicated region
    $region41: #{field2point_forward.1} parent=5 // pred_check
      %p5531 = pneg %p5530
    $region42: #{field2point_forward.1} parent=5 // pred_check_branch
      %5533 = sbr.rel (%p5531) target = $region44
    $region43: #{field2point_forward.1} parent=5 // pred_region
      %s5534 = ssub.s32 %s10, 2
      // Predicated region
      $region45: #{field2point_forward.1} parent=43 // pred_check
        %p5535 = pneg %p156
      $region46: #{field2point_forward.1} parent=43 // pred_check_branch
        %5537 = sbr.rel (%p5535) target = $region48
      $region47: #{field2point_forward.1} parent=43 // pred_region
        %s5538 = smul.u32 2, %s22
        %p5539 = scmp.lt.s32.totalorder %s21, 1
        %s5540 = scalar_select %p5539, %s21, 1
        %p5541 = scmp.lt.s32.totalorder %s5538, 1
        %s5542 = scalar_select %p5541, %s5538, 1
        %s5543 = smul.addr %s5540, 2
        %s5544 = sadd.s32 %s5542, %s5543
        %s5545 = scalar_lea.vmem %s4, %s5544
      $region48: #{field2point_forward.1} parent=43 // pred_fallthru
        _
    $region44: #{field2point_forward.1} parent=5 // pred_fallthru
      _
  $region6: #{field2point_forward.1} parent=0 // loop_footer
    %s14 = sadd.s32 1, %s10
  $region7: #{field2point_forward.1} parent=0 // loop_footer_branch
    %9 = sbr.rel target = $region3
  $region8: #{field2point_forward.1} parent=0 // loop_exit
    _

</llo_original>
